<compile_context>
chip_gen: v5e
topology: v5e:2x2
jax: 0.10.0
libtpu: 0.0.40
codegen_flags: <defaults>
</compile_context>

<pallas_src>
import jax
import jax.numpy as jnp
from jax import lax
from jax.experimental import pallas as pl
from jax.experimental.pallas import tpu as pltpu

HIDDEN = 128
NUM_LAYERS = 4
MATMUL_DTYPE = jnp.bfloat16   # MXU operand dtype; accumulation stays f32


def fused_gru_kernel(gi0_ref, wih_ref, whh_ref, consts_ref, wlin_ref, blin_ref,
                     out_ref, gi_scratch, seq_scratch):
    """Whole forward pass (single batch row) in one kernel invocation (no grid).

    gi0_ref:    (T, 3H)        layer-0 input projection x*W_ih0^T + folded bias (f32)
    wih_ref:    (L-1, H, 3H)   W_ih^T for layers 1..L-1 (bf16)
    whh_ref:    (L,   H, 3H)   W_hh^T for all layers (bf16)
    consts_ref: (L, 1, 4H)     per-layer consts: lanes [0:3H) = folded biases
                               [b_ir+b_hr, b_iz+b_hz, b_in]; lanes [3H:4H) = b_hn (f32)
    wlin_ref:   (H, 2)         Linear weight^T (f32)
    blin_ref:   (1, 2)         Linear bias (f32)
    out_ref:    (1, 2)         logits for gru_out[-1, -1, :]
    gi_scratch: (T, 3H) VMEM   current layer's input-gate activations
    seq_scratch:(T, H)  VMEM   current layer's output sequence
    """
    T = gi0_ref.shape[0]
    H = HIDDEN
    L = NUM_LAYERS

    def run_layer(l, gi_all):
        # Hoisted, loop-invariant per-layer constants (loaded once per layer).
        whh_l = whh_ref[l]                       # (H, 3H) bf16, stationary over T
        c_l = consts_ref[l]                      # (1, 4H) f32
        bhn_l = c_l[:, 3 * H:4 * H]              # (1, H)   b_hn (stays inside r*(.))

        gi_scratch[...] = gi_all                 # stage batched projection in VMEM

        def step(t, h):
            gi = gi_scratch[pl.ds(t, 1), :]                       # (1, 3H)
            gh = jnp.dot(h.astype(MATMUL_DTYPE), whh_l,
                         preferred_element_type=jnp.float32)      # (1, 3H)
            # Fused r/z sigmoid over the 2H-wide slice (lane-aligned split).
            rz = jax.nn.sigmoid(gi[:, 0:2 * H] + gh[:, 0:2 * H])
            r = rz[:, 0:H]
            z = rz[:, H:2 * H]
            n = jnp.tanh(gi[:, 2 * H:3 * H] + r * (gh[:, 2 * H:3 * H] + bhn_l))
            h_new = (1.0 - z) * n + z * h
            seq_scratch[pl.ds(t, 1), :] = h_new
            return h_new

        return lax.fori_loop(0, T, step, jnp.zeros((1, H), jnp.float32),
                             unroll=True)

    # Layer 0: input projection was precomputed in the wrapper (D_in == 1).
    h_last = run_layer(0, gi0_ref[...])

    # Layers 1..L-1: one batched (T,H)x(H,3H) projection per layer (off the
    # recurrent chain), then the weight-stationary time recurrence.
    for l in range(1, L):
        ba_l = consts_ref[l][:, 0:3 * H]                          # (1, 3H)
        gi_all = jnp.dot(seq_scratch[...].astype(MATMUL_DTYPE), wih_ref[l - 1],
                         preferred_element_type=jnp.float32) + ba_l
        h_last = run_layer(l, gi_all)

    # Fused Linear(128 -> 2) head on the last hidden state of the top layer.
    out_ref[...] = jnp.dot(h_last, wlin_ref[...],
                           preferred_element_type=jnp.float32) + blin_ref[...]


def default_gru_forward(seq_btd, prepared):
    """seq_btd: (B, T, 1) batch_first input, as in the PyTorch module."""
    (w0, ba0, wih, whh, consts, wlin_t, blin) = prepared

    # Only gru_out[-1, -1, :] is consumed and GRU batch rows are independent:
    # drop the dead batch rows before the kernel.
    x = seq_btd[-1].astype(jnp.float32)              # (T, 1)
    # Layer-0 input projection (feature dim 1) as a trivial XLA broadcast.
    gi0 = x * w0 + ba0                               # (T, 3H) f32
    T = gi0.shape[0]

    out = pl.pallas_call(
        fused_gru_kernel,
        out_shape=jax.ShapeDtypeStruct((1, 2), jnp.float32),
        in_specs=[pl.BlockSpec(memory_space=pltpu.MemorySpace.VMEM)] * 6,
        out_specs=pl.BlockSpec(memory_space=pltpu.MemorySpace.VMEM),
        scratch_shapes=[pltpu.VMEM((T, 3 * HIDDEN), jnp.float32),
                        pltpu.VMEM((T, HIDDEN), jnp.float32)],
    )(gi0, wih, whh, consts, wlin_t, blin)
    return out[0]                                    # (2,)


def init_params(key):
    """Deterministic params matching torch.nn.GRU / nn.Linear shapes & init range."""
    k = 1.0 / jnp.sqrt(jnp.float32(HIDDEN))
    keys = jax.random.split(key, NUM_LAYERS * 4 + 2)
    idx = 0
    layers = []
    for l in range(NUM_LAYERS):
        d_in = 1 if l == 0 else HIDDEN
        w_ih = jax.random.uniform(keys[idx], (3 * HIDDEN, d_in), minval=-k, maxval=k); idx += 1
        w_hh = jax.random.uniform(keys[idx], (3 * HIDDEN, HIDDEN), minval=-k, maxval=k); idx += 1
        b_ih = jax.random.uniform(keys[idx], (3 * HIDDEN,), minval=-k, maxval=k); idx += 1
        b_hh = jax.random.uniform(keys[idx], (3 * HIDDEN,), minval=-k, maxval=k); idx += 1
        layers.append((w_ih, w_hh, b_ih, b_hh))
    w_lin = jax.random.uniform(keys[idx], (2, HIDDEN), minval=-k, maxval=k); idx += 1
    b_lin = jax.random.uniform(keys[idx], (2,), minval=-k, maxval=k)
    return layers, (w_lin, b_lin)


def prepare_params(layers, lin):
    """One-time weight prep (transpose, bias folding, packing, dtype cast)."""
    H = HIDDEN
    # Layer 0: W_ih is (3H, 1) -> w0 = W_ih^T = (1, 3H), used as a broadcast.
    w0 = jnp.transpose(layers[0][0]).astype(jnp.float32)                  # (1, 3H)
    wih = jnp.stack([jnp.transpose(layers[l][0]) for l in range(1, NUM_LAYERS)]
                    ).astype(MATMUL_DTYPE)                                # (L-1, H, 3H)
    whh = jnp.stack([jnp.transpose(layers[l][1]) for l in range(NUM_LAYERS)]
                    ).astype(MATMUL_DTYPE)                                # (L, H, 3H)
    # Packed per-layer constants: [folded r/z/n biases | b_hn] -> (L, 1, 4H).
    rows = []
    for (_, _, b_ih, b_hh) in layers:
        ba = jnp.concatenate([b_ih[:2 * H] + b_hh[:2 * H], b_ih[2 * H:]])  # (3H,)
        rows.append(jnp.concatenate([ba, b_hh[2 * H:]])[None, :])          # (1, 4H)
    consts = jnp.stack(rows).astype(jnp.float32)                           # (L, 1, 4H)
    ba0 = consts[0, :, 0:3 * H]                                            # (1, 3H) folded in wrapper
    w_lin, b_lin = lin
    wlin_t = jnp.transpose(w_lin).astype(jnp.float32)                      # (H, 2)
    blin = b_lin[None, :].astype(jnp.float32)                              # (1, 2)
    return (w0, ba0, wih, whh, consts, wlin_t, blin)


if __name__ == "__main__":
    key = jax.random.PRNGKey(0)
    pkey, xkey = jax.random.split(key)
    layers, lin = init_params(pkey)
    prepared = prepare_params(layers, lin)

    B, T = 2, 8
    seq = jax.random.normal(xkey, (B, T, 1), dtype=jnp.float32)

    out = jax.jit(default_gru_forward)(seq, prepared)
    out = jax.block_until_ready(out)
    assert out.shape == (2,)
    assert bool(jnp.all(jnp.isfinite(out)))
    print("KERNEL_OK")
</pallas_src>

<mosaic_0001>
module attributes {stable_mosaic.version = 11 : i64} {
  func.func @fused_gru_kernel(%arg0: memref<8x384xf32, #tpu.memory_space<vmem>>, %arg1: memref<3x128x384xbf16, #tpu.memory_space<vmem>>, %arg2: memref<4x128x384xbf16, #tpu.memory_space<vmem>>, %arg3: memref<4x1x512xf32, #tpu.memory_space<vmem>>, %arg4: memref<128x2xf32, #tpu.memory_space<vmem>>, %arg5: memref<1x2xf32, #tpu.memory_space<vmem>>, %arg6: memref<1x2xf32, #tpu.memory_space<vmem>>, %arg7: memref<8x384xf32, #tpu.memory_space<vmem>>, %arg8: memref<8x128xf32, #tpu.memory_space<vmem>>) attributes {dimension_semantics = [], scalar_prefetch = 0 : i64, scratch_operands = 2 : i64, tpu.core_type = #tpu.core_type<tc>} {
    %c0 = arith.constant 0 : index
    %c0_0 = arith.constant 0 : index
    %0 = vector.load %arg0[%c0, %c0_0] : memref<8x384xf32, #tpu.memory_space<vmem>>, vector<8x384xf32>
    %c0_1 = arith.constant 0 : index
    %c0_2 = arith.constant 0 : index
    %c0_3 = arith.constant 0 : index
    %1 = vector.load %arg2[%c0_1, %c0_2, %c0_3] : memref<4x128x384xbf16, #tpu.memory_space<vmem>>, vector<1x128x384xbf16>
    %2 = vector.shape_cast %1 : vector<1x128x384xbf16> to vector<128x384xbf16>
    %c0_4 = arith.constant 0 : index
    %c0_5 = arith.constant 0 : index
    %c0_6 = arith.constant 0 : index
    %3 = vector.load %arg3[%c0_4, %c0_5, %c0_6] : memref<4x1x512xf32, #tpu.memory_space<vmem>>, vector<1x1x512xf32>
    %4 = vector.shape_cast %3 : vector<1x1x512xf32> to vector<1x512xf32>
    %5 = vector.extract_strided_slice %4 {offsets = [0, 384], sizes = [1, 128], strides = [1, 1]} : vector<1x512xf32> to vector<1x128xf32>
    %c0_7 = arith.constant 0 : index
    %c0_8 = arith.constant 0 : index
    %6 = vector.load %arg7[%c0_7, %c0_8] : memref<8x384xf32, #tpu.memory_space<vmem>>, vector<8x384xf32>
    tpu.vector_store %arg7[%c0_7, %c0_8], %0 {strides = array<i32>} : memref<8x384xf32, #tpu.memory_space<vmem>>, vector<8x384xf32>,
    %cst = arith.constant 0.000000e+00 : f32
    %7 = vector.broadcast %cst : f32 to vector<1x128xf32>
    %c0_i32 = arith.constant 0 : i32
    %8 = arith.index_cast %c0_i32 : i32 to index
    %c0_9 = arith.constant 0 : index
    %9 = vector.load %arg7[%8, %c0_9] : memref<8x384xf32, #tpu.memory_space<vmem>>, vector<1x384xf32>
    %10 = arith.truncf %7 : vector<1x128xf32> to vector<1x128xbf16>
    %cst_10 = arith.constant dense<0.000000e+00> : vector<1x384xf32>
    %11 = tpu.matmul %10, %2, %cst_10 {dimension_numbers = #tpu.dot_dimension_numbers<[1], [0], [0], [1], [0, 0, 1, 1], [], []>} : vector<1x128xbf16>, vector<128x384xbf16>, vector<1x384xf32> -> vector<1x384xf32>
    %12 = vector.extract_strided_slice %9 {offsets = [0, 0], sizes = [1, 256], strides = [1, 1]} : vector<1x384xf32> to vector<1x256xf32>
    %13 = vector.extract_strided_slice %11 {offsets = [0, 0], sizes = [1, 256], strides = [1, 1]} : vector<1x384xf32> to vector<1x256xf32>
    %14 = arith.addf %12, %13 : vector<1x256xf32>
    %15 = arith.negf %14 : vector<1x256xf32>
    %16 = math.exp %15 : vector<1x256xf32>
    %cst_11 = arith.constant 1.000000e+00 : f32
    %17 = vector.broadcast %cst_11 : f32 to vector<1x256xf32>
    %18 = arith.addf %17, %16 : vector<1x256xf32>
    %19 = arith.divf %17, %18 : vector<1x256xf32>
    %20 = vector.extract_strided_slice %19 {offsets = [0, 0], sizes = [1, 128], strides = [1, 1]} : vector<1x256xf32> to vector<1x128xf32>
    %21 = vector.extract_strided_slice %19 {offsets = [0, 128], sizes = [1, 128], strides = [1, 1]} : vector<1x256xf32> to vector<1x128xf32>
    %22 = vector.extract_strided_slice %9 {offsets = [0, 256], sizes = [1, 128], strides = [1, 1]} : vector<1x384xf32> to vector<1x128xf32>
    %23 = vector.extract_strided_slice %11 {offsets = [0, 256], sizes = [1, 128], strides = [1, 1]} : vector<1x384xf32> to vector<1x128xf32>
    %24 = arith.addf %23, %5 : vector<1x128xf32>
    %25 = arith.mulf %20, %24 : vector<1x128xf32>
    %26 = arith.addf %22, %25 : vector<1x128xf32>
    %27 = math.tanh %26 : vector<1x128xf32>
    %cst_12 = arith.constant 1.000000e+00 : f32
    %28 = vector.broadcast %cst_12 : f32 to vector<1x128xf32>
    %29 = arith.subf %28, %21 : vector<1x128xf32>
    %30 = arith.mulf %29, %27 : vector<1x128xf32>
    %31 = arith.mulf %21, %7 : vector<1x128xf32>
    %32 = arith.addf %30, %31 : vector<1x128xf32>
    %33 = arith.index_cast %c0_i32 : i32 to index
    %c0_13 = arith.constant 0 : index
    %34 = vector.load %arg8[%33, %c0_13] : memref<8x128xf32, #tpu.memory_space<vmem>>, vector<1x128xf32>
    tpu.vector_store %arg8[%33, %c0_13], %32 {strides = array<i32>} : memref<8x128xf32, #tpu.memory_space<vmem>>, vector<1x128xf32>,
    %c1_i32 = arith.constant 1 : i32
    %35 = arith.index_cast %c1_i32 : i32 to index
    %c0_14 = arith.constant 0 : index
    %36 = vector.load %arg7[%35, %c0_14] : memref<8x384xf32, #tpu.memory_space<vmem>>, vector<1x384xf32>
    %37 = arith.truncf %32 : vector<1x128xf32> to vector<1x128xbf16>
    %cst_15 = arith.constant dense<0.000000e+00> : vector<1x384xf32>
    %38 = tpu.matmul %37, %2, %cst_15 {dimension_numbers = #tpu.dot_dimension_numbers<[1], [0], [0], [1], [0, 0, 1, 1], [], []>} : vector<1x128xbf16>, vector<128x384xbf16>, vector<1x384xf32> -> vector<1x384xf32>
    %39 = vector.extract_strided_slice %36 {offsets = [0, 0], sizes = [1, 256], strides = [1, 1]} : vector<1x384xf32> to vector<1x256xf32>
    %40 = vector.extract_strided_slice %38 {offsets = [0, 0], sizes = [1, 256], strides = [1, 1]} : vector<1x384xf32> to vector<1x256xf32>
    %41 = arith.addf %39, %40 : vector<1x256xf32>
    %42 = arith.negf %41 : vector<1x256xf32>
    %43 = math.exp %42 : vector<1x256xf32>
    %cst_16 = arith.constant 1.000000e+00 : f32
    %44 = vector.broadcast %cst_16 : f32 to vector<1x256xf32>
    %45 = arith.addf %44, %43 : vector<1x256xf32>
    %46 = arith.divf %44, %45 : vector<1x256xf32>
    %47 = vector.extract_strided_slice %46 {offsets = [0, 0], sizes = [1, 128], strides = [1, 1]} : vector<1x256xf32> to vector<1x128xf32>
    %48 = vector.extract_strided_slice %46 {offsets = [0, 128], sizes = [1, 128], strides = [1, 1]} : vector<1x256xf32> to vector<1x128xf32>
    %49 = vector.extract_strided_slice %36 {offsets = [0, 256], sizes = [1, 128], strides = [1, 1]} : vector<1x384xf32> to vector<1x128xf32>
    %50 = vector.extract_strided_slice %38 {offsets = [0, 256], sizes = [1, 128], strides = [1, 1]} : vector<1x384xf32> to vector<1x128xf32>
    %51 = arith.addf %50, %5 : vector<1x128xf32>
    %52 = arith.mulf %47, %51 : vector<1x128xf32>
    %53 = arith.addf %49, %52 : vector<1x128xf32>
    %54 = math.tanh %53 : vector<1x128xf32>
    %cst_17 = arith.constant 1.000000e+00 : f32
    %55 = vector.broadcast %cst_17 : f32 to vector<1x128xf32>
    %56 = arith.subf %55, %48 : vector<1x128xf32>
    %57 = arith.mulf %56, %54 : vector<1x128xf32>
    %58 = arith.mulf %48, %32 : vector<1x128xf32>
    %59 = arith.addf %57, %58 : vector<1x128xf32>
    %60 = arith.index_cast %c1_i32 : i32 to index
    %c0_18 = arith.constant 0 : index
    %61 = vector.load %arg8[%60, %c0_18] : memref<8x128xf32, #tpu.memory_space<vmem>>, vector<1x128xf32>
    tpu.vector_store %arg8[%60, %c0_18], %59 {strides = array<i32>} : memref<8x128xf32, #tpu.memory_space<vmem>>, vector<1x128xf32>,
    %c2_i32 = arith.constant 2 : i32
    %62 = arith.index_cast %c2_i32 : i32 to index
    %c0_19 = arith.constant 0 : index
    %63 = vector.load %arg7[%62, %c0_19] : memref<8x384xf32, #tpu.memory_space<vmem>>, vector<1x384xf32>
    %64 = arith.truncf %59 : vector<1x128xf32> to vector<1x128xbf16>
    %cst_20 = arith.constant dense<0.000000e+00> : vector<1x384xf32>
    %65 = tpu.matmul %64, %2, %cst_20 {dimension_numbers = #tpu.dot_dimension_numbers<[1], [0], [0], [1], [0, 0, 1, 1], [], []>} : vector<1x128xbf16>, vector<128x384xbf16>, vector<1x384xf32> -> vector<1x384xf32>
    %66 = vector.extract_strided_slice %63 {offsets = [0, 0], sizes = [1, 256], strides = [1, 1]} : vector<1x384xf32> to vector<1x256xf32>
    %67 = vector.extract_strided_slice %65 {offsets = [0, 0], sizes = [1, 256], strides = [1, 1]} : vector<1x384xf32> to vector<1x256xf32>
    %68 = arith.addf %66, %67 : vector<1x256xf32>
    %69 = arith.negf %68 : vector<1x256xf32>
    %70 = math.exp %69 : vector<1x256xf32>
    %cst_21 = arith.constant 1.000000e+00 : f32
    %71 = vector.broadcast %cst_21 : f32 to vector<1x256xf32>
    %72 = arith.addf %71, %70 : vector<1x256xf32>
    %73 = arith.divf %71, %72 : vector<1x256xf32>
    %74 = vector.extract_strided_slice %73 {offsets = [0, 0], sizes = [1, 128], strides = [1, 1]} : vector<1x256xf32> to vector<1x128xf32>
    %75 = vector.extract_strided_slice %73 {offsets = [0, 128], sizes = [1, 128], strides = [1, 1]} : vector<1x256xf32> to vector<1x128xf32>
    %76 = vector.extract_strided_slice %63 {offsets = [0, 256], sizes = [1, 128], strides = [1, 1]} : vector<1x384xf32> to vector<1x128xf32>
    %77 = vector.extract_strided_slice %65 {offsets = [0, 256], sizes = [1, 128], strides = [1, 1]} : vector<1x384xf32> to vector<1x128xf32>
    %78 = arith.addf %77, %5 : vector<1x128xf32>
    %79 = arith.mulf %74, %78 : vector<1x128xf32>
    %80 = arith.addf %76, %79 : vector<1x128xf32>
    %81 = math.tanh %80 : vector<1x128xf32>
    %cst_22 = arith.constant 1.000000e+00 : f32
    %82 = vector.broadcast %cst_22 : f32 to vector<1x128xf32>
    %83 = arith.subf %82, %75 : vector<1x128xf32>
    %84 = arith.mulf %83, %81 : vector<1x128xf32>
    %85 = arith.mulf %75, %59 : vector<1x128xf32>
    %86 = arith.addf %84, %85 : vector<1x128xf32>
    %87 = arith.index_cast %c2_i32 : i32 to index
    %c0_23 = arith.constant 0 : index
    %88 = vector.load %arg8[%87, %c0_23] : memref<8x128xf32, #tpu.memory_space<vmem>>, vector<1x128xf32>
    tpu.vector_store %arg8[%87, %c0_23], %86 {strides = array<i32>} : memref<8x128xf32, #tpu.memory_space<vmem>>, vector<1x128xf32>,
    %c3_i32 = arith.constant 3 : i32
    %89 = arith.index_cast %c3_i32 : i32 to index
    %c0_24 = arith.constant 0 : index
    %90 = vector.load %arg7[%89, %c0_24] : memref<8x384xf32, #tpu.memory_space<vmem>>, vector<1x384xf32>
    %91 = arith.truncf %86 : vector<1x128xf32> to vector<1x128xbf16>
    %cst_25 = arith.constant dense<0.000000e+00> : vector<1x384xf32>
    %92 = tpu.matmul %91, %2, %cst_25 {dimension_numbers = #tpu.dot_dimension_numbers<[1], [0], [0], [1], [0, 0, 1, 1], [], []>} : vector<1x128xbf16>, vector<128x384xbf16>, vector<1x384xf32> -> vector<1x384xf32>
    %93 = vector.extract_strided_slice %90 {offsets = [0, 0], sizes = [1, 256], strides = [1, 1]} : vector<1x384xf32> to vector<1x256xf32>
    %94 = vector.extract_strided_slice %92 {offsets = [0, 0], sizes = [1, 256], strides = [1, 1]} : vector<1x384xf32> to vector<1x256xf32>
    %95 = arith.addf %93, %94 : vector<1x256xf32>
    %96 = arith.negf %95 : vector<1x256xf32>
    %97 = math.exp %96 : vector<1x256xf32>
    %cst_26 = arith.constant 1.000000e+00 : f32
    %98 = vector.broadcast %cst_26 : f32 to vector<1x256xf32>
    %99 = arith.addf %98, %97 : vector<1x256xf32>
    %100 = arith.divf %98, %99 : vector<1x256xf32>
    %101 = vector.extract_strided_slice %100 {offsets = [0, 0], sizes = [1, 128], strides = [1, 1]} : vector<1x256xf32> to vector<1x128xf32>
    %102 = vector.extract_strided_slice %100 {offsets = [0, 128], sizes = [1, 128], strides = [1, 1]} : vector<1x256xf32> to vector<1x128xf32>
    %103 = vector.extract_strided_slice %90 {offsets = [0, 256], sizes = [1, 128], strides = [1, 1]} : vector<1x384xf32> to vector<1x128xf32>
    %104 = vector.extract_strided_slice %92 {offsets = [0, 256], sizes = [1, 128], strides = [1, 1]} : vector<1x384xf32> to vector<1x128xf32>
    %105 = arith.addf %104, %5 : vector<1x128xf32>
    %106 = arith.mulf %101, %105 : vector<1x128xf32>
    %107 = arith.addf %103, %106 : vector<1x128xf32>
    %108 = math.tanh %107 : vector<1x128xf32>
    %cst_27 = arith.constant 1.000000e+00 : f32
    %109 = vector.broadcast %cst_27 : f32 to vector<1x128xf32>
    %110 = arith.subf %109, %102 : vector<1x128xf32>
    %111 = arith.mulf %110, %108 : vector<1x128xf32>
    %112 = arith.mulf %102, %86 : vector<1x128xf32>
    %113 = arith.addf %111, %112 : vector<1x128xf32>
    %114 = arith.index_cast %c3_i32 : i32 to index
    %c0_28 = arith.constant 0 : index
    %115 = vector.load %arg8[%114, %c0_28] : memref<8x128xf32, #tpu.memory_space<vmem>>, vector<1x128xf32>
    tpu.vector_store %arg8[%114, %c0_28], %113 {strides = array<i32>} : memref<8x128xf32, #tpu.memory_space<vmem>>, vector<1x128xf32>,
    %c4_i32 = arith.constant 4 : i32
    %116 = arith.index_cast %c4_i32 : i32 to index
    %c0_29 = arith.constant 0 : index
    %117 = vector.load %arg7[%116, %c0_29] : memref<8x384xf32, #tpu.memory_space<vmem>>, vector<1x384xf32>
    %118 = arith.truncf %113 : vector<1x128xf32> to vector<1x128xbf16>
    %cst_30 = arith.constant dense<0.000000e+00> : vector<1x384xf32>
    %119 = tpu.matmul %118, %2, %cst_30 {dimension_numbers = #tpu.dot_dimension_numbers<[1], [0], [0], [1], [0, 0, 1, 1], [], []>} : vector<1x128xbf16>, vector<128x384xbf16>, vector<1x384xf32> -> vector<1x384xf32>
    %120 = vector.extract_strided_slice %117 {offsets = [0, 0], sizes = [1, 256], strides = [1, 1]} : vector<1x384xf32> to vector<1x256xf32>
    %121 = vector.extract_strided_slice %119 {offsets = [0, 0], sizes = [1, 256], strides = [1, 1]} : vector<1x384xf32> to vector<1x256xf32>
    %122 = arith.addf %120, %121 : vector<1x256xf32>
    %123 = arith.negf %122 : vector<1x256xf32>
    %124 = math.exp %123 : vector<1x256xf32>
    %cst_31 = arith.constant 1.000000e+00 : f32
    %125 = vector.broadcast %cst_31 : f32 to vector<1x256xf32>
    %126 = arith.addf %125, %124 : vector<1x256xf32>
    %127 = arith.divf %125, %126 : vector<1x256xf32>
    %128 = vector.extract_strided_slice %127 {offsets = [0, 0], sizes = [1, 128], strides = [1, 1]} : vector<1x256xf32> to vector<1x128xf32>
    %129 = vector.extract_strided_slice %127 {offsets = [0, 128], sizes = [1, 128], strides = [1, 1]} : vector<1x256xf32> to vector<1x128xf32>
    %130 = vector.extract_strided_slice %117 {offsets = [0, 256], sizes = [1, 128], strides = [1, 1]} : vector<1x384xf32> to vector<1x128xf32>
    %131 = vector.extract_strided_slice %119 {offsets = [0, 256], sizes = [1, 128], strides = [1, 1]} : vector<1x384xf32> to vector<1x128xf32>
    %132 = arith.addf %131, %5 : vector<1x128xf32>
    %133 = arith.mulf %128, %132 : vector<1x128xf32>
    %134 = arith.addf %130, %133 : vector<1x128xf32>
    %135 = math.tanh %134 : vector<1x128xf32>
    %cst_32 = arith.constant 1.000000e+00 : f32
    %136 = vector.broadcast %cst_32 : f32 to vector<1x128xf32>
    %137 = arith.subf %136, %129 : vector<1x128xf32>
    %138 = arith.mulf %137, %135 : vector<1x128xf32>
    %139 = arith.mulf %129, %113 : vector<1x128xf32>
    %140 = arith.addf %138, %139 : vector<1x128xf32>
    %141 = arith.index_cast %c4_i32 : i32 to index
    %c0_33 = arith.constant 0 : index
    %142 = vector.load %arg8[%141, %c0_33] : memref<8x128xf32, #tpu.memory_space<vmem>>, vector<1x128xf32>
    tpu.vector_store %arg8[%141, %c0_33], %140 {strides = array<i32>} : memref<8x128xf32, #tpu.memory_space<vmem>>, vector<1x128xf32>,
    %c5_i32 = arith.constant 5 : i32
    %143 = arith.index_cast %c5_i32 : i32 to index
    %c0_34 = arith.constant 0 : index
    %144 = vector.load %arg7[%143, %c0_34] : memref<8x384xf32, #tpu.memory_space<vmem>>, vector<1x384xf32>
    %145 = arith.truncf %140 : vector<1x128xf32> to vector<1x128xbf16>
    %cst_35 = arith.constant dense<0.000000e+00> : vector<1x384xf32>
    %146 = tpu.matmul %145, %2, %cst_35 {dimension_numbers = #tpu.dot_dimension_numbers<[1], [0], [0], [1], [0, 0, 1, 1], [], []>} : vector<1x128xbf16>, vector<128x384xbf16>, vector<1x384xf32> -> vector<1x384xf32>
    %147 = vector.extract_strided_slice %144 {offsets = [0, 0], sizes = [1, 256], strides = [1, 1]} : vector<1x384xf32> to vector<1x256xf32>
    %148 = vector.extract_strided_slice %146 {offsets = [0, 0], sizes = [1, 256], strides = [1, 1]} : vector<1x384xf32> to vector<1x256xf32>
    %149 = arith.addf %147, %148 : vector<1x256xf32>
    %150 = arith.negf %149 : vector<1x256xf32>
    %151 = math.exp %150 : vector<1x256xf32>
    %cst_36 = arith.constant 1.000000e+00 : f32
    %152 = vector.broadcast %cst_36 : f32 to vector<1x256xf32>
    %153 = arith.addf %152, %151 : vector<1x256xf32>
    %154 = arith.divf %152, %153 : vector<1x256xf32>
    %155 = vector.extract_strided_slice %154 {offsets = [0, 0], sizes = [1, 128], strides = [1, 1]} : vector<1x256xf32> to vector<1x128xf32>
    %156 = vector.extract_strided_slice %154 {offsets = [0, 128], sizes = [1, 128], strides = [1, 1]} : vector<1x256xf32> to vector<1x128xf32>
    %157 = vector.extract_strided_slice %144 {offsets = [0, 256], sizes = [1, 128], strides = [1, 1]} : vector<1x384xf32> to vector<1x128xf32>
    %158 = vector.extract_strided_slice %146 {offsets = [0, 256], sizes = [1, 128], strides = [1, 1]} : vector<1x384xf32> to vector<1x128xf32>
    %159 = arith.addf %158, %5 : vector<1x128xf32>
    %160 = arith.mulf %155, %159 : vector<1x128xf32>
    %161 = arith.addf %157, %160 : vector<1x128xf32>
    %162 = math.tanh %161 : vector<1x128xf32>
    %cst_37 = arith.constant 1.000000e+00 : f32
    %163 = vector.broadcast %cst_37 : f32 to vector<1x128xf32>
    %164 = arith.subf %163, %156 : vector<1x128xf32>
    %165 = arith.mulf %164, %162 : vector<1x128xf32>
    %166 = arith.mulf %156, %140 : vector<1x128xf32>
    %167 = arith.addf %165, %166 : vector<1x128xf32>
    %168 = arith.index_cast %c5_i32 : i32 to index
    %c0_38 = arith.constant 0 : index
    %169 = vector.load %arg8[%168, %c0_38] : memref<8x128xf32, #tpu.memory_space<vmem>>, vector<1x128xf32>
    tpu.vector_store %arg8[%168, %c0_38], %167 {strides = array<i32>} : memref<8x128xf32, #tpu.memory_space<vmem>>, vector<1x128xf32>,
    %c6_i32 = arith.constant 6 : i32
    %170 = arith.index_cast %c6_i32 : i32 to index
    %c0_39 = arith.constant 0 : index
    %171 = vector.load %arg7[%170, %c0_39] : memref<8x384xf32, #tpu.memory_space<vmem>>, vector<1x384xf32>
    %172 = arith.truncf %167 : vector<1x128xf32> to vector<1x128xbf16>
    %cst_40 = arith.constant dense<0.000000e+00> : vector<1x384xf32>
    %173 = tpu.matmul %172, %2, %cst_40 {dimension_numbers = #tpu.dot_dimension_numbers<[1], [0], [0], [1], [0, 0, 1, 1], [], []>} : vector<1x128xbf16>, vector<128x384xbf16>, vector<1x384xf32> -> vector<1x384xf32>
    %174 = vector.extract_strided_slice %171 {offsets = [0, 0], sizes = [1, 256], strides = [1, 1]} : vector<1x384xf32> to vector<1x256xf32>
    %175 = vector.extract_strided_slice %173 {offsets = [0, 0], sizes = [1, 256], strides = [1, 1]} : vector<1x384xf32> to vector<1x256xf32>
    %176 = arith.addf %174, %175 : vector<1x256xf32>
    %177 = arith.negf %176 : vector<1x256xf32>
    %178 = math.exp %177 : vector<1x256xf32>
    %cst_41 = arith.constant 1.000000e+00 : f32
    %179 = vector.broadcast %cst_41 : f32 to vector<1x256xf32>
    %180 = arith.addf %179, %178 : vector<1x256xf32>
    %181 = arith.divf %179, %180 : vector<1x256xf32>
    %182 = vector.extract_strided_slice %181 {offsets = [0, 0], sizes = [1, 128], strides = [1, 1]} : vector<1x256xf32> to vector<1x128xf32>
    %183 = vector.extract_strided_slice %181 {offsets = [0, 128], sizes = [1, 128], strides = [1, 1]} : vector<1x256xf32> to vector<1x128xf32>
    %184 = vector.extract_strided_slice %171 {offsets = [0, 256], sizes = [1, 128], strides = [1, 1]} : vector<1x384xf32> to vector<1x128xf32>
    %185 = vector.extract_strided_slice %173 {offsets = [0, 256], sizes = [1, 128], strides = [1, 1]} : vector<1x384xf32> to vector<1x128xf32>
    %186 = arith.addf %185, %5 : vector<1x128xf32>
    %187 = arith.mulf %182, %186 : vector<1x128xf32>
    %188 = arith.addf %184, %187 : vector<1x128xf32>
    %189 = math.tanh %188 : vector<1x128xf32>
    %cst_42 = arith.constant 1.000000e+00 : f32
    %190 = vector.broadcast %cst_42 : f32 to vector<1x128xf32>
    %191 = arith.subf %190, %183 : vector<1x128xf32>
    %192 = arith.mulf %191, %189 : vector<1x128xf32>
    %193 = arith.mulf %183, %167 : vector<1x128xf32>
    %194 = arith.addf %192, %193 : vector<1x128xf32>
    %195 = arith.index_cast %c6_i32 : i32 to index
    %c0_43 = arith.constant 0 : index
    %196 = vector.load %arg8[%195, %c0_43] : memref<8x128xf32, #tpu.memory_space<vmem>>, vector<1x128xf32>
    tpu.vector_store %arg8[%195, %c0_43], %194 {strides = array<i32>} : memref<8x128xf32, #tpu.memory_space<vmem>>, vector<1x128xf32>,
    %c7_i32 = arith.constant 7 : i32
    %197 = arith.index_cast %c7_i32 : i32 to index
    %c0_44 = arith.constant 0 : index
    %198 = vector.load %arg7[%197, %c0_44] : memref<8x384xf32, #tpu.memory_space<vmem>>, vector<1x384xf32>
    %199 = arith.truncf %194 : vector<1x128xf32> to vector<1x128xbf16>
    %cst_45 = arith.constant dense<0.000000e+00> : vector<1x384xf32>
    %200 = tpu.matmul %199, %2, %cst_45 {dimension_numbers = #tpu.dot_dimension_numbers<[1], [0], [0], [1], [0, 0, 1, 1], [], []>} : vector<1x128xbf16>, vector<128x384xbf16>, vector<1x384xf32> -> vector<1x384xf32>
    %201 = vector.extract_strided_slice %198 {offsets = [0, 0], sizes = [1, 256], strides = [1, 1]} : vector<1x384xf32> to vector<1x256xf32>
    %202 = vector.extract_strided_slice %200 {offsets = [0, 0], sizes = [1, 256], strides = [1, 1]} : vector<1x384xf32> to vector<1x256xf32>
    %203 = arith.addf %201, %202 : vector<1x256xf32>
    %204 = arith.negf %203 : vector<1x256xf32>
    %205 = math.exp %204 : vector<1x256xf32>
    %cst_46 = arith.constant 1.000000e+00 : f32
    %206 = vector.broadcast %cst_46 : f32 to vector<1x256xf32>
    %207 = arith.addf %206, %205 : vector<1x256xf32>
    %208 = arith.divf %206, %207 : vector<1x256xf32>
    %209 = vector.extract_strided_slice %208 {offsets = [0, 0], sizes = [1, 128], strides = [1, 1]} : vector<1x256xf32> to vector<1x128xf32>
    %210 = vector.extract_strided_slice %208 {offsets = [0, 128], sizes = [1, 128], strides = [1, 1]} : vector<1x256xf32> to vector<1x128xf32>
    %211 = vector.extract_strided_slice %198 {offsets = [0, 256], sizes = [1, 128], strides = [1, 1]} : vector<1x384xf32> to vector<1x128xf32>
    %212 = vector.extract_strided_slice %200 {offsets = [0, 256], sizes = [1, 128], strides = [1, 1]} : vector<1x384xf32> to vector<1x128xf32>
    %213 = arith.addf %212, %5 : vector<1x128xf32>
    %214 = arith.mulf %209, %213 : vector<1x128xf32>
    %215 = arith.addf %211, %214 : vector<1x128xf32>
    %216 = math.tanh %215 : vector<1x128xf32>
    %cst_47 = arith.constant 1.000000e+00 : f32
    %217 = vector.broadcast %cst_47 : f32 to vector<1x128xf32>
    %218 = arith.subf %217, %210 : vector<1x128xf32>
    %219 = arith.mulf %218, %216 : vector<1x128xf32>
    %220 = arith.mulf %210, %194 : vector<1x128xf32>
    %221 = arith.addf %219, %220 : vector<1x128xf32>
    %222 = arith.index_cast %c7_i32 : i32 to index
    %c0_48 = arith.constant 0 : index
    %223 = vector.load %arg8[%222, %c0_48] : memref<8x128xf32, #tpu.memory_space<vmem>>, vector<1x128xf32>
    tpu.vector_store %arg8[%222, %c0_48], %221 {strides = array<i32>} : memref<8x128xf32, #tpu.memory_space<vmem>>, vector<1x128xf32>,
    %c8_i32 = arith.constant 8 : i32
    %c1 = arith.constant 1 : index
    %c0_49 = arith.constant 0 : index
    %c0_50 = arith.constant 0 : index
    %224 = vector.load %arg3[%c1, %c0_49, %c0_50] : memref<4x1x512xf32, #tpu.memory_space<vmem>>, vector<1x1x512xf32>
    %225 = vector.shape_cast %224 : vector<1x1x512xf32> to vector<1x512xf32>
    %226 = vector.extract_strided_slice %225 {offsets = [0, 0], sizes = [1, 384], strides = [1, 1]} : vector<1x512xf32> to vector<1x384xf32>
    %c0_51 = arith.constant 0 : index
    %c0_52 = arith.constant 0 : index
    %227 = vector.load %arg8[%c0_51, %c0_52] : memref<8x128xf32, #tpu.memory_space<vmem>>, vector<8x128xf32>
    %228 = arith.truncf %227 : vector<8x128xf32> to vector<8x128xbf16>
    %c0_53 = arith.constant 0 : index
    %c0_54 = arith.constant 0 : index
    %c0_55 = arith.constant 0 : index
    %229 = vector.load %arg1[%c0_53, %c0_54, %c0_55] : memref<3x128x384xbf16, #tpu.memory_space<vmem>>, vector<1x128x384xbf16>
    %230 = vector.shape_cast %229 : vector<1x128x384xbf16> to vector<128x384xbf16>
    %cst_56 = arith.constant dense<0.000000e+00> : vector<8x384xf32>
    %231 = tpu.matmul %228, %230, %cst_56 {dimension_numbers = #tpu.dot_dimension_numbers<[1], [0], [0], [1], [0, 0, 1, 1], [], []>} : vector<8x128xbf16>, vector<128x384xbf16>, vector<8x384xf32> -> vector<8x384xf32>
    %232 = vector.broadcast %226 : vector<1x384xf32> to vector<8x384xf32>
    %233 = arith.addf %231, %232 : vector<8x384xf32>
    %c1_57 = arith.constant 1 : index
    %c0_58 = arith.constant 0 : index
    %c0_59 = arith.constant 0 : index
    %234 = vector.load %arg2[%c1_57, %c0_58, %c0_59] : memref<4x128x384xbf16, #tpu.memory_space<vmem>>, vector<1x128x384xbf16>
    %235 = vector.shape_cast %234 : vector<1x128x384xbf16> to vector<128x384xbf16>
    %c1_60 = arith.constant 1 : index
    %c0_61 = arith.constant 0 : index
    %c0_62 = arith.constant 0 : index
    %236 = vector.load %arg3[%c1_60, %c0_61, %c0_62] : memref<4x1x512xf32, #tpu.memory_space<vmem>>, vector<1x1x512xf32>
    %237 = vector.shape_cast %236 : vector<1x1x512xf32> to vector<1x512xf32>
    %238 = vector.extract_strided_slice %237 {offsets = [0, 384], sizes = [1, 128], strides = [1, 1]} : vector<1x512xf32> to vector<1x128xf32>
    %c0_63 = arith.constant 0 : index
    %c0_64 = arith.constant 0 : index
    %239 = vector.load %arg7[%c0_63, %c0_64] : memref<8x384xf32, #tpu.memory_space<vmem>>, vector<8x384xf32>
    tpu.vector_store %arg7[%c0_63, %c0_64], %233 {strides = array<i32>} : memref<8x384xf32, #tpu.memory_space<vmem>>, vector<8x384xf32>,
    %cst_65 = arith.constant 0.000000e+00 : f32
    %240 = vector.broadcast %cst_65 : f32 to vector<1x128xf32>
    %c0_i32_66 = arith.constant 0 : i32
    %241 = arith.index_cast %c0_i32_66 : i32 to index
    %c0_67 = arith.constant 0 : index
    %242 = vector.load %arg7[%241, %c0_67] : memref<8x384xf32, #tpu.memory_space<vmem>>, vector<1x384xf32>
    %243 = arith.truncf %240 : vector<1x128xf32> to vector<1x128xbf16>
    %cst_68 = arith.constant dense<0.000000e+00> : vector<1x384xf32>
    %244 = tpu.matmul %243, %235, %cst_68 {dimension_numbers = #tpu.dot_dimension_numbers<[1], [0], [0], [1], [0, 0, 1, 1], [], []>} : vector<1x128xbf16>, vector<128x384xbf16>, vector<1x384xf32> -> vector<1x384xf32>
    %245 = vector.extract_strided_slice %242 {offsets = [0, 0], sizes = [1, 256], strides = [1, 1]} : vector<1x384xf32> to vector<1x256xf32>
    %246 = vector.extract_strided_slice %244 {offsets = [0, 0], sizes = [1, 256], strides = [1, 1]} : vector<1x384xf32> to vector<1x256xf32>
    %247 = arith.addf %245, %246 : vector<1x256xf32>
    %248 = arith.negf %247 : vector<1x256xf32>
    %249 = math.exp %248 : vector<1x256xf32>
    %cst_69 = arith.constant 1.000000e+00 : f32
    %250 = vector.broadcast %cst_69 : f32 to vector<1x256xf32>
    %251 = arith.addf %250, %249 : vector<1x256xf32>
    %252 = arith.divf %250, %251 : vector<1x256xf32>
    %253 = vector.extract_strided_slice %252 {offsets = [0, 0], sizes = [1, 128], strides = [1, 1]} : vector<1x256xf32> to vector<1x128xf32>
    %254 = vector.extract_strided_slice %252 {offsets = [0, 128], sizes = [1, 128], strides = [1, 1]} : vector<1x256xf32> to vector<1x128xf32>
    %255 = vector.extract_strided_slice %242 {offsets = [0, 256], sizes = [1, 128], strides = [1, 1]} : vector<1x384xf32> to vector<1x128xf32>
    %256 = vector.extract_strided_slice %244 {offsets = [0, 256], sizes = [1, 128], strides = [1, 1]} : vector<1x384xf32> to vector<1x128xf32>
    %257 = arith.addf %256, %238 : vector<1x128xf32>
    %258 = arith.mulf %253, %257 : vector<1x128xf32>
    %259 = arith.addf %255, %258 : vector<1x128xf32>
    %260 = math.tanh %259 : vector<1x128xf32>
    %cst_70 = arith.constant 1.000000e+00 : f32
    %261 = vector.broadcast %cst_70 : f32 to vector<1x128xf32>
    %262 = arith.subf %261, %254 : vector<1x128xf32>
    %263 = arith.mulf %262, %260 : vector<1x128xf32>
    %264 = arith.mulf %254, %240 : vector<1x128xf32>
    %265 = arith.addf %263, %264 : vector<1x128xf32>
    %266 = arith.index_cast %c0_i32_66 : i32 to index
    %c0_71 = arith.constant 0 : index
    %267 = vector.load %arg8[%266, %c0_71] : memref<8x128xf32, #tpu.memory_space<vmem>>, vector<1x128xf32>
    tpu.vector_store %arg8[%266, %c0_71], %265 {strides = array<i32>} : memref<8x128xf32, #tpu.memory_space<vmem>>, vector<1x128xf32>,
    %c1_i32_72 = arith.constant 1 : i32
    %268 = arith.index_cast %c1_i32_72 : i32 to index
    %c0_73 = arith.constant 0 : index
    %269 = vector.load %arg7[%268, %c0_73] : memref<8x384xf32, #tpu.memory_space<vmem>>, vector<1x384xf32>
    %270 = arith.truncf %265 : vector<1x128xf32> to vector<1x128xbf16>
    %cst_74 = arith.constant dense<0.000000e+00> : vector<1x384xf32>
    %271 = tpu.matmul %270, %235, %cst_74 {dimension_numbers = #tpu.dot_dimension_numbers<[1], [0], [0], [1], [0, 0, 1, 1], [], []>} : vector<1x128xbf16>, vector<128x384xbf16>, vector<1x384xf32> -> vector<1x384xf32>
    %272 = vector.extract_strided_slice %269 {offsets = [0, 0], sizes = [1, 256], strides = [1, 1]} : vector<1x384xf32> to vector<1x256xf32>
    %273 = vector.extract_strided_slice %271 {offsets = [0, 0], sizes = [1, 256], strides = [1, 1]} : vector<1x384xf32> to vector<1x256xf32>
    %274 = arith.addf %272, %273 : vector<1x256xf32>
    %275 = arith.negf %274 : vector<1x256xf32>
    %276 = math.exp %275 : vector<1x256xf32>
    %cst_75 = arith.constant 1.000000e+00 : f32
    %277 = vector.broadcast %cst_75 : f32 to vector<1x256xf32>
    %278 = arith.addf %277, %276 : vector<1x256xf32>
    %279 = arith.divf %277, %278 : vector<1x256xf32>
    %280 = vector.extract_strided_slice %279 {offsets = [0, 0], sizes = [1, 128], strides = [1, 1]} : vector<1x256xf32> to vector<1x128xf32>
    %281 = vector.extract_strided_slice %279 {offsets = [0, 128], sizes = [1, 128], strides = [1, 1]} : vector<1x256xf32> to vector<1x128xf32>
    %282 = vector.extract_strided_slice %269 {offsets = [0, 256], sizes = [1, 128], strides = [1, 1]} : vector<1x384xf32> to vector<1x128xf32>
    %283 = vector.extract_strided_slice %271 {offsets = [0, 256], sizes = [1, 128], strides = [1, 1]} : vector<1x384xf32> to vector<1x128xf32>
    %284 = arith.addf %283, %238 : vector<1x128xf32>
    %285 = arith.mulf %280, %284 : vector<1x128xf32>
    %286 = arith.addf %282, %285 : vector<1x128xf32>
    %287 = math.tanh %286 : vector<1x128xf32>
    %cst_76 = arith.constant 1.000000e+00 : f32
    %288 = vector.broadcast %cst_76 : f32 to vector<1x128xf32>
    %289 = arith.subf %288, %281 : vector<1x128xf32>
    %290 = arith.mulf %289, %287 : vector<1x128xf32>
    %291 = arith.mulf %281, %265 : vector<1x128xf32>
    %292 = arith.addf %290, %291 : vector<1x128xf32>
    %293 = arith.index_cast %c1_i32_72 : i32 to index
    %c0_77 = arith.constant 0 : index
    %294 = vector.load %arg8[%293, %c0_77] : memref<8x128xf32, #tpu.memory_space<vmem>>, vector<1x128xf32>
    tpu.vector_store %arg8[%293, %c0_77], %292 {strides = array<i32>} : memref<8x128xf32, #tpu.memory_space<vmem>>, vector<1x128xf32>,
    %c2_i32_78 = arith.constant 2 : i32
    %295 = arith.index_cast %c2_i32_78 : i32 to index
    %c0_79 = arith.constant 0 : index
    %296 = vector.load %arg7[%295, %c0_79] : memref<8x384xf32, #tpu.memory_space<vmem>>, vector<1x384xf32>
    %297 = arith.truncf %292 : vector<1x128xf32> to vector<1x128xbf16>
    %cst_80 = arith.constant dense<0.000000e+00> : vector<1x384xf32>
    %298 = tpu.matmul %297, %235, %cst_80 {dimension_numbers = #tpu.dot_dimension_numbers<[1], [0], [0], [1], [0, 0, 1, 1], [], []>} : vector<1x128xbf16>, vector<128x384xbf16>, vector<1x384xf32> -> vector<1x384xf32>
    %299 = vector.extract_strided_slice %296 {offsets = [0, 0], sizes = [1, 256], strides = [1, 1]} : vector<1x384xf32> to vector<1x256xf32>
    %300 = vector.extract_strided_slice %298 {offsets = [0, 0], sizes = [1, 256], strides = [1, 1]} : vector<1x384xf32> to vector<1x256xf32>
    %301 = arith.addf %299, %300 : vector<1x256xf32>
    %302 = arith.negf %301 : vector<1x256xf32>
    %303 = math.exp %302 : vector<1x256xf32>
    %cst_81 = arith.constant 1.000000e+00 : f32
    %304 = vector.broadcast %cst_81 : f32 to vector<1x256xf32>
    %305 = arith.addf %304, %303 : vector<1x256xf32>
    %306 = arith.divf %304, %305 : vector<1x256xf32>
    %307 = vector.extract_strided_slice %306 {offsets = [0, 0], sizes = [1, 128], strides = [1, 1]} : vector<1x256xf32> to vector<1x128xf32>
    %308 = vector.extract_strided_slice %306 {offsets = [0, 128], sizes = [1, 128], strides = [1, 1]} : vector<1x256xf32> to vector<1x128xf32>
    %309 = vector.extract_strided_slice %296 {offsets = [0, 256], sizes = [1, 128], strides = [1, 1]} : vector<1x384xf32> to vector<1x128xf32>
    %310 = vector.extract_strided_slice %298 {offsets = [0, 256], sizes = [1, 128], strides = [1, 1]} : vector<1x384xf32> to vector<1x128xf32>
    %311 = arith.addf %310, %238 : vector<1x128xf32>
    %312 = arith.mulf %307, %311 : vector<1x128xf32>
    %313 = arith.addf %309, %312 : vector<1x128xf32>
    %314 = math.tanh %313 : vector<1x128xf32>
    %cst_82 = arith.constant 1.000000e+00 : f32
    %315 = vector.broadcast %cst_82 : f32 to vector<1x128xf32>
    %316 = arith.subf %315, %308 : vector<1x128xf32>
    %317 = arith.mulf %316, %314 : vector<1x128xf32>
    %318 = arith.mulf %308, %292 : vector<1x128xf32>
    %319 = arith.addf %317, %318 : vector<1x128xf32>
    %320 = arith.index_cast %c2_i32_78 : i32 to index
    %c0_83 = arith.constant 0 : index
    %321 = vector.load %arg8[%320, %c0_83] : memref<8x128xf32, #tpu.memory_space<vmem>>, vector<1x128xf32>
    tpu.vector_store %arg8[%320, %c0_83], %319 {strides = array<i32>} : memref<8x128xf32, #tpu.memory_space<vmem>>, vector<1x128xf32>,
    %c3_i32_84 = arith.constant 3 : i32
    %322 = arith.index_cast %c3_i32_84 : i32 to index
    %c0_85 = arith.constant 0 : index
    %323 = vector.load %arg7[%322, %c0_85] : memref<8x384xf32, #tpu.memory_space<vmem>>, vector<1x384xf32>
    %324 = arith.truncf %319 : vector<1x128xf32> to vector<1x128xbf16>
    %cst_86 = arith.constant dense<0.000000e+00> : vector<1x384xf32>
    %325 = tpu.matmul %324, %235, %cst_86 {dimension_numbers = #tpu.dot_dimension_numbers<[1], [0], [0], [1], [0, 0, 1, 1], [], []>} : vector<1x128xbf16>, vector<128x384xbf16>, vector<1x384xf32> -> vector<1x384xf32>
    %326 = vector.extract_strided_slice %323 {offsets = [0, 0], sizes = [1, 256], strides = [1, 1]} : vector<1x384xf32> to vector<1x256xf32>
    %327 = vector.extract_strided_slice %325 {offsets = [0, 0], sizes = [1, 256], strides = [1, 1]} : vector<1x384xf32> to vector<1x256xf32>
    %328 = arith.addf %326, %327 : vector<1x256xf32>
    %329 = arith.negf %328 : vector<1x256xf32>
    %330 = math.exp %329 : vector<1x256xf32>
    %cst_87 = arith.constant 1.000000e+00 : f32
    %331 = vector.broadcast %cst_87 : f32 to vector<1x256xf32>
    %332 = arith.addf %331, %330 : vector<1x256xf32>
    %333 = arith.divf %331, %332 : vector<1x256xf32>
    %334 = vector.extract_strided_slice %333 {offsets = [0, 0], sizes = [1, 128], strides = [1, 1]} : vector<1x256xf32> to vector<1x128xf32>
    %335 = vector.extract_strided_slice %333 {offsets = [0, 128], sizes = [1, 128], strides = [1, 1]} : vector<1x256xf32> to vector<1x128xf32>
    %336 = vector.extract_strided_slice %323 {offsets = [0, 256], sizes = [1, 128], strides = [1, 1]} : vector<1x384xf32> to vector<1x128xf32>
    %337 = vector.extract_strided_slice %325 {offsets = [0, 256], sizes = [1, 128], strides = [1, 1]} : vector<1x384xf32> to vector<1x128xf32>
    %338 = arith.addf %337, %238 : vector<1x128xf32>
    %339 = arith.mulf %334, %338 : vector<1x128xf32>
    %340 = arith.addf %336, %339 : vector<1x128xf32>
    %341 = math.tanh %340 : vector<1x128xf32>
    %cst_88 = arith.constant 1.000000e+00 : f32
    %342 = vector.broadcast %cst_88 : f32 to vector<1x128xf32>
    %343 = arith.subf %342, %335 : vector<1x128xf32>
    %344 = arith.mulf %343, %341 : vector<1x128xf32>
    %345 = arith.mulf %335, %319 : vector<1x128xf32>
    %346 = arith.addf %344, %345 : vector<1x128xf32>
    %347 = arith.index_cast %c3_i32_84 : i32 to index
    %c0_89 = arith.constant 0 : index
    %348 = vector.load %arg8[%347, %c0_89] : memref<8x128xf32, #tpu.memory_space<vmem>>, vector<1x128xf32>
    tpu.vector_store %arg8[%347, %c0_89], %346 {strides = array<i32>} : memref<8x128xf32, #tpu.memory_space<vmem>>, vector<1x128xf32>,
    %c4_i32_90 = arith.constant 4 : i32
    %349 = arith.index_cast %c4_i32_90 : i32 to index
    %c0_91 = arith.constant 0 : index
    %350 = vector.load %arg7[%349, %c0_91] : memref<8x384xf32, #tpu.memory_space<vmem>>, vector<1x384xf32>
    %351 = arith.truncf %346 : vector<1x128xf32> to vector<1x128xbf16>
    %cst_92 = arith.constant dense<0.000000e+00> : vector<1x384xf32>
    %352 = tpu.matmul %351, %235, %cst_92 {dimension_numbers = #tpu.dot_dimension_numbers<[1], [0], [0], [1], [0, 0, 1, 1], [], []>} : vector<1x128xbf16>, vector<128x384xbf16>, vector<1x384xf32> -> vector<1x384xf32>
    %353 = vector.extract_strided_slice %350 {offsets = [0, 0], sizes = [1, 256], strides = [1, 1]} : vector<1x384xf32> to vector<1x256xf32>
    %354 = vector.extract_strided_slice %352 {offsets = [0, 0], sizes = [1, 256], strides = [1, 1]} : vector<1x384xf32> to vector<1x256xf32>
    %355 = arith.addf %353, %354 : vector<1x256xf32>
    %356 = arith.negf %355 : vector<1x256xf32>
    %357 = math.exp %356 : vector<1x256xf32>
    %cst_93 = arith.constant 1.000000e+00 : f32
    %358 = vector.broadcast %cst_93 : f32 to vector<1x256xf32>
    %359 = arith.addf %358, %357 : vector<1x256xf32>
    %360 = arith.divf %358, %359 : vector<1x256xf32>
    %361 = vector.extract_strided_slice %360 {offsets = [0, 0], sizes = [1, 128], strides = [1, 1]} : vector<1x256xf32> to vector<1x128xf32>
    %362 = vector.extract_strided_slice %360 {offsets = [0, 128], sizes = [1, 128], strides = [1, 1]} : vector<1x256xf32> to vector<1x128xf32>
    %363 = vector.extract_strided_slice %350 {offsets = [0, 256], sizes = [1, 128], strides = [1, 1]} : vector<1x384xf32> to vector<1x128xf32>
    %364 = vector.extract_strided_slice %352 {offsets = [0, 256], sizes = [1, 128], strides = [1, 1]} : vector<1x384xf32> to vector<1x128xf32>
    %365 = arith.addf %364, %238 : vector<1x128xf32>
    %366 = arith.mulf %361, %365 : vector<1x128xf32>
    %367 = arith.addf %363, %366 : vector<1x128xf32>
    %368 = math.tanh %367 : vector<1x128xf32>
    %cst_94 = arith.constant 1.000000e+00 : f32
    %369 = vector.broadcast %cst_94 : f32 to vector<1x128xf32>
    %370 = arith.subf %369, %362 : vector<1x128xf32>
    %371 = arith.mulf %370, %368 : vector<1x128xf32>
    %372 = arith.mulf %362, %346 : vector<1x128xf32>
    %373 = arith.addf %371, %372 : vector<1x128xf32>
    %374 = arith.index_cast %c4_i32_90 : i32 to index
    %c0_95 = arith.constant 0 : index
    %375 = vector.load %arg8[%374, %c0_95] : memref<8x128xf32, #tpu.memory_space<vmem>>, vector<1x128xf32>
    tpu.vector_store %arg8[%374, %c0_95], %373 {strides = array<i32>} : memref<8x128xf32, #tpu.memory_space<vmem>>, vector<1x128xf32>,
    %c5_i32_96 = arith.constant 5 : i32
    %376 = arith.index_cast %c5_i32_96 : i32 to index
    %c0_97 = arith.constant 0 : index
    %377 = vector.load %arg7[%376, %c0_97] : memref<8x384xf32, #tpu.memory_space<vmem>>, vector<1x384xf32>
    %378 = arith.truncf %373 : vector<1x128xf32> to vector<1x128xbf16>
    %cst_98 = arith.constant dense<0.000000e+00> : vector<1x384xf32>
    %379 = tpu.matmul %378, %235, %cst_98 {dimension_numbers = #tpu.dot_dimension_numbers<[1], [0], [0], [1], [0, 0, 1, 1], [], []>} : vector<1x128xbf16>, vector<128x384xbf16>, vector<1x384xf32> -> vector<1x384xf32>
    %380 = vector.extract_strided_slice %377 {offsets = [0, 0], sizes = [1, 256], strides = [1, 1]} : vector<1x384xf32> to vector<1x256xf32>
    %381 = vector.extract_strided_slice %379 {offsets = [0, 0], sizes = [1, 256], strides = [1, 1]} : vector<1x384xf32> to vector<1x256xf32>
    %382 = arith.addf %380, %381 : vector<1x256xf32>
    %383 = arith.negf %382 : vector<1x256xf32>
    %384 = math.exp %383 : vector<1x256xf32>
    %cst_99 = arith.constant 1.000000e+00 : f32
    %385 = vector.broadcast %cst_99 : f32 to vector<1x256xf32>
    %386 = arith.addf %385, %384 : vector<1x256xf32>
    %387 = arith.divf %385, %386 : vector<1x256xf32>
    %388 = vector.extract_strided_slice %387 {offsets = [0, 0], sizes = [1, 128], strides = [1, 1]} : vector<1x256xf32> to vector<1x128xf32>
    %389 = vector.extract_strided_slice %387 {offsets = [0, 128], sizes = [1, 128], strides = [1, 1]} : vector<1x256xf32> to vector<1x128xf32>
    %390 = vector.extract_strided_slice %377 {offsets = [0, 256], sizes = [1, 128], strides = [1, 1]} : vector<1x384xf32> to vector<1x128xf32>
    %391 = vector.extract_strided_slice %379 {offsets = [0, 256], sizes = [1, 128], strides = [1, 1]} : vector<1x384xf32> to vector<1x128xf32>
    %392 = arith.addf %391, %238 : vector<1x128xf32>
    %393 = arith.mulf %388, %392 : vector<1x128xf32>
    %394 = arith.addf %390, %393 : vector<1x128xf32>
    %395 = math.tanh %394 : vector<1x128xf32>
    %cst_100 = arith.constant 1.000000e+00 : f32
    %396 = vector.broadcast %cst_100 : f32 to vector<1x128xf32>
    %397 = arith.subf %396, %389 : vector<1x128xf32>
    %398 = arith.mulf %397, %395 : vector<1x128xf32>
    %399 = arith.mulf %389, %373 : vector<1x128xf32>
    %400 = arith.addf %398, %399 : vector<1x128xf32>
    %401 = arith.index_cast %c5_i32_96 : i32 to index
    %c0_101 = arith.constant 0 : index
    %402 = vector.load %arg8[%401, %c0_101] : memref<8x128xf32, #tpu.memory_space<vmem>>, vector<1x128xf32>
    tpu.vector_store %arg8[%401, %c0_101], %400 {strides = array<i32>} : memref<8x128xf32, #tpu.memory_space<vmem>>, vector<1x128xf32>,
    %c6_i32_102 = arith.constant 6 : i32
    %403 = arith.index_cast %c6_i32_102 : i32 to index
    %c0_103 = arith.constant 0 : index
    %404 = vector.load %arg7[%403, %c0_103] : memref<8x384xf32, #tpu.memory_space<vmem>>, vector<1x384xf32>
    %405 = arith.truncf %400 : vector<1x128xf32> to vector<1x128xbf16>
    %cst_104 = arith.constant dense<0.000000e+00> : vector<1x384xf32>
    %406 = tpu.matmul %405, %235, %cst_104 {dimension_numbers = #tpu.dot_dimension_numbers<[1], [0], [0], [1], [0, 0, 1, 1], [], []>} : vector<1x128xbf16>, vector<128x384xbf16>, vector<1x384xf32> -> vector<1x384xf32>
    %407 = vector.extract_strided_slice %404 {offsets = [0, 0], sizes = [1, 256], strides = [1, 1]} : vector<1x384xf32> to vector<1x256xf32>
    %408 = vector.extract_strided_slice %406 {offsets = [0, 0], sizes = [1, 256], strides = [1, 1]} : vector<1x384xf32> to vector<1x256xf32>
    %409 = arith.addf %407, %408 : vector<1x256xf32>
    %410 = arith.negf %409 : vector<1x256xf32>
    %411 = math.exp %410 : vector<1x256xf32>
    %cst_105 = arith.constant 1.000000e+00 : f32
    %412 = vector.broadcast %cst_105 : f32 to vector<1x256xf32>
    %413 = arith.addf %412, %411 : vector<1x256xf32>
    %414 = arith.divf %412, %413 : vector<1x256xf32>
    %415 = vector.extract_strided_slice %414 {offsets = [0, 0], sizes = [1, 128], strides = [1, 1]} : vector<1x256xf32> to vector<1x128xf32>
    %416 = vector.extract_strided_slice %414 {offsets = [0, 128], sizes = [1, 128], strides = [1, 1]} : vector<1x256xf32> to vector<1x128xf32>
    %417 = vector.extract_strided_slice %404 {offsets = [0, 256], sizes = [1, 128], strides = [1, 1]} : vector<1x384xf32> to vector<1x128xf32>
    %418 = vector.extract_strided_slice %406 {offsets = [0, 256], sizes = [1, 128], strides = [1, 1]} : vector<1x384xf32> to vector<1x128xf32>
    %419 = arith.addf %418, %238 : vector<1x128xf32>
    %420 = arith.mulf %415, %419 : vector<1x128xf32>
    %421 = arith.addf %417, %420 : vector<1x128xf32>
    %422 = math.tanh %421 : vector<1x128xf32>
    %cst_106 = arith.constant 1.000000e+00 : f32
    %423 = vector.broadcast %cst_106 : f32 to vector<1x128xf32>
    %424 = arith.subf %423, %416 : vector<1x128xf32>
    %425 = arith.mulf %424, %422 : vector<1x128xf32>
    %426 = arith.mulf %416, %400 : vector<1x128xf32>
    %427 = arith.addf %425, %426 : vector<1x128xf32>
    %428 = arith.index_cast %c6_i32_102 : i32 to index
    %c0_107 = arith.constant 0 : index
    %429 = vector.load %arg8[%428, %c0_107] : memref<8x128xf32, #tpu.memory_space<vmem>>, vector<1x128xf32>
    tpu.vector_store %arg8[%428, %c0_107], %427 {strides = array<i32>} : memref<8x128xf32, #tpu.memory_space<vmem>>, vector<1x128xf32>,
    %c7_i32_108 = arith.constant 7 : i32
    %430 = arith.index_cast %c7_i32_108 : i32 to index
    %c0_109 = arith.constant 0 : index
    %431 = vector.load %arg7[%430, %c0_109] : memref<8x384xf32, #tpu.memory_space<vmem>>, vector<1x384xf32>
    %432 = arith.truncf %427 : vector<1x128xf32> to vector<1x128xbf16>
    %cst_110 = arith.constant dense<0.000000e+00> : vector<1x384xf32>
    %433 = tpu.matmul %432, %235, %cst_110 {dimension_numbers = #tpu.dot_dimension_numbers<[1], [0], [0], [1], [0, 0, 1, 1], [], []>} : vector<1x128xbf16>, vector<128x384xbf16>, vector<1x384xf32> -> vector<1x384xf32>
    %434 = vector.extract_strided_slice %431 {offsets = [0, 0], sizes = [1, 256], strides = [1, 1]} : vector<1x384xf32> to vector<1x256xf32>
    %435 = vector.extract_strided_slice %433 {offsets = [0, 0], sizes = [1, 256], strides = [1, 1]} : vector<1x384xf32> to vector<1x256xf32>
    %436 = arith.addf %434, %435 : vector<1x256xf32>
    %437 = arith.negf %436 : vector<1x256xf32>
    %438 = math.exp %437 : vector<1x256xf32>
    %cst_111 = arith.constant 1.000000e+00 : f32
    %439 = vector.broadcast %cst_111 : f32 to vector<1x256xf32>
    %440 = arith.addf %439, %438 : vector<1x256xf32>
    %441 = arith.divf %439, %440 : vector<1x256xf32>
    %442 = vector.extract_strided_slice %441 {offsets = [0, 0], sizes = [1, 128], strides = [1, 1]} : vector<1x256xf32> to vector<1x128xf32>
    %443 = vector.extract_strided_slice %441 {offsets = [0, 128], sizes = [1, 128], strides = [1, 1]} : vector<1x256xf32> to vector<1x128xf32>
    %444 = vector.extract_strided_slice %431 {offsets = [0, 256], sizes = [1, 128], strides = [1, 1]} : vector<1x384xf32> to vector<1x128xf32>
    %445 = vector.extract_strided_slice %433 {offsets = [0, 256], sizes = [1, 128], strides = [1, 1]} : vector<1x384xf32> to vector<1x128xf32>
    %446 = arith.addf %445, %238 : vector<1x128xf32>
    %447 = arith.mulf %442, %446 : vector<1x128xf32>
    %448 = arith.addf %444, %447 : vector<1x128xf32>
    %449 = math.tanh %448 : vector<1x128xf32>
    %cst_112 = arith.constant 1.000000e+00 : f32
    %450 = vector.broadcast %cst_112 : f32 to vector<1x128xf32>
    %451 = arith.subf %450, %443 : vector<1x128xf32>
    %452 = arith.mulf %451, %449 : vector<1x128xf32>
    %453 = arith.mulf %443, %427 : vector<1x128xf32>
    %454 = arith.addf %452, %453 : vector<1x128xf32>
    %455 = arith.index_cast %c7_i32_108 : i32 to index
    %c0_113 = arith.constant 0 : index
    %456 = vector.load %arg8[%455, %c0_113] : memref<8x128xf32, #tpu.memory_space<vmem>>, vector<1x128xf32>
    tpu.vector_store %arg8[%455, %c0_113], %454 {strides = array<i32>} : memref<8x128xf32, #tpu.memory_space<vmem>>, vector<1x128xf32>,
    %c8_i32_114 = arith.constant 8 : i32
    %c2 = arith.constant 2 : index
    %c0_115 = arith.constant 0 : index
    %c0_116 = arith.constant 0 : index
    %457 = vector.load %arg3[%c2, %c0_115, %c0_116] : memref<4x1x512xf32, #tpu.memory_space<vmem>>, vector<1x1x512xf32>
    %458 = vector.shape_cast %457 : vector<1x1x512xf32> to vector<1x512xf32>
    %459 = vector.extract_strided_slice %458 {offsets = [0, 0], sizes = [1, 384], strides = [1, 1]} : vector<1x512xf32> to vector<1x384xf32>
    %c0_117 = arith.constant 0 : index
    %c0_118 = arith.constant 0 : index
    %460 = vector.load %arg8[%c0_117, %c0_118] : memref<8x128xf32, #tpu.memory_space<vmem>>, vector<8x128xf32>
    %461 = arith.truncf %460 : vector<8x128xf32> to vector<8x128xbf16>
    %c1_119 = arith.constant 1 : index
    %c0_120 = arith.constant 0 : index
    %c0_121 = arith.constant 0 : index
    %462 = vector.load %arg1[%c1_119, %c0_120, %c0_121] : memref<3x128x384xbf16, #tpu.memory_space<vmem>>, vector<1x128x384xbf16>
    %463 = vector.shape_cast %462 : vector<1x128x384xbf16> to vector<128x384xbf16>
    %cst_122 = arith.constant dense<0.000000e+00> : vector<8x384xf32>
    %464 = tpu.matmul %461, %463, %cst_122 {dimension_numbers = #tpu.dot_dimension_numbers<[1], [0], [0], [1], [0, 0, 1, 1], [], []>} : vector<8x128xbf16>, vector<128x384xbf16>, vector<8x384xf32> -> vector<8x384xf32>
    %465 = vector.broadcast %459 : vector<1x384xf32> to vector<8x384xf32>
    %466 = arith.addf %464, %465 : vector<8x384xf32>
    %c2_123 = arith.constant 2 : index
    %c0_124 = arith.constant 0 : index
    %c0_125 = arith.constant 0 : index
    %467 = vector.load %arg2[%c2_123, %c0_124, %c0_125] : memref<4x128x384xbf16, #tpu.memory_space<vmem>>, vector<1x128x384xbf16>
    %468 = vector.shape_cast %467 : vector<1x128x384xbf16> to vector<128x384xbf16>
    %c2_126 = arith.constant 2 : index
    %c0_127 = arith.constant 0 : index
    %c0_128 = arith.constant 0 : index
    %469 = vector.load %arg3[%c2_126, %c0_127, %c0_128] : memref<4x1x512xf32, #tpu.memory_space<vmem>>, vector<1x1x512xf32>
    %470 = vector.shape_cast %469 : vector<1x1x512xf32> to vector<1x512xf32>
    %471 = vector.extract_strided_slice %470 {offsets = [0, 384], sizes = [1, 128], strides = [1, 1]} : vector<1x512xf32> to vector<1x128xf32>
    %c0_129 = arith.constant 0 : index
    %c0_130 = arith.constant 0 : index
    %472 = vector.load %arg7[%c0_129, %c0_130] : memref<8x384xf32, #tpu.memory_space<vmem>>, vector<8x384xf32>
    tpu.vector_store %arg7[%c0_129, %c0_130], %466 {strides = array<i32>} : memref<8x384xf32, #tpu.memory_space<vmem>>, vector<8x384xf32>,
    %cst_131 = arith.constant 0.000000e+00 : f32
    %473 = vector.broadcast %cst_131 : f32 to vector<1x128xf32>
    %c0_i32_132 = arith.constant 0 : i32
    %474 = arith.index_cast %c0_i32_132 : i32 to index
    %c0_133 = arith.constant 0 : index
    %475 = vector.load %arg7[%474, %c0_133] : memref<8x384xf32, #tpu.memory_space<vmem>>, vector<1x384xf32>
    %476 = arith.truncf %473 : vector<1x128xf32> to vector<1x128xbf16>
    %cst_134 = arith.constant dense<0.000000e+00> : vector<1x384xf32>
    %477 = tpu.matmul %476, %468, %cst_134 {dimension_numbers = #tpu.dot_dimension_numbers<[1], [0], [0], [1], [0, 0, 1, 1], [], []>} : vector<1x128xbf16>, vector<128x384xbf16>, vector<1x384xf32> -> vector<1x384xf32>
    %478 = vector.extract_strided_slice %475 {offsets = [0, 0], sizes = [1, 256], strides = [1, 1]} : vector<1x384xf32> to vector<1x256xf32>
    %479 = vector.extract_strided_slice %477 {offsets = [0, 0], sizes = [1, 256], strides = [1, 1]} : vector<1x384xf32> to vector<1x256xf32>
    %480 = arith.addf %478, %479 : vector<1x256xf32>
    %481 = arith.negf %480 : vector<1x256xf32>
    %482 = math.exp %481 : vector<1x256xf32>
    %cst_135 = arith.constant 1.000000e+00 : f32
    %483 = vector.broadcast %cst_135 : f32 to vector<1x256xf32>
    %484 = arith.addf %483, %482 : vector<1x256xf32>
    %485 = arith.divf %483, %484 : vector<1x256xf32>
    %486 = vector.extract_strided_slice %485 {offsets = [0, 0], sizes = [1, 128], strides = [1, 1]} : vector<1x256xf32> to vector<1x128xf32>
    %487 = vector.extract_strided_slice %485 {offsets = [0, 128], sizes = [1, 128], strides = [1, 1]} : vector<1x256xf32> to vector<1x128xf32>
    %488 = vector.extract_strided_slice %475 {offsets = [0, 256], sizes = [1, 128], strides = [1, 1]} : vector<1x384xf32> to vector<1x128xf32>
    %489 = vector.extract_strided_slice %477 {offsets = [0, 256], sizes = [1, 128], strides = [1, 1]} : vector<1x384xf32> to vector<1x128xf32>
    %490 = arith.addf %489, %471 : vector<1x128xf32>
    %491 = arith.mulf %486, %490 : vector<1x128xf32>
    %492 = arith.addf %488, %491 : vector<1x128xf32>
    %493 = math.tanh %492 : vector<1x128xf32>
    %cst_136 = arith.constant 1.000000e+00 : f32
    %494 = vector.broadcast %cst_136 : f32 to vector<1x128xf32>
    %495 = arith.subf %494, %487 : vector<1x128xf32>
    %496 = arith.mulf %495, %493 : vector<1x128xf32>
    %497 = arith.mulf %487, %473 : vector<1x128xf32>
    %498 = arith.addf %496, %497 : vector<1x128xf32>
    %499 = arith.index_cast %c0_i32_132 : i32 to index
    %c0_137 = arith.constant 0 : index
    %500 = vector.load %arg8[%499, %c0_137] : memref<8x128xf32, #tpu.memory_space<vmem>>, vector<1x128xf32>
    tpu.vector_store %arg8[%499, %c0_137], %498 {strides = array<i32>} : memref<8x128xf32, #tpu.memory_space<vmem>>, vector<1x128xf32>,
    %c1_i32_138 = arith.constant 1 : i32
    %501 = arith.index_cast %c1_i32_138 : i32 to index
    %c0_139 = arith.constant 0 : index
    %502 = vector.load %arg7[%501, %c0_139] : memref<8x384xf32, #tpu.memory_space<vmem>>, vector<1x384xf32>
    %503 = arith.truncf %498 : vector<1x128xf32> to vector<1x128xbf16>
    %cst_140 = arith.constant dense<0.000000e+00> : vector<1x384xf32>
    %504 = tpu.matmul %503, %468, %cst_140 {dimension_numbers = #tpu.dot_dimension_numbers<[1], [0], [0], [1], [0, 0, 1, 1], [], []>} : vector<1x128xbf16>, vector<128x384xbf16>, vector<1x384xf32> -> vector<1x384xf32>
    %505 = vector.extract_strided_slice %502 {offsets = [0, 0], sizes = [1, 256], strides = [1, 1]} : vector<1x384xf32> to vector<1x256xf32>
    %506 = vector.extract_strided_slice %504 {offsets = [0, 0], sizes = [1, 256], strides = [1, 1]} : vector<1x384xf32> to vector<1x256xf32>
    %507 = arith.addf %505, %506 : vector<1x256xf32>
    %508 = arith.negf %507 : vector<1x256xf32>
    %509 = math.exp %508 : vector<1x256xf32>
    %cst_141 = arith.constant 1.000000e+00 : f32
    %510 = vector.broadcast %cst_141 : f32 to vector<1x256xf32>
    %511 = arith.addf %510, %509 : vector<1x256xf32>
    %512 = arith.divf %510, %511 : vector<1x256xf32>
    %513 = vector.extract_strided_slice %512 {offsets = [0, 0], sizes = [1, 128], strides = [1, 1]} : vector<1x256xf32> to vector<1x128xf32>
    %514 = vector.extract_strided_slice %512 {offsets = [0, 128], sizes = [1, 128], strides = [1, 1]} : vector<1x256xf32> to vector<1x128xf32>
    %515 = vector.extract_strided_slice %502 {offsets = [0, 256], sizes = [1, 128], strides = [1, 1]} : vector<1x384xf32> to vector<1x128xf32>
    %516 = vector.extract_strided_slice %504 {offsets = [0, 256], sizes = [1, 128], strides = [1, 1]} : vector<1x384xf32> to vector<1x128xf32>
    %517 = arith.addf %516, %471 : vector<1x128xf32>
    %518 = arith.mulf %513, %517 : vector<1x128xf32>
    %519 = arith.addf %515, %518 : vector<1x128xf32>
    %520 = math.tanh %519 : vector<1x128xf32>
    %cst_142 = arith.constant 1.000000e+00 : f32
    %521 = vector.broadcast %cst_142 : f32 to vector<1x128xf32>
    %522 = arith.subf %521, %514 : vector<1x128xf32>
    %523 = arith.mulf %522, %520 : vector<1x128xf32>
    %524 = arith.mulf %514, %498 : vector<1x128xf32>
    %525 = arith.addf %523, %524 : vector<1x128xf32>
    %526 = arith.index_cast %c1_i32_138 : i32 to index
    %c0_143 = arith.constant 0 : index
    %527 = vector.load %arg8[%526, %c0_143] : memref<8x128xf32, #tpu.memory_space<vmem>>, vector<1x128xf32>
    tpu.vector_store %arg8[%526, %c0_143], %525 {strides = array<i32>} : memref<8x128xf32, #tpu.memory_space<vmem>>, vector<1x128xf32>,
    %c2_i32_144 = arith.constant 2 : i32
    %528 = arith.index_cast %c2_i32_144 : i32 to index
    %c0_145 = arith.constant 0 : index
    %529 = vector.load %arg7[%528, %c0_145] : memref<8x384xf32, #tpu.memory_space<vmem>>, vector<1x384xf32>
    %530 = arith.truncf %525 : vector<1x128xf32> to vector<1x128xbf16>
    %cst_146 = arith.constant dense<0.000000e+00> : vector<1x384xf32>
    %531 = tpu.matmul %530, %468, %cst_146 {dimension_numbers = #tpu.dot_dimension_numbers<[1], [0], [0], [1], [0, 0, 1, 1], [], []>} : vector<1x128xbf16>, vector<128x384xbf16>, vector<1x384xf32> -> vector<1x384xf32>
    %532 = vector.extract_strided_slice %529 {offsets = [0, 0], sizes = [1, 256], strides = [1, 1]} : vector<1x384xf32> to vector<1x256xf32>
    %533 = vector.extract_strided_slice %531 {offsets = [0, 0], sizes = [1, 256], strides = [1, 1]} : vector<1x384xf32> to vector<1x256xf32>
    %534 = arith.addf %532, %533 : vector<1x256xf32>
    %535 = arith.negf %534 : vector<1x256xf32>
    %536 = math.exp %535 : vector<1x256xf32>
    %cst_147 = arith.constant 1.000000e+00 : f32
    %537 = vector.broadcast %cst_147 : f32 to vector<1x256xf32>
    %538 = arith.addf %537, %536 : vector<1x256xf32>
    %539 = arith.divf %537, %538 : vector<1x256xf32>
    %540 = vector.extract_strided_slice %539 {offsets = [0, 0], sizes = [1, 128], strides = [1, 1]} : vector<1x256xf32> to vector<1x128xf32>
    %541 = vector.extract_strided_slice %539 {offsets = [0, 128], sizes = [1, 128], strides = [1, 1]} : vector<1x256xf32> to vector<1x128xf32>
    %542 = vector.extract_strided_slice %529 {offsets = [0, 256], sizes = [1, 128], strides = [1, 1]} : vector<1x384xf32> to vector<1x128xf32>
    %543 = vector.extract_strided_slice %531 {offsets = [0, 256], sizes = [1, 128], strides = [1, 1]} : vector<1x384xf32> to vector<1x128xf32>
    %544 = arith.addf %543, %471 : vector<1x128xf32>
    %545 = arith.mulf %540, %544 : vector<1x128xf32>
    %546 = arith.addf %542, %545 : vector<1x128xf32>
    %547 = math.tanh %546 : vector<1x128xf32>
    %cst_148 = arith.constant 1.000000e+00 : f32
    %548 = vector.broadcast %cst_148 : f32 to vector<1x128xf32>
    %549 = arith.subf %548, %541 : vector<1x128xf32>
    %550 = arith.mulf %549, %547 : vector<1x128xf32>
    %551 = arith.mulf %541, %525 : vector<1x128xf32>
    %552 = arith.addf %550, %551 : vector<1x128xf32>
    %553 = arith.index_cast %c2_i32_144 : i32 to index
    %c0_149 = arith.constant 0 : index
    %554 = vector.load %arg8[%553, %c0_149] : memref<8x128xf32, #tpu.memory_space<vmem>>, vector<1x128xf32>
    tpu.vector_store %arg8[%553, %c0_149], %552 {strides = array<i32>} : memref<8x128xf32, #tpu.memory_space<vmem>>, vector<1x128xf32>,
    %c3_i32_150 = arith.constant 3 : i32
    %555 = arith.index_cast %c3_i32_150 : i32 to index
    %c0_151 = arith.constant 0 : index
    %556 = vector.load %arg7[%555, %c0_151] : memref<8x384xf32, #tpu.memory_space<vmem>>, vector<1x384xf32>
    %557 = arith.truncf %552 : vector<1x128xf32> to vector<1x128xbf16>
    %cst_152 = arith.constant dense<0.000000e+00> : vector<1x384xf32>
    %558 = tpu.matmul %557, %468, %cst_152 {dimension_numbers = #tpu.dot_dimension_numbers<[1], [0], [0], [1], [0, 0, 1, 1], [], []>} : vector<1x128xbf16>, vector<128x384xbf16>, vector<1x384xf32> -> vector<1x384xf32>
    %559 = vector.extract_strided_slice %556 {offsets = [0, 0], sizes = [1, 256], strides = [1, 1]} : vector<1x384xf32> to vector<1x256xf32>
    %560 = vector.extract_strided_slice %558 {offsets = [0, 0], sizes = [1, 256], strides = [1, 1]} : vector<1x384xf32> to vector<1x256xf32>
    %561 = arith.addf %559, %560 : vector<1x256xf32>
    %562 = arith.negf %561 : vector<1x256xf32>
    %563 = math.exp %562 : vector<1x256xf32>
    %cst_153 = arith.constant 1.000000e+00 : f32
    %564 = vector.broadcast %cst_153 : f32 to vector<1x256xf32>
    %565 = arith.addf %564, %563 : vector<1x256xf32>
    %566 = arith.divf %564, %565 : vector<1x256xf32>
    %567 = vector.extract_strided_slice %566 {offsets = [0, 0], sizes = [1, 128], strides = [1, 1]} : vector<1x256xf32> to vector<1x128xf32>
    %568 = vector.extract_strided_slice %566 {offsets = [0, 128], sizes = [1, 128], strides = [1, 1]} : vector<1x256xf32> to vector<1x128xf32>
    %569 = vector.extract_strided_slice %556 {offsets = [0, 256], sizes = [1, 128], strides = [1, 1]} : vector<1x384xf32> to vector<1x128xf32>
    %570 = vector.extract_strided_slice %558 {offsets = [0, 256], sizes = [1, 128], strides = [1, 1]} : vector<1x384xf32> to vector<1x128xf32>
    %571 = arith.addf %570, %471 : vector<1x128xf32>
    %572 = arith.mulf %567, %571 : vector<1x128xf32>
    %573 = arith.addf %569, %572 : vector<1x128xf32>
    %574 = math.tanh %573 : vector<1x128xf32>
    %cst_154 = arith.constant 1.000000e+00 : f32
    %575 = vector.broadcast %cst_154 : f32 to vector<1x128xf32>
    %576 = arith.subf %575, %568 : vector<1x128xf32>
    %577 = arith.mulf %576, %574 : vector<1x128xf32>
    %578 = arith.mulf %568, %552 : vector<1x128xf32>
    %579 = arith.addf %577, %578 : vector<1x128xf32>
    %580 = arith.index_cast %c3_i32_150 : i32 to index
    %c0_155 = arith.constant 0 : index
    %581 = vector.load %arg8[%580, %c0_155] : memref<8x128xf32, #tpu.memory_space<vmem>>, vector<1x128xf32>
    tpu.vector_store %arg8[%580, %c0_155], %579 {strides = array<i32>} : memref<8x128xf32, #tpu.memory_space<vmem>>, vector<1x128xf32>,
    %c4_i32_156 = arith.constant 4 : i32
    %582 = arith.index_cast %c4_i32_156 : i32 to index
    %c0_157 = arith.constant 0 : index
    %583 = vector.load %arg7[%582, %c0_157] : memref<8x384xf32, #tpu.memory_space<vmem>>, vector<1x384xf32>
    %584 = arith.truncf %579 : vector<1x128xf32> to vector<1x128xbf16>
    %cst_158 = arith.constant dense<0.000000e+00> : vector<1x384xf32>
    %585 = tpu.matmul %584, %468, %cst_158 {dimension_numbers = #tpu.dot_dimension_numbers<[1], [0], [0], [1], [0, 0, 1, 1], [], []>} : vector<1x128xbf16>, vector<128x384xbf16>, vector<1x384xf32> -> vector<1x384xf32>
    %586 = vector.extract_strided_slice %583 {offsets = [0, 0], sizes = [1, 256], strides = [1, 1]} : vector<1x384xf32> to vector<1x256xf32>
    %587 = vector.extract_strided_slice %585 {offsets = [0, 0], sizes = [1, 256], strides = [1, 1]} : vector<1x384xf32> to vector<1x256xf32>
    %588 = arith.addf %586, %587 : vector<1x256xf32>
    %589 = arith.negf %588 : vector<1x256xf32>
    %590 = math.exp %589 : vector<1x256xf32>
    %cst_159 = arith.constant 1.000000e+00 : f32
    %591 = vector.broadcast %cst_159 : f32 to vector<1x256xf32>
    %592 = arith.addf %591, %590 : vector<1x256xf32>
    %593 = arith.divf %591, %592 : vector<1x256xf32>
    %594 = vector.extract_strided_slice %593 {offsets = [0, 0], sizes = [1, 128], strides = [1, 1]} : vector<1x256xf32> to vector<1x128xf32>
    %595 = vector.extract_strided_slice %593 {offsets = [0, 128], sizes = [1, 128], strides = [1, 1]} : vector<1x256xf32> to vector<1x128xf32>
    %596 = vector.extract_strided_slice %583 {offsets = [0, 256], sizes = [1, 128], strides = [1, 1]} : vector<1x384xf32> to vector<1x128xf32>
    %597 = vector.extract_strided_slice %585 {offsets = [0, 256], sizes = [1, 128], strides = [1, 1]} : vector<1x384xf32> to vector<1x128xf32>
    %598 = arith.addf %597, %471 : vector<1x128xf32>
    %599 = arith.mulf %594, %598 : vector<1x128xf32>
    %600 = arith.addf %596, %599 : vector<1x128xf32>
    %601 = math.tanh %600 : vector<1x128xf32>
    %cst_160 = arith.constant 1.000000e+00 : f32
    %602 = vector.broadcast %cst_160 : f32 to vector<1x128xf32>
    %603 = arith.subf %602, %595 : vector<1x128xf32>
    %604 = arith.mulf %603, %601 : vector<1x128xf32>
    %605 = arith.mulf %595, %579 : vector<1x128xf32>
    %606 = arith.addf %604, %605 : vector<1x128xf32>
    %607 = arith.index_cast %c4_i32_156 : i32 to index
    %c0_161 = arith.constant 0 : index
    %608 = vector.load %arg8[%607, %c0_161] : memref<8x128xf32, #tpu.memory_space<vmem>>, vector<1x128xf32>
    tpu.vector_store %arg8[%607, %c0_161], %606 {strides = array<i32>} : memref<8x128xf32, #tpu.memory_space<vmem>>, vector<1x128xf32>,
    %c5_i32_162 = arith.constant 5 : i32
    %609 = arith.index_cast %c5_i32_162 : i32 to index
    %c0_163 = arith.constant 0 : index
    %610 = vector.load %arg7[%609, %c0_163] : memref<8x384xf32, #tpu.memory_space<vmem>>, vector<1x384xf32>
    %611 = arith.truncf %606 : vector<1x128xf32> to vector<1x128xbf16>
    %cst_164 = arith.constant dense<0.000000e+00> : vector<1x384xf32>
    %612 = tpu.matmul %611, %468, %cst_164 {dimension_numbers = #tpu.dot_dimension_numbers<[1], [0], [0], [1], [0, 0, 1, 1], [], []>} : vector<1x128xbf16>, vector<128x384xbf16>, vector<1x384xf32> -> vector<1x384xf32>
    %613 = vector.extract_strided_slice %610 {offsets = [0, 0], sizes = [1, 256], strides = [1, 1]} : vector<1x384xf32> to vector<1x256xf32>
    %614 = vector.extract_strided_slice %612 {offsets = [0, 0], sizes = [1, 256], strides = [1, 1]} : vector<1x384xf32> to vector<1x256xf32>
    %615 = arith.addf %613, %614 : vector<1x256xf32>
    %616 = arith.negf %615 : vector<1x256xf32>
    %617 = math.exp %616 : vector<1x256xf32>
    %cst_165 = arith.constant 1.000000e+00 : f32
    %618 = vector.broadcast %cst_165 : f32 to vector<1x256xf32>
    %619 = arith.addf %618, %617 : vector<1x256xf32>
    %620 = arith.divf %618, %619 : vector<1x256xf32>
    %621 = vector.extract_strided_slice %620 {offsets = [0, 0], sizes = [1, 128], strides = [1, 1]} : vector<1x256xf32> to vector<1x128xf32>
    %622 = vector.extract_strided_slice %620 {offsets = [0, 128], sizes = [1, 128], strides = [1, 1]} : vector<1x256xf32> to vector<1x128xf32>
    %623 = vector.extract_strided_slice %610 {offsets = [0, 256], sizes = [1, 128], strides = [1, 1]} : vector<1x384xf32> to vector<1x128xf32>
    %624 = vector.extract_strided_slice %612 {offsets = [0, 256], sizes = [1, 128], strides = [1, 1]} : vector<1x384xf32> to vector<1x128xf32>
    %625 = arith.addf %624, %471 : vector<1x128xf32>
    %626 = arith.mulf %621, %625 : vector<1x128xf32>
    %627 = arith.addf %623, %626 : vector<1x128xf32>
    %628 = math.tanh %627 : vector<1x128xf32>
    %cst_166 = arith.constant 1.000000e+00 : f32
    %629 = vector.broadcast %cst_166 : f32 to vector<1x128xf32>
    %630 = arith.subf %629, %622 : vector<1x128xf32>
    %631 = arith.mulf %630, %628 : vector<1x128xf32>
    %632 = arith.mulf %622, %606 : vector<1x128xf32>
    %633 = arith.addf %631, %632 : vector<1x128xf32>
    %634 = arith.index_cast %c5_i32_162 : i32 to index
    %c0_167 = arith.constant 0 : index
    %635 = vector.load %arg8[%634, %c0_167] : memref<8x128xf32, #tpu.memory_space<vmem>>, vector<1x128xf32>
    tpu.vector_store %arg8[%634, %c0_167], %633 {strides = array<i32>} : memref<8x128xf32, #tpu.memory_space<vmem>>, vector<1x128xf32>,
    %c6_i32_168 = arith.constant 6 : i32
    %636 = arith.index_cast %c6_i32_168 : i32 to index
    %c0_169 = arith.constant 0 : index
    %637 = vector.load %arg7[%636, %c0_169] : memref<8x384xf32, #tpu.memory_space<vmem>>, vector<1x384xf32>
    %638 = arith.truncf %633 : vector<1x128xf32> to vector<1x128xbf16>
    %cst_170 = arith.constant dense<0.000000e+00> : vector<1x384xf32>
    %639 = tpu.matmul %638, %468, %cst_170 {dimension_numbers = #tpu.dot_dimension_numbers<[1], [0], [0], [1], [0, 0, 1, 1], [], []>} : vector<1x128xbf16>, vector<128x384xbf16>, vector<1x384xf32> -> vector<1x384xf32>
    %640 = vector.extract_strided_slice %637 {offsets = [0, 0], sizes = [1, 256], strides = [1, 1]} : vector<1x384xf32> to vector<1x256xf32>
    %641 = vector.extract_strided_slice %639 {offsets = [0, 0], sizes = [1, 256], strides = [1, 1]} : vector<1x384xf32> to vector<1x256xf32>
    %642 = arith.addf %640, %641 : vector<1x256xf32>
    %643 = arith.negf %642 : vector<1x256xf32>
    %644 = math.exp %643 : vector<1x256xf32>
    %cst_171 = arith.constant 1.000000e+00 : f32
    %645 = vector.broadcast %cst_171 : f32 to vector<1x256xf32>
    %646 = arith.addf %645, %644 : vector<1x256xf32>
    %647 = arith.divf %645, %646 : vector<1x256xf32>
    %648 = vector.extract_strided_slice %647 {offsets = [0, 0], sizes = [1, 128], strides = [1, 1]} : vector<1x256xf32> to vector<1x128xf32>
    %649 = vector.extract_strided_slice %647 {offsets = [0, 128], sizes = [1, 128], strides = [1, 1]} : vector<1x256xf32> to vector<1x128xf32>
    %650 = vector.extract_strided_slice %637 {offsets = [0, 256], sizes = [1, 128], strides = [1, 1]} : vector<1x384xf32> to vector<1x128xf32>
    %651 = vector.extract_strided_slice %639 {offsets = [0, 256], sizes = [1, 128], strides = [1, 1]} : vector<1x384xf32> to vector<1x128xf32>
    %652 = arith.addf %651, %471 : vector<1x128xf32>
    %653 = arith.mulf %648, %652 : vector<1x128xf32>
    %654 = arith.addf %650, %653 : vector<1x128xf32>
    %655 = math.tanh %654 : vector<1x128xf32>
    %cst_172 = arith.constant 1.000000e+00 : f32
    %656 = vector.broadcast %cst_172 : f32 to vector<1x128xf32>
    %657 = arith.subf %656, %649 : vector<1x128xf32>
    %658 = arith.mulf %657, %655 : vector<1x128xf32>
    %659 = arith.mulf %649, %633 : vector<1x128xf32>
    %660 = arith.addf %658, %659 : vector<1x128xf32>
    %661 = arith.index_cast %c6_i32_168 : i32 to index
    %c0_173 = arith.constant 0 : index
    %662 = vector.load %arg8[%661, %c0_173] : memref<8x128xf32, #tpu.memory_space<vmem>>, vector<1x128xf32>
    tpu.vector_store %arg8[%661, %c0_173], %660 {strides = array<i32>} : memref<8x128xf32, #tpu.memory_space<vmem>>, vector<1x128xf32>,
    %c7_i32_174 = arith.constant 7 : i32
    %663 = arith.index_cast %c7_i32_174 : i32 to index
    %c0_175 = arith.constant 0 : index
    %664 = vector.load %arg7[%663, %c0_175] : memref<8x384xf32, #tpu.memory_space<vmem>>, vector<1x384xf32>
    %665 = arith.truncf %660 : vector<1x128xf32> to vector<1x128xbf16>
    %cst_176 = arith.constant dense<0.000000e+00> : vector<1x384xf32>
    %666 = tpu.matmul %665, %468, %cst_176 {dimension_numbers = #tpu.dot_dimension_numbers<[1], [0], [0], [1], [0, 0, 1, 1], [], []>} : vector<1x128xbf16>, vector<128x384xbf16>, vector<1x384xf32> -> vector<1x384xf32>
    %667 = vector.extract_strided_slice %664 {offsets = [0, 0], sizes = [1, 256], strides = [1, 1]} : vector<1x384xf32> to vector<1x256xf32>
    %668 = vector.extract_strided_slice %666 {offsets = [0, 0], sizes = [1, 256], strides = [1, 1]} : vector<1x384xf32> to vector<1x256xf32>
    %669 = arith.addf %667, %668 : vector<1x256xf32>
    %670 = arith.negf %669 : vector<1x256xf32>
    %671 = math.exp %670 : vector<1x256xf32>
    %cst_177 = arith.constant 1.000000e+00 : f32
    %672 = vector.broadcast %cst_177 : f32 to vector<1x256xf32>
    %673 = arith.addf %672, %671 : vector<1x256xf32>
    %674 = arith.divf %672, %673 : vector<1x256xf32>
    %675 = vector.extract_strided_slice %674 {offsets = [0, 0], sizes = [1, 128], strides = [1, 1]} : vector<1x256xf32> to vector<1x128xf32>
    %676 = vector.extract_strided_slice %674 {offsets = [0, 128], sizes = [1, 128], strides = [1, 1]} : vector<1x256xf32> to vector<1x128xf32>
    %677 = vector.extract_strided_slice %664 {offsets = [0, 256], sizes = [1, 128], strides = [1, 1]} : vector<1x384xf32> to vector<1x128xf32>
    %678 = vector.extract_strided_slice %666 {offsets = [0, 256], sizes = [1, 128], strides = [1, 1]} : vector<1x384xf32> to vector<1x128xf32>
    %679 = arith.addf %678, %471 : vector<1x128xf32>
    %680 = arith.mulf %675, %679 : vector<1x128xf32>
    %681 = arith.addf %677, %680 : vector<1x128xf32>
    %682 = math.tanh %681 : vector<1x128xf32>
    %cst_178 = arith.constant 1.000000e+00 : f32
    %683 = vector.broadcast %cst_178 : f32 to vector<1x128xf32>
    %684 = arith.subf %683, %676 : vector<1x128xf32>
    %685 = arith.mulf %684, %682 : vector<1x128xf32>
    %686 = arith.mulf %676, %660 : vector<1x128xf32>
    %687 = arith.addf %685, %686 : vector<1x128xf32>
    %688 = arith.index_cast %c7_i32_174 : i32 to index
    %c0_179 = arith.constant 0 : index
    %689 = vector.load %arg8[%688, %c0_179] : memref<8x128xf32, #tpu.memory_space<vmem>>, vector<1x128xf32>
    tpu.vector_store %arg8[%688, %c0_179], %687 {strides = array<i32>} : memref<8x128xf32, #tpu.memory_space<vmem>>, vector<1x128xf32>,
    %c8_i32_180 = arith.constant 8 : i32
    %c3 = arith.constant 3 : index
    %c0_181 = arith.constant 0 : index
    %c0_182 = arith.constant 0 : index
    %690 = vector.load %arg3[%c3, %c0_181, %c0_182] : memref<4x1x512xf32, #tpu.memory_space<vmem>>, vector<1x1x512xf32>
    %691 = vector.shape_cast %690 : vector<1x1x512xf32> to vector<1x512xf32>
    %692 = vector.extract_strided_slice %691 {offsets = [0, 0], sizes = [1, 384], strides = [1, 1]} : vector<1x512xf32> to vector<1x384xf32>
    %c0_183 = arith.constant 0 : index
    %c0_184 = arith.constant 0 : index
    %693 = vector.load %arg8[%c0_183, %c0_184] : memref<8x128xf32, #tpu.memory_space<vmem>>, vector<8x128xf32>
    %694 = arith.truncf %693 : vector<8x128xf32> to vector<8x128xbf16>
    %c2_185 = arith.constant 2 : index
    %c0_186 = arith.constant 0 : index
    %c0_187 = arith.constant 0 : index
    %695 = vector.load %arg1[%c2_185, %c0_186, %c0_187] : memref<3x128x384xbf16, #tpu.memory_space<vmem>>, vector<1x128x384xbf16>
    %696 = vector.shape_cast %695 : vector<1x128x384xbf16> to vector<128x384xbf16>
    %cst_188 = arith.constant dense<0.000000e+00> : vector<8x384xf32>
    %697 = tpu.matmul %694, %696, %cst_188 {dimension_numbers = #tpu.dot_dimension_numbers<[1], [0], [0], [1], [0, 0, 1, 1], [], []>} : vector<8x128xbf16>, vector<128x384xbf16>, vector<8x384xf32> -> vector<8x384xf32>
    %698 = vector.broadcast %692 : vector<1x384xf32> to vector<8x384xf32>
    %699 = arith.addf %697, %698 : vector<8x384xf32>
    %c3_189 = arith.constant 3 : index
    %c0_190 = arith.constant 0 : index
    %c0_191 = arith.constant 0 : index
    %700 = vector.load %arg2[%c3_189, %c0_190, %c0_191] : memref<4x128x384xbf16, #tpu.memory_space<vmem>>, vector<1x128x384xbf16>
    %701 = vector.shape_cast %700 : vector<1x128x384xbf16> to vector<128x384xbf16>
    %c3_192 = arith.constant 3 : index
    %c0_193 = arith.constant 0 : index
    %c0_194 = arith.constant 0 : index
    %702 = vector.load %arg3[%c3_192, %c0_193, %c0_194] : memref<4x1x512xf32, #tpu.memory_space<vmem>>, vector<1x1x512xf32>
    %703 = vector.shape_cast %702 : vector<1x1x512xf32> to vector<1x512xf32>
    %704 = vector.extract_strided_slice %703 {offsets = [0, 384], sizes = [1, 128], strides = [1, 1]} : vector<1x512xf32> to vector<1x128xf32>
    %c0_195 = arith.constant 0 : index
    %c0_196 = arith.constant 0 : index
    %705 = vector.load %arg7[%c0_195, %c0_196] : memref<8x384xf32, #tpu.memory_space<vmem>>, vector<8x384xf32>
    tpu.vector_store %arg7[%c0_195, %c0_196], %699 {strides = array<i32>} : memref<8x384xf32, #tpu.memory_space<vmem>>, vector<8x384xf32>,
    %cst_197 = arith.constant 0.000000e+00 : f32
    %706 = vector.broadcast %cst_197 : f32 to vector<1x128xf32>
    %c0_i32_198 = arith.constant 0 : i32
    %707 = arith.index_cast %c0_i32_198 : i32 to index
    %c0_199 = arith.constant 0 : index
    %708 = vector.load %arg7[%707, %c0_199] : memref<8x384xf32, #tpu.memory_space<vmem>>, vector<1x384xf32>
    %709 = arith.truncf %706 : vector<1x128xf32> to vector<1x128xbf16>
    %cst_200 = arith.constant dense<0.000000e+00> : vector<1x384xf32>
    %710 = tpu.matmul %709, %701, %cst_200 {dimension_numbers = #tpu.dot_dimension_numbers<[1], [0], [0], [1], [0, 0, 1, 1], [], []>} : vector<1x128xbf16>, vector<128x384xbf16>, vector<1x384xf32> -> vector<1x384xf32>
    %711 = vector.extract_strided_slice %708 {offsets = [0, 0], sizes = [1, 256], strides = [1, 1]} : vector<1x384xf32> to vector<1x256xf32>
    %712 = vector.extract_strided_slice %710 {offsets = [0, 0], sizes = [1, 256], strides = [1, 1]} : vector<1x384xf32> to vector<1x256xf32>
    %713 = arith.addf %711, %712 : vector<1x256xf32>
    %714 = arith.negf %713 : vector<1x256xf32>
    %715 = math.exp %714 : vector<1x256xf32>
    %cst_201 = arith.constant 1.000000e+00 : f32
    %716 = vector.broadcast %cst_201 : f32 to vector<1x256xf32>
    %717 = arith.addf %716, %715 : vector<1x256xf32>
    %718 = arith.divf %716, %717 : vector<1x256xf32>
    %719 = vector.extract_strided_slice %718 {offsets = [0, 0], sizes = [1, 128], strides = [1, 1]} : vector<1x256xf32> to vector<1x128xf32>
    %720 = vector.extract_strided_slice %718 {offsets = [0, 128], sizes = [1, 128], strides = [1, 1]} : vector<1x256xf32> to vector<1x128xf32>
    %721 = vector.extract_strided_slice %708 {offsets = [0, 256], sizes = [1, 128], strides = [1, 1]} : vector<1x384xf32> to vector<1x128xf32>
    %722 = vector.extract_strided_slice %710 {offsets = [0, 256], sizes = [1, 128], strides = [1, 1]} : vector<1x384xf32> to vector<1x128xf32>
    %723 = arith.addf %722, %704 : vector<1x128xf32>
    %724 = arith.mulf %719, %723 : vector<1x128xf32>
    %725 = arith.addf %721, %724 : vector<1x128xf32>
    %726 = math.tanh %725 : vector<1x128xf32>
    %cst_202 = arith.constant 1.000000e+00 : f32
    %727 = vector.broadcast %cst_202 : f32 to vector<1x128xf32>
    %728 = arith.subf %727, %720 : vector<1x128xf32>
    %729 = arith.mulf %728, %726 : vector<1x128xf32>
    %730 = arith.mulf %720, %706 : vector<1x128xf32>
    %731 = arith.addf %729, %730 : vector<1x128xf32>
    %732 = arith.index_cast %c0_i32_198 : i32 to index
    %c0_203 = arith.constant 0 : index
    %733 = vector.load %arg8[%732, %c0_203] : memref<8x128xf32, #tpu.memory_space<vmem>>, vector<1x128xf32>
    tpu.vector_store %arg8[%732, %c0_203], %731 {strides = array<i32>} : memref<8x128xf32, #tpu.memory_space<vmem>>, vector<1x128xf32>,
    %c1_i32_204 = arith.constant 1 : i32
    %734 = arith.index_cast %c1_i32_204 : i32 to index
    %c0_205 = arith.constant 0 : index
    %735 = vector.load %arg7[%734, %c0_205] : memref<8x384xf32, #tpu.memory_space<vmem>>, vector<1x384xf32>
    %736 = arith.truncf %731 : vector<1x128xf32> to vector<1x128xbf16>
    %cst_206 = arith.constant dense<0.000000e+00> : vector<1x384xf32>
    %737 = tpu.matmul %736, %701, %cst_206 {dimension_numbers = #tpu.dot_dimension_numbers<[1], [0], [0], [1], [0, 0, 1, 1], [], []>} : vector<1x128xbf16>, vector<128x384xbf16>, vector<1x384xf32> -> vector<1x384xf32>
    %738 = vector.extract_strided_slice %735 {offsets = [0, 0], sizes = [1, 256], strides = [1, 1]} : vector<1x384xf32> to vector<1x256xf32>
    %739 = vector.extract_strided_slice %737 {offsets = [0, 0], sizes = [1, 256], strides = [1, 1]} : vector<1x384xf32> to vector<1x256xf32>
    %740 = arith.addf %738, %739 : vector<1x256xf32>
    %741 = arith.negf %740 : vector<1x256xf32>
    %742 = math.exp %741 : vector<1x256xf32>
    %cst_207 = arith.constant 1.000000e+00 : f32
    %743 = vector.broadcast %cst_207 : f32 to vector<1x256xf32>
    %744 = arith.addf %743, %742 : vector<1x256xf32>
    %745 = arith.divf %743, %744 : vector<1x256xf32>
    %746 = vector.extract_strided_slice %745 {offsets = [0, 0], sizes = [1, 128], strides = [1, 1]} : vector<1x256xf32> to vector<1x128xf32>
    %747 = vector.extract_strided_slice %745 {offsets = [0, 128], sizes = [1, 128], strides = [1, 1]} : vector<1x256xf32> to vector<1x128xf32>
    %748 = vector.extract_strided_slice %735 {offsets = [0, 256], sizes = [1, 128], strides = [1, 1]} : vector<1x384xf32> to vector<1x128xf32>
    %749 = vector.extract_strided_slice %737 {offsets = [0, 256], sizes = [1, 128], strides = [1, 1]} : vector<1x384xf32> to vector<1x128xf32>
    %750 = arith.addf %749, %704 : vector<1x128xf32>
    %751 = arith.mulf %746, %750 : vector<1x128xf32>
    %752 = arith.addf %748, %751 : vector<1x128xf32>
    %753 = math.tanh %752 : vector<1x128xf32>
    %cst_208 = arith.constant 1.000000e+00 : f32
    %754 = vector.broadcast %cst_208 : f32 to vector<1x128xf32>
    %755 = arith.subf %754, %747 : vector<1x128xf32>
    %756 = arith.mulf %755, %753 : vector<1x128xf32>
    %757 = arith.mulf %747, %731 : vector<1x128xf32>
    %758 = arith.addf %756, %757 : vector<1x128xf32>
    %759 = arith.index_cast %c1_i32_204 : i32 to index
    %c0_209 = arith.constant 0 : index
    %760 = vector.load %arg8[%759, %c0_209] : memref<8x128xf32, #tpu.memory_space<vmem>>, vector<1x128xf32>
    tpu.vector_store %arg8[%759, %c0_209], %758 {strides = array<i32>} : memref<8x128xf32, #tpu.memory_space<vmem>>, vector<1x128xf32>,
    %c2_i32_210 = arith.constant 2 : i32
    %761 = arith.index_cast %c2_i32_210 : i32 to index
    %c0_211 = arith.constant 0 : index
    %762 = vector.load %arg7[%761, %c0_211] : memref<8x384xf32, #tpu.memory_space<vmem>>, vector<1x384xf32>
    %763 = arith.truncf %758 : vector<1x128xf32> to vector<1x128xbf16>
    %cst_212 = arith.constant dense<0.000000e+00> : vector<1x384xf32>
    %764 = tpu.matmul %763, %701, %cst_212 {dimension_numbers = #tpu.dot_dimension_numbers<[1], [0], [0], [1], [0, 0, 1, 1], [], []>} : vector<1x128xbf16>, vector<128x384xbf16>, vector<1x384xf32> -> vector<1x384xf32>
    %765 = vector.extract_strided_slice %762 {offsets = [0, 0], sizes = [1, 256], strides = [1, 1]} : vector<1x384xf32> to vector<1x256xf32>
    %766 = vector.extract_strided_slice %764 {offsets = [0, 0], sizes = [1, 256], strides = [1, 1]} : vector<1x384xf32> to vector<1x256xf32>
    %767 = arith.addf %765, %766 : vector<1x256xf32>
    %768 = arith.negf %767 : vector<1x256xf32>
    %769 = math.exp %768 : vector<1x256xf32>
    %cst_213 = arith.constant 1.000000e+00 : f32
    %770 = vector.broadcast %cst_213 : f32 to vector<1x256xf32>
    %771 = arith.addf %770, %769 : vector<1x256xf32>
    %772 = arith.divf %770, %771 : vector<1x256xf32>
    %773 = vector.extract_strided_slice %772 {offsets = [0, 0], sizes = [1, 128], strides = [1, 1]} : vector<1x256xf32> to vector<1x128xf32>
    %774 = vector.extract_strided_slice %772 {offsets = [0, 128], sizes = [1, 128], strides = [1, 1]} : vector<1x256xf32> to vector<1x128xf32>
    %775 = vector.extract_strided_slice %762 {offsets = [0, 256], sizes = [1, 128], strides = [1, 1]} : vector<1x384xf32> to vector<1x128xf32>
    %776 = vector.extract_strided_slice %764 {offsets = [0, 256], sizes = [1, 128], strides = [1, 1]} : vector<1x384xf32> to vector<1x128xf32>
    %777 = arith.addf %776, %704 : vector<1x128xf32>
    %778 = arith.mulf %773, %777 : vector<1x128xf32>
    %779 = arith.addf %775, %778 : vector<1x128xf32>
    %780 = math.tanh %779 : vector<1x128xf32>
    %cst_214 = arith.constant 1.000000e+00 : f32
    %781 = vector.broadcast %cst_214 : f32 to vector<1x128xf32>
    %782 = arith.subf %781, %774 : vector<1x128xf32>
    %783 = arith.mulf %782, %780 : vector<1x128xf32>
    %784 = arith.mulf %774, %758 : vector<1x128xf32>
    %785 = arith.addf %783, %784 : vector<1x128xf32>
    %786 = arith.index_cast %c2_i32_210 : i32 to index
    %c0_215 = arith.constant 0 : index
    %787 = vector.load %arg8[%786, %c0_215] : memref<8x128xf32, #tpu.memory_space<vmem>>, vector<1x128xf32>
    tpu.vector_store %arg8[%786, %c0_215], %785 {strides = array<i32>} : memref<8x128xf32, #tpu.memory_space<vmem>>, vector<1x128xf32>,
    %c3_i32_216 = arith.constant 3 : i32
    %788 = arith.index_cast %c3_i32_216 : i32 to index
    %c0_217 = arith.constant 0 : index
    %789 = vector.load %arg7[%788, %c0_217] : memref<8x384xf32, #tpu.memory_space<vmem>>, vector<1x384xf32>
    %790 = arith.truncf %785 : vector<1x128xf32> to vector<1x128xbf16>
    %cst_218 = arith.constant dense<0.000000e+00> : vector<1x384xf32>
    %791 = tpu.matmul %790, %701, %cst_218 {dimension_numbers = #tpu.dot_dimension_numbers<[1], [0], [0], [1], [0, 0, 1, 1], [], []>} : vector<1x128xbf16>, vector<128x384xbf16>, vector<1x384xf32> -> vector<1x384xf32>
    %792 = vector.extract_strided_slice %789 {offsets = [0, 0], sizes = [1, 256], strides = [1, 1]} : vector<1x384xf32> to vector<1x256xf32>
    %793 = vector.extract_strided_slice %791 {offsets = [0, 0], sizes = [1, 256], strides = [1, 1]} : vector<1x384xf32> to vector<1x256xf32>
    %794 = arith.addf %792, %793 : vector<1x256xf32>
    %795 = arith.negf %794 : vector<1x256xf32>
    %796 = math.exp %795 : vector<1x256xf32>
    %cst_219 = arith.constant 1.000000e+00 : f32
    %797 = vector.broadcast %cst_219 : f32 to vector<1x256xf32>
    %798 = arith.addf %797, %796 : vector<1x256xf32>
    %799 = arith.divf %797, %798 : vector<1x256xf32>
    %800 = vector.extract_strided_slice %799 {offsets = [0, 0], sizes = [1, 128], strides = [1, 1]} : vector<1x256xf32> to vector<1x128xf32>
    %801 = vector.extract_strided_slice %799 {offsets = [0, 128], sizes = [1, 128], strides = [1, 1]} : vector<1x256xf32> to vector<1x128xf32>
    %802 = vector.extract_strided_slice %789 {offsets = [0, 256], sizes = [1, 128], strides = [1, 1]} : vector<1x384xf32> to vector<1x128xf32>
    %803 = vector.extract_strided_slice %791 {offsets = [0, 256], sizes = [1, 128], strides = [1, 1]} : vector<1x384xf32> to vector<1x128xf32>
    %804 = arith.addf %803, %704 : vector<1x128xf32>
    %805 = arith.mulf %800, %804 : vector<1x128xf32>
    %806 = arith.addf %802, %805 : vector<1x128xf32>
    %807 = math.tanh %806 : vector<1x128xf32>
    %cst_220 = arith.constant 1.000000e+00 : f32
    %808 = vector.broadcast %cst_220 : f32 to vector<1x128xf32>
    %809 = arith.subf %808, %801 : vector<1x128xf32>
    %810 = arith.mulf %809, %807 : vector<1x128xf32>
    %811 = arith.mulf %801, %785 : vector<1x128xf32>
    %812 = arith.addf %810, %811 : vector<1x128xf32>
    %813 = arith.index_cast %c3_i32_216 : i32 to index
    %c0_221 = arith.constant 0 : index
    %814 = vector.load %arg8[%813, %c0_221] : memref<8x128xf32, #tpu.memory_space<vmem>>, vector<1x128xf32>
    tpu.vector_store %arg8[%813, %c0_221], %812 {strides = array<i32>} : memref<8x128xf32, #tpu.memory_space<vmem>>, vector<1x128xf32>,
    %c4_i32_222 = arith.constant 4 : i32
    %815 = arith.index_cast %c4_i32_222 : i32 to index
    %c0_223 = arith.constant 0 : index
    %816 = vector.load %arg7[%815, %c0_223] : memref<8x384xf32, #tpu.memory_space<vmem>>, vector<1x384xf32>
    %817 = arith.truncf %812 : vector<1x128xf32> to vector<1x128xbf16>
    %cst_224 = arith.constant dense<0.000000e+00> : vector<1x384xf32>
    %818 = tpu.matmul %817, %701, %cst_224 {dimension_numbers = #tpu.dot_dimension_numbers<[1], [0], [0], [1], [0, 0, 1, 1], [], []>} : vector<1x128xbf16>, vector<128x384xbf16>, vector<1x384xf32> -> vector<1x384xf32>
    %819 = vector.extract_strided_slice %816 {offsets = [0, 0], sizes = [1, 256], strides = [1, 1]} : vector<1x384xf32> to vector<1x256xf32>
    %820 = vector.extract_strided_slice %818 {offsets = [0, 0], sizes = [1, 256], strides = [1, 1]} : vector<1x384xf32> to vector<1x256xf32>
    %821 = arith.addf %819, %820 : vector<1x256xf32>
    %822 = arith.negf %821 : vector<1x256xf32>
    %823 = math.exp %822 : vector<1x256xf32>
    %cst_225 = arith.constant 1.000000e+00 : f32
    %824 = vector.broadcast %cst_225 : f32 to vector<1x256xf32>
    %825 = arith.addf %824, %823 : vector<1x256xf32>
    %826 = arith.divf %824, %825 : vector<1x256xf32>
    %827 = vector.extract_strided_slice %826 {offsets = [0, 0], sizes = [1, 128], strides = [1, 1]} : vector<1x256xf32> to vector<1x128xf32>
    %828 = vector.extract_strided_slice %826 {offsets = [0, 128], sizes = [1, 128], strides = [1, 1]} : vector<1x256xf32> to vector<1x128xf32>
    %829 = vector.extract_strided_slice %816 {offsets = [0, 256], sizes = [1, 128], strides = [1, 1]} : vector<1x384xf32> to vector<1x128xf32>
    %830 = vector.extract_strided_slice %818 {offsets = [0, 256], sizes = [1, 128], strides = [1, 1]} : vector<1x384xf32> to vector<1x128xf32>
    %831 = arith.addf %830, %704 : vector<1x128xf32>
    %832 = arith.mulf %827, %831 : vector<1x128xf32>
    %833 = arith.addf %829, %832 : vector<1x128xf32>
    %834 = math.tanh %833 : vector<1x128xf32>
    %cst_226 = arith.constant 1.000000e+00 : f32
    %835 = vector.broadcast %cst_226 : f32 to vector<1x128xf32>
    %836 = arith.subf %835, %828 : vector<1x128xf32>
    %837 = arith.mulf %836, %834 : vector<1x128xf32>
    %838 = arith.mulf %828, %812 : vector<1x128xf32>
    %839 = arith.addf %837, %838 : vector<1x128xf32>
    %840 = arith.index_cast %c4_i32_222 : i32 to index
    %c0_227 = arith.constant 0 : index
    %841 = vector.load %arg8[%840, %c0_227] : memref<8x128xf32, #tpu.memory_space<vmem>>, vector<1x128xf32>
    tpu.vector_store %arg8[%840, %c0_227], %839 {strides = array<i32>} : memref<8x128xf32, #tpu.memory_space<vmem>>, vector<1x128xf32>,
    %c5_i32_228 = arith.constant 5 : i32
    %842 = arith.index_cast %c5_i32_228 : i32 to index
    %c0_229 = arith.constant 0 : index
    %843 = vector.load %arg7[%842, %c0_229] : memref<8x384xf32, #tpu.memory_space<vmem>>, vector<1x384xf32>
    %844 = arith.truncf %839 : vector<1x128xf32> to vector<1x128xbf16>
    %cst_230 = arith.constant dense<0.000000e+00> : vector<1x384xf32>
    %845 = tpu.matmul %844, %701, %cst_230 {dimension_numbers = #tpu.dot_dimension_numbers<[1], [0], [0], [1], [0, 0, 1, 1], [], []>} : vector<1x128xbf16>, vector<128x384xbf16>, vector<1x384xf32> -> vector<1x384xf32>
    %846 = vector.extract_strided_slice %843 {offsets = [0, 0], sizes = [1, 256], strides = [1, 1]} : vector<1x384xf32> to vector<1x256xf32>
    %847 = vector.extract_strided_slice %845 {offsets = [0, 0], sizes = [1, 256], strides = [1, 1]} : vector<1x384xf32> to vector<1x256xf32>
    %848 = arith.addf %846, %847 : vector<1x256xf32>
    %849 = arith.negf %848 : vector<1x256xf32>
    %850 = math.exp %849 : vector<1x256xf32>
    %cst_231 = arith.constant 1.000000e+00 : f32
    %851 = vector.broadcast %cst_231 : f32 to vector<1x256xf32>
    %852 = arith.addf %851, %850 : vector<1x256xf32>
    %853 = arith.divf %851, %852 : vector<1x256xf32>
    %854 = vector.extract_strided_slice %853 {offsets = [0, 0], sizes = [1, 128], strides = [1, 1]} : vector<1x256xf32> to vector<1x128xf32>
    %855 = vector.extract_strided_slice %853 {offsets = [0, 128], sizes = [1, 128], strides = [1, 1]} : vector<1x256xf32> to vector<1x128xf32>
    %856 = vector.extract_strided_slice %843 {offsets = [0, 256], sizes = [1, 128], strides = [1, 1]} : vector<1x384xf32> to vector<1x128xf32>
    %857 = vector.extract_strided_slice %845 {offsets = [0, 256], sizes = [1, 128], strides = [1, 1]} : vector<1x384xf32> to vector<1x128xf32>
    %858 = arith.addf %857, %704 : vector<1x128xf32>
    %859 = arith.mulf %854, %858 : vector<1x128xf32>
    %860 = arith.addf %856, %859 : vector<1x128xf32>
    %861 = math.tanh %860 : vector<1x128xf32>
    %cst_232 = arith.constant 1.000000e+00 : f32
    %862 = vector.broadcast %cst_232 : f32 to vector<1x128xf32>
    %863 = arith.subf %862, %855 : vector<1x128xf32>
    %864 = arith.mulf %863, %861 : vector<1x128xf32>
    %865 = arith.mulf %855, %839 : vector<1x128xf32>
    %866 = arith.addf %864, %865 : vector<1x128xf32>
    %867 = arith.index_cast %c5_i32_228 : i32 to index
    %c0_233 = arith.constant 0 : index
    %868 = vector.load %arg8[%867, %c0_233] : memref<8x128xf32, #tpu.memory_space<vmem>>, vector<1x128xf32>
    tpu.vector_store %arg8[%867, %c0_233], %866 {strides = array<i32>} : memref<8x128xf32, #tpu.memory_space<vmem>>, vector<1x128xf32>,
    %c6_i32_234 = arith.constant 6 : i32
    %869 = arith.index_cast %c6_i32_234 : i32 to index
    %c0_235 = arith.constant 0 : index
    %870 = vector.load %arg7[%869, %c0_235] : memref<8x384xf32, #tpu.memory_space<vmem>>, vector<1x384xf32>
    %871 = arith.truncf %866 : vector<1x128xf32> to vector<1x128xbf16>
    %cst_236 = arith.constant dense<0.000000e+00> : vector<1x384xf32>
    %872 = tpu.matmul %871, %701, %cst_236 {dimension_numbers = #tpu.dot_dimension_numbers<[1], [0], [0], [1], [0, 0, 1, 1], [], []>} : vector<1x128xbf16>, vector<128x384xbf16>, vector<1x384xf32> -> vector<1x384xf32>
    %873 = vector.extract_strided_slice %870 {offsets = [0, 0], sizes = [1, 256], strides = [1, 1]} : vector<1x384xf32> to vector<1x256xf32>
    %874 = vector.extract_strided_slice %872 {offsets = [0, 0], sizes = [1, 256], strides = [1, 1]} : vector<1x384xf32> to vector<1x256xf32>
    %875 = arith.addf %873, %874 : vector<1x256xf32>
    %876 = arith.negf %875 : vector<1x256xf32>
    %877 = math.exp %876 : vector<1x256xf32>
    %cst_237 = arith.constant 1.000000e+00 : f32
    %878 = vector.broadcast %cst_237 : f32 to vector<1x256xf32>
    %879 = arith.addf %878, %877 : vector<1x256xf32>
    %880 = arith.divf %878, %879 : vector<1x256xf32>
    %881 = vector.extract_strided_slice %880 {offsets = [0, 0], sizes = [1, 128], strides = [1, 1]} : vector<1x256xf32> to vector<1x128xf32>
    %882 = vector.extract_strided_slice %880 {offsets = [0, 128], sizes = [1, 128], strides = [1, 1]} : vector<1x256xf32> to vector<1x128xf32>
    %883 = vector.extract_strided_slice %870 {offsets = [0, 256], sizes = [1, 128], strides = [1, 1]} : vector<1x384xf32> to vector<1x128xf32>
    %884 = vector.extract_strided_slice %872 {offsets = [0, 256], sizes = [1, 128], strides = [1, 1]} : vector<1x384xf32> to vector<1x128xf32>
    %885 = arith.addf %884, %704 : vector<1x128xf32>
    %886 = arith.mulf %881, %885 : vector<1x128xf32>
    %887 = arith.addf %883, %886 : vector<1x128xf32>
    %888 = math.tanh %887 : vector<1x128xf32>
    %cst_238 = arith.constant 1.000000e+00 : f32
    %889 = vector.broadcast %cst_238 : f32 to vector<1x128xf32>
    %890 = arith.subf %889, %882 : vector<1x128xf32>
    %891 = arith.mulf %890, %888 : vector<1x128xf32>
    %892 = arith.mulf %882, %866 : vector<1x128xf32>
    %893 = arith.addf %891, %892 : vector<1x128xf32>
    %894 = arith.index_cast %c6_i32_234 : i32 to index
    %c0_239 = arith.constant 0 : index
    %895 = vector.load %arg8[%894, %c0_239] : memref<8x128xf32, #tpu.memory_space<vmem>>, vector<1x128xf32>
    tpu.vector_store %arg8[%894, %c0_239], %893 {strides = array<i32>} : memref<8x128xf32, #tpu.memory_space<vmem>>, vector<1x128xf32>,
    %c7_i32_240 = arith.constant 7 : i32
    %896 = arith.index_cast %c7_i32_240 : i32 to index
    %c0_241 = arith.constant 0 : index
    %897 = vector.load %arg7[%896, %c0_241] : memref<8x384xf32, #tpu.memory_space<vmem>>, vector<1x384xf32>
    %898 = arith.truncf %893 : vector<1x128xf32> to vector<1x128xbf16>
    %cst_242 = arith.constant dense<0.000000e+00> : vector<1x384xf32>
    %899 = tpu.matmul %898, %701, %cst_242 {dimension_numbers = #tpu.dot_dimension_numbers<[1], [0], [0], [1], [0, 0, 1, 1], [], []>} : vector<1x128xbf16>, vector<128x384xbf16>, vector<1x384xf32> -> vector<1x384xf32>
    %900 = vector.extract_strided_slice %897 {offsets = [0, 0], sizes = [1, 256], strides = [1, 1]} : vector<1x384xf32> to vector<1x256xf32>
    %901 = vector.extract_strided_slice %899 {offsets = [0, 0], sizes = [1, 256], strides = [1, 1]} : vector<1x384xf32> to vector<1x256xf32>
    %902 = arith.addf %900, %901 : vector<1x256xf32>
    %903 = arith.negf %902 : vector<1x256xf32>
    %904 = math.exp %903 : vector<1x256xf32>
    %cst_243 = arith.constant 1.000000e+00 : f32
    %905 = vector.broadcast %cst_243 : f32 to vector<1x256xf32>
    %906 = arith.addf %905, %904 : vector<1x256xf32>
    %907 = arith.divf %905, %906 : vector<1x256xf32>
    %908 = vector.extract_strided_slice %907 {offsets = [0, 0], sizes = [1, 128], strides = [1, 1]} : vector<1x256xf32> to vector<1x128xf32>
    %909 = vector.extract_strided_slice %907 {offsets = [0, 128], sizes = [1, 128], strides = [1, 1]} : vector<1x256xf32> to vector<1x128xf32>
    %910 = vector.extract_strided_slice %897 {offsets = [0, 256], sizes = [1, 128], strides = [1, 1]} : vector<1x384xf32> to vector<1x128xf32>
    %911 = vector.extract_strided_slice %899 {offsets = [0, 256], sizes = [1, 128], strides = [1, 1]} : vector<1x384xf32> to vector<1x128xf32>
    %912 = arith.addf %911, %704 : vector<1x128xf32>
    %913 = arith.mulf %908, %912 : vector<1x128xf32>
    %914 = arith.addf %910, %913 : vector<1x128xf32>
    %915 = math.tanh %914 : vector<1x128xf32>
    %cst_244 = arith.constant 1.000000e+00 : f32
    %916 = vector.broadcast %cst_244 : f32 to vector<1x128xf32>
    %917 = arith.subf %916, %909 : vector<1x128xf32>
    %918 = arith.mulf %917, %915 : vector<1x128xf32>
    %919 = arith.mulf %909, %893 : vector<1x128xf32>
    %920 = arith.addf %918, %919 : vector<1x128xf32>
    %921 = arith.index_cast %c7_i32_240 : i32 to index
    %c0_245 = arith.constant 0 : index
    %922 = vector.load %arg8[%921, %c0_245] : memref<8x128xf32, #tpu.memory_space<vmem>>, vector<1x128xf32>
    tpu.vector_store %arg8[%921, %c0_245], %920 {strides = array<i32>} : memref<8x128xf32, #tpu.memory_space<vmem>>, vector<1x128xf32>,
    %c8_i32_246 = arith.constant 8 : i32
    %c0_247 = arith.constant 0 : index
    %c0_248 = arith.constant 0 : index
    %923 = vector.load %arg4[%c0_247, %c0_248] : memref<128x2xf32, #tpu.memory_space<vmem>>, vector<128x2xf32>
    %cst_249 = arith.constant dense<0.000000e+00> : vector<1x2xf32>
    %924 = tpu.matmul %920, %923, %cst_249 {dimension_numbers = #tpu.dot_dimension_numbers<[1], [0], [0], [1], [0, 0, 1, 1], [], []>} : vector<1x128xf32>, vector<128x2xf32>, vector<1x2xf32> -> vector<1x2xf32>
    %c0_250 = arith.constant 0 : index
    %c0_251 = arith.constant 0 : index
    %925 = vector.load %arg5[%c0_250, %c0_251] : memref<1x2xf32, #tpu.memory_space<vmem>>, vector<1x2xf32>
    %926 = arith.addf %924, %925 : vector<1x2xf32>
    %c0_252 = arith.constant 0 : index
    %c0_253 = arith.constant 0 : index
    %927 = vector.load %arg6[%c0_252, %c0_253] : memref<1x2xf32, #tpu.memory_space<vmem>>, vector<1x2xf32>
    tpu.vector_store %arg6[%c0_252, %c0_253], %926 {strides = array<i32>} : memref<1x2xf32, #tpu.memory_space<vmem>>, vector<1x2xf32>,
    return
  }
}

</mosaic_0001>

<llo_original>
// kernel: default_gru_forward.1
$region0: #{default_gru_forward.1}
  #allocation0 [shape = 'u32[]', space=smem, size = 0x4, offset = 0x4, fixed_abs, tag = 'smem constant byte address 0x4 - core index']
  #allocation1 [shape = 'u32[72,128]{1,0:T(1,128)}', space=vmem, size = 0x9000, scoped, tag = 'internal scratch']
  #allocation2 [shape = 'f32[8,384]{1,0:T(8,128)}', space=vmem, size = 0x3000, scoped, tag = 'scratch operand']
  #allocation3 [shape = 'f32[8,128]{1,0:T(8,128)}', space=vmem, size = 0x1000, scoped, tag = 'scratch operand']
  %s0 = inlined_call_operand.vmem [shape: f32[8,384], index: 0, kind: input, shape index: {}]
  %s1 = inlined_call_operand.hbm [shape: bf16[3,128,384], index: 1, kind: input, shape index: {}]
  %s2 = inlined_call_operand.hbm [shape: bf16[4,128,384], index: 2, kind: input, shape index: {}]
  %s3 = inlined_call_operand.vmem [shape: f32[4,1,512], index: 3, kind: input, shape index: {}]
  %s4 = inlined_call_operand.vmem [shape: f32[128,2], index: 4, kind: input, shape index: {}]
  %s5 = inlined_call_operand.vmem [shape: f32[1,2], index: 5, kind: input, shape index: {}]
  %s6 = inlined_call_operand.hbm [shape: f32[1,2], index: 6, kind: output, shape index: {}]
  %s7 = sld [smem:[#allocation0]]
  $region42: #{default_gru_forward.1} parent=0
    _
  %s9 = ssub.s32 1, %s7
  %s10 = scalar_select 0, %s9, %s7
  $region1: #{default_gru_forward.1} parent=0
    #allocation4 [shape = 'u8[294912]{0}', space=vmem, size = 0x48000, scoped, tag = 'input window, operand 1, single buffered']
    #allocation5 [shape = 's32[1]{0}', space=sflag, size = 0x4, scoped, tag = 'scoped memory for default_gru_forward.1']
    #allocation6 [shape = 's32[1]{0}', space=sflag, size = 0x4, scoped, tag = 'scoped memory for default_gru_forward.1']
    #allocation7 [shape = 'u8[393216]{0}', space=vmem, size = 0x60000, scoped, tag = 'input window, operand 2, single buffered']
    #allocation8 [shape = 's32[1]{0}', space=sflag, size = 0x4, scoped, tag = 'scoped memory for default_gru_forward.1']
    #allocation9 [shape = 'u8[512]{0}', space=vmem, size = 0x400, scoped, tag = 'output window, operand 0, single buffered']
    %11 = vsyncpa [#allocation5], 0
    %12 = vsyncpa [#allocation8], 0
    %13 = vsyncpa [#allocation6], 0
    // Predicated region
    $region2: #{default_gru_forward.1} parent=1 // pred_check
      _
    $region3: #{default_gru_forward.1} parent=1 // pred_check_branch
      %15 = sbr.rel (0) target = $region5
    $region4: #{default_gru_forward.1} parent=1 // pred_region
      _
    $region5: #{default_gru_forward.1} parent=1 // pred_fallthru
      _
    // Predicated region
    $region6: #{default_gru_forward.1} parent=1 // pred_check
      _
    $region7: #{default_gru_forward.1} parent=1 // pred_check_branch
      %17 = sbr.rel (0) target = $region9
    $region8: #{default_gru_forward.1} parent=1 // pred_region
      %19 = vsyncadd [#allocation5], 0
      %s20 = sshll.u32 %s1, 4
      %s21 = int_to_ptr.hbm [resolvable:$true] %s20
      %s22 = sshll.u32 [#allocation4], 4
      %s23 = int_to_ptr.vmem [resolvable:$true] %s22
      %28 = dma.hbm_to_vmem [thread:$0]  %s21, 9216, %s23, [#allocation5], 192, 192, 12
    $region9: #{default_gru_forward.1} parent=1 // pred_fallthru
      _
    // Predicated region
    $region10: #{default_gru_forward.1} parent=1 // pred_check
      _
    $region11: #{default_gru_forward.1} parent=1 // pred_check_branch
      %30 = sbr.rel (0) target = $region13
    $region12: #{default_gru_forward.1} parent=1 // pred_region
      %32 = vsyncadd [#allocation8], 0
      %s33 = sshll.u32 %s2, 4
      %s34 = int_to_ptr.hbm [resolvable:$true] %s33
      %s35 = sshll.u32 [#allocation7], 4
      %s36 = int_to_ptr.vmem [resolvable:$true] %s35
      %41 = dma.hbm_to_vmem [thread:$0]  %s34, 12288, %s36, [#allocation8], 192, 192, 12
    $region13: #{default_gru_forward.1} parent=1 // pred_fallthru
      _
    // Predicated region
    $region14: #{default_gru_forward.1} parent=1 // pred_check
      _
    $region15: #{default_gru_forward.1} parent=1 // pred_check_branch
      %43 = sbr.rel (0) target = $region17
    $region16: #{default_gru_forward.1} parent=1 // pred_region
      _
    $region17: #{default_gru_forward.1} parent=1 // pred_fallthru
      _
    // Predicated region
    $region18: #{default_gru_forward.1} parent=1 // pred_check
      _
    $region19: #{default_gru_forward.1} parent=1 // pred_check_branch
      %45 = sbr.rel (0) target = $region21
    $region20: #{default_gru_forward.1} parent=1 // pred_region
      _
    $region21: #{default_gru_forward.1} parent=1 // pred_fallthru
      _
    // Predicated region
    $region22: #{default_gru_forward.1} parent=1 // pred_check
      _
    $region23: #{default_gru_forward.1} parent=1 // pred_check_branch
      %47 = sbr.rel (0) target = $region25
    $region24: #{default_gru_forward.1} parent=1 // pred_region
      _
    $region25: #{default_gru_forward.1} parent=1 // pred_fallthru
      _
    // Predicated region
    $region26: #{default_gru_forward.1} parent=1 // pred_check
      _
    $region27: #{default_gru_forward.1} parent=1 // pred_check_branch
      %49 = sbr.rel (0) target = $region29
    $region28: #{default_gru_forward.1} parent=1 // pred_region
      %51 = dma.done [#allocation5], 9216
    $region29: #{default_gru_forward.1} parent=1 // pred_fallthru
      _
    // Predicated region
    $region30: #{default_gru_forward.1} parent=1 // pred_check
      _
    $region31: #{default_gru_forward.1} parent=1 // pred_check_branch
      %53 = sbr.rel (0) target = $region33
    $region32: #{default_gru_forward.1} parent=1 // pred_region
      %55 = dma.done [#allocation8], 12288
    $region33: #{default_gru_forward.1} parent=1 // pred_fallthru
      _
    %v57 = vld [vmem:[%s0] sm:$0xff]
    %v58 = vld [vmem:[%s0 + $0x8] sm:$0xff]
    %v59 = vld [vmem:[%s0 + $0x10] sm:$0xff]
    %v60 = vld [vmem:[#allocation7] sm:$0xff]
    %v61 = vld [vmem:[#allocation7 + $0x8] sm:$0xf]
    %v62 = vld [vmem:[#allocation7 + $0xc] sm:$0xff]
    %v63 = vld [vmem:[#allocation7 + $0x14] sm:$0xf]
    %v64 = vld [vmem:[#allocation7 + $0x18] sm:$0xff]
    %v65 = vld [vmem:[#allocation7 + $0x20] sm:$0xf]
    %v66 = vld [vmem:[#allocation7 + $0x24] sm:$0xff]
    %v67 = vld [vmem:[#allocation7 + $0x2c] sm:$0xf]
    %v68 = vld [vmem:[#allocation7 + $0x30] sm:$0xff]
    %v69 = vld [vmem:[#allocation7 + $0x38] sm:$0xf]
    %v70 = vld [vmem:[#allocation7 + $0x3c] sm:$0xff]
    %v71 = vld [vmem:[#allocation7 + $0x44] sm:$0xf]
    %v72 = vld [vmem:[#allocation7 + $0x48] sm:$0xff]
    %v73 = vld [vmem:[#allocation7 + $0x50] sm:$0xf]
    %v74 = vld [vmem:[#allocation7 + $0x54] sm:$0xff]
    %v75 = vld [vmem:[#allocation7 + $0x5c] sm:$0xf]
    %v76 = vld [vmem:[#allocation7 + $0x60] sm:$0xff]
    %v77 = vld [vmem:[#allocation7 + $0x68] sm:$0xf]
    %v78 = vld [vmem:[#allocation7 + $0x6c] sm:$0xff]
    %v79 = vld [vmem:[#allocation7 + $0x74] sm:$0xf]
    %v80 = vld [vmem:[#allocation7 + $0x78] sm:$0xff]
    %v81 = vld [vmem:[#allocation7 + $0x80] sm:$0xf]
    %v82 = vld [vmem:[#allocation7 + $0x84] sm:$0xff]
    %v83 = vld [vmem:[#allocation7 + $0x8c] sm:$0xf]
    %v84 = vld [vmem:[#allocation7 + $0x90] sm:$0xff]
    %v85 = vld [vmem:[#allocation7 + $0x98] sm:$0xf]
    %v86 = vld [vmem:[#allocation7 + $0x9c] sm:$0xff]
    %v87 = vld [vmem:[#allocation7 + $0xa4] sm:$0xf]
    %v88 = vld [vmem:[#allocation7 + $0xa8] sm:$0xff]
    %v89 = vld [vmem:[#allocation7 + $0xb0] sm:$0xf]
    %v90 = vld [vmem:[#allocation7 + $0xb4] sm:$0xff]
    %v91 = vld [vmem:[#allocation7 + $0xbc] sm:$0xf]
    %v92 = vld [vmem:[%s3] sm:$0xf]
    %93 = vst [vmem:[#allocation2] sm:$0xff] %v57
    %94 = vst [vmem:[#allocation2 + $0x8] sm:$0xff] %v58
    %95 = vst [vmem:[#allocation2 + $0x10] sm:$0xff] %v59
    %v96 = vld [vmem:[#allocation2] ss:$8 sm:$0x7]
    %v129 = vunpack.c.l.b16 %v60
    %v130 = vunpack.c.h.b16 %v60
    %v131 = vunpack.c.l.b16 %v61
    %v132 = vunpack.c.l.b16 %v62
    %v133 = vunpack.c.h.b16 %v62
    %v134 = vunpack.c.l.b16 %v63
    %v135 = vunpack.c.l.b16 %v64
    %v136 = vunpack.c.h.b16 %v64
    %v137 = vunpack.c.l.b16 %v65
    %v138 = vunpack.c.l.b16 %v66
    %v139 = vunpack.c.h.b16 %v66
    %v140 = vunpack.c.l.b16 %v67
    %v141 = vunpack.c.l.b16 %v68
    %v142 = vunpack.c.h.b16 %v68
    %v143 = vunpack.c.l.b16 %v69
    %v144 = vunpack.c.l.b16 %v70
    %v145 = vunpack.c.h.b16 %v70
    %v146 = vunpack.c.l.b16 %v71
    %v147 = vunpack.c.l.b16 %v72
    %v148 = vunpack.c.h.b16 %v72
    %v149 = vunpack.c.l.b16 %v73
    %v150 = vunpack.c.l.b16 %v74
    %v151 = vunpack.c.h.b16 %v74
    %v152 = vunpack.c.l.b16 %v75
    %v153 = vunpack.c.l.b16 %v76
    %v154 = vunpack.c.h.b16 %v76
    %v155 = vunpack.c.l.b16 %v77
    %v156 = vunpack.c.l.b16 %v78
    %v157 = vunpack.c.h.b16 %v78
    %v158 = vunpack.c.l.b16 %v79
    %v159 = vunpack.c.l.b16 %v80
    %v160 = vunpack.c.h.b16 %v80
    %v161 = vunpack.c.l.b16 %v81
    %v162 = vunpack.c.l.b16 %v82
    %v163 = vunpack.c.h.b16 %v82
    %v164 = vunpack.c.l.b16 %v83
    %v165 = vunpack.c.l.b16 %v84
    %v166 = vunpack.c.h.b16 %v84
    %v167 = vunpack.c.l.b16 %v85
    %v168 = vunpack.c.l.b16 %v86
    %v169 = vunpack.c.h.b16 %v86
    %v170 = vunpack.c.l.b16 %v87
    %v171 = vunpack.c.l.b16 %v88
    %v172 = vunpack.c.h.b16 %v88
    %v173 = vunpack.c.l.b16 %v89
    %v174 = vunpack.c.l.b16 %v90
    %v175 = vunpack.c.h.b16 %v90
    %v176 = vunpack.c.l.b16 %v91
    %v177 = vpack.c.b16 %v132, %v129
    %v178 = vpack.c.b16 %v133, %v130
    %v179 = vpack.c.b16 %v134, %v131
    %v180 = vpack.c.b16 %v138, %v135
    %v181 = vpack.c.b16 %v139, %v136
    %v182 = vpack.c.b16 %v140, %v137
    %v183 = vpack.c.b16 %v144, %v141
    %v184 = vpack.c.b16 %v145, %v142
    %v185 = vpack.c.b16 %v146, %v143
    %v186 = vpack.c.b16 %v150, %v147
    %v187 = vpack.c.b16 %v151, %v148
    %v188 = vpack.c.b16 %v152, %v149
    %v189 = vpack.c.b16 %v156, %v153
    %v190 = vpack.c.b16 %v157, %v154
    %v191 = vpack.c.b16 %v158, %v155
    %v192 = vpack.c.b16 %v162, %v159
    %v193 = vpack.c.b16 %v163, %v160
    %v194 = vpack.c.b16 %v164, %v161
    %v195 = vpack.c.b16 %v168, %v165
    %v196 = vpack.c.b16 %v169, %v166
    %v197 = vpack.c.b16 %v170, %v167
    %v198 = vpack.c.b16 %v174, %v171
    %v199 = vpack.c.b16 %v175, %v172
    %v200 = vpack.c.b16 %v176, %v173
    %225 = vmatpush.bf16.msra.mxu0 %v198
    %226 = vmatpush.bf16.msra.mxu0 %v195
    %227 = vmatpush.bf16.msra.mxu0 %v192
    %228 = vmatpush.bf16.msra.mxu0 %v189
    %229 = vmatpush.bf16.msra.mxu0 %v186
    %230 = vmatpush.bf16.msra.mxu0 %v183
    %231 = vmatpush.bf16.msra.mxu0 %v180
    %232 = vmatpush.bf16.msra.mxu0 %v177
    %233 = vmatmul.bf16.gmra.mxu0 0
    %v234 = vpop.f32.mrf.mxu0
    %v235 = vadd.f32 0.0, %v234
    %v236 = vpop.f32.mrf.mxu0
    %237 = vdwg.mxu0
    %238 = vmatpush.bf16.msra.mxu0 %v199
    %239 = vmatpush.bf16.msra.mxu0 %v196
    %240 = vmatpush.bf16.msra.mxu0 %v193
    %241 = vmatpush.bf16.msra.mxu0 %v190
    %242 = vmatpush.bf16.msra.mxu0 %v187
    %243 = vmatpush.bf16.msra.mxu0 %v184
    %244 = vmatpush.bf16.msra.mxu0 %v181
    %245 = vmatpush.bf16.msra.mxu0 %v178
    %246 = vmatmul.bf16.gmra.mxu0 0
    %v247 = vpop.f32.mrf.mxu0
    %v248 = vadd.f32 0.0, %v247
    %v249 = vpop.f32.mrf.mxu0
    %250 = vdwg.mxu0
    %251 = vmatpush.bf16.msra.mxu0 %v200
    %252 = vmatpush.bf16.msra.mxu0 %v197
    %253 = vmatpush.bf16.msra.mxu0 %v194
    %254 = vmatpush.bf16.msra.mxu0 %v191
    %255 = vmatpush.bf16.msra.mxu0 %v188
    %256 = vmatpush.bf16.msra.mxu0 %v185
    %257 = vmatpush.bf16.msra.mxu0 %v182
    %258 = vmatpush.bf16.msra.mxu0 %v179
    %259 = vmatmul.bf16.gmra.mxu0 0
    %v260 = vpop.f32.mrf.mxu0
    %v261 = vadd.f32 0.0, %v260
    %v262 = vpop.f32.mrf.mxu0
    %263 = vdwg.mxu0
    %v266 = vrot.slane %v248, 7
    %vm267 = vcmask 1040384
    %v268 = vsel %vm267, %v235, %v266
    %v270 = vadd.f32 %v96, %v268
    %v271 = vxor.u32 %v270, 2147483648
    %v272 = vmul.f32 %v271, 1.442695
    %v273 = vpow.pop %v272
    %v274 = vadd.f32 %v273, 1.0
    %v275 = vrcp.pop %v274
    %v276 = vmul.f32 %v274, %v275
    %v277 = vsub.f32 1.0, %v276
    %v278 = vmul.f32 %v275, %v277
    %v279 = vadd.f32 %v275, %v278
    %vm280 = vweird.f32 %v274
    %vm281 = vweird.f32 %v275
    %vm282 = vmor %vm280, %vm281
    %v283 = vsel %vm282, %v275, %v279
    %v284 = vand.u32 2147483647, %v274
    %vm285 = vcmp.eq.f32.partialorder %v284, 8.507059e+37
    %v286 = vand.u32 %v274, 2147483648
    %v287 = vor.u32 1.1754944e-38, %v286
    %v288 = vsel %vm285, %v287, %v283
    %v289 = vmul.f32 1.0, %v288
    %v291 = vperm.slane %v92, 3
    %v293 = vadd.f32 %v261, %v291
    %v294 = vmul.f32 %v289, %v293
    %v296 = vrot.slane %v96, 2
    %v298 = vadd.f32 %v296, %v294
    %v299 = vtanh.pop %v298
    %v301 = vrot.slane %v289, 1
    %v303 = vsub.f32 1.0, %v301
    %v304 = vmul.f32 %v303, %v299
    %v305 = vmul.f32 %v301, 0.0
    %v306 = vadd.f32 %v304, %v305
    %307 = vst [vmem:[#allocation3] sm:$0x1] %v306
    %s308 = scalar_lea.vmem [#allocation2], 1
    %v309 = vld [vmem:[%s308] ss:$8 sm:$0x7]
    %v310 = vpack.c.bf16 %v306, %v306
    %311 = vmatpush.bf16.msra.mxu0 %v198
    %312 = vmatpush.bf16.msra.mxu0 %v195
    %313 = vmatpush.bf16.msra.mxu0 %v192
    %314 = vmatpush.bf16.msra.mxu0 %v189
    %315 = vmatpush.bf16.msra.mxu0 %v186
    %316 = vmatpush.bf16.msra.mxu0 %v183
    %317 = vmatpush.bf16.msra.mxu0 %v180
    %318 = vmatpush.bf16.msra.mxu0 %v177
    %319 = vmatmul.bf16.gmra.mxu0 %v310
    %v320 = vpop.f32.mrf.mxu0
    %v321 = vadd.f32 0.0, %v320
    %v322 = vpop.f32.mrf.mxu0
    %323 = vdwg.mxu0
    %324 = vmatpush.bf16.msra.mxu0 %v199
    %325 = vmatpush.bf16.msra.mxu0 %v196
    %326 = vmatpush.bf16.msra.mxu0 %v193
    %327 = vmatpush.bf16.msra.mxu0 %v190
    %328 = vmatpush.bf16.msra.mxu0 %v187
    %329 = vmatpush.bf16.msra.mxu0 %v184
    %330 = vmatpush.bf16.msra.mxu0 %v181
    %331 = vmatpush.bf16.msra.mxu0 %v178
    %332 = vmatmul.bf16.gmra.mxu0 %v310
    %v333 = vpop.f32.mrf.mxu0
    %v334 = vadd.f32 0.0, %v333
    %v335 = vpop.f32.mrf.mxu0
    %336 = vdwg.mxu0
    %337 = vmatpush.bf16.msra.mxu0 %v200
    %338 = vmatpush.bf16.msra.mxu0 %v197
    %339 = vmatpush.bf16.msra.mxu0 %v194
    %340 = vmatpush.bf16.msra.mxu0 %v191
    %341 = vmatpush.bf16.msra.mxu0 %v188
    %342 = vmatpush.bf16.msra.mxu0 %v185
    %343 = vmatpush.bf16.msra.mxu0 %v182
    %344 = vmatpush.bf16.msra.mxu0 %v179
    %345 = vmatmul.bf16.gmra.mxu0 %v310
    %v346 = vpop.f32.mrf.mxu0
    %v347 = vadd.f32 0.0, %v346
    %v348 = vpop.f32.mrf.mxu0
    %349 = vdwg.mxu0
    %v352 = vrot.slane %v334, 7
    %v353 = vsel %vm267, %v321, %v352
    %v355 = vadd.f32 %v309, %v353
    %v356 = vxor.u32 %v355, 2147483648
    %v357 = vmul.f32 %v356, 1.442695
    %v358 = vpow.pop %v357
    %v359 = vadd.f32 %v358, 1.0
    %v360 = vrcp.pop %v359
    %v361 = vmul.f32 %v359, %v360
    %v362 = vsub.f32 1.0, %v361
    %v363 = vmul.f32 %v360, %v362
    %v364 = vadd.f32 %v360, %v363
    %vm365 = vweird.f32 %v359
    %vm366 = vweird.f32 %v360
    %vm367 = vmor %vm365, %vm366
    %v368 = vsel %vm367, %v360, %v364
    %v369 = vand.u32 2147483647, %v359
    %vm370 = vcmp.eq.f32.partialorder %v369, 8.507059e+37
    %v371 = vand.u32 %v359, 2147483648
    %v372 = vor.u32 1.1754944e-38, %v371
    %v373 = vsel %vm370, %v372, %v368
    %v374 = vmul.f32 1.0, %v373
    %v375 = vadd.f32 %v347, %v291
    %v376 = vmul.f32 %v374, %v375
    %v378 = vrot.slane %v309, 2
    %v380 = vadd.f32 %v378, %v376
    %v381 = vtanh.pop %v380
    %v383 = vrot.slane %v374, 1
    %v385 = vsub.f32 1.0, %v383
    %v386 = vmul.f32 %v385, %v381
    %v387 = vmul.f32 %v383, %v306
    %v388 = vadd.f32 %v386, %v387
    %389 = vst [vmem:[#allocation3 + $0x1] sm:$0x1] %v388
    %s390 = scalar_lea.vmem [#allocation2], 2
    %v391 = vld [vmem:[%s390] ss:$8 sm:$0x7]
    %v392 = vpack.c.bf16 %v388, %v388
    %393 = vmatpush.bf16.msra.mxu0 %v198
    %394 = vmatpush.bf16.msra.mxu0 %v195
    %395 = vmatpush.bf16.msra.mxu0 %v192
    %396 = vmatpush.bf16.msra.mxu0 %v189
    %397 = vmatpush.bf16.msra.mxu0 %v186
    %398 = vmatpush.bf16.msra.mxu0 %v183
    %399 = vmatpush.bf16.msra.mxu0 %v180
    %400 = vmatpush.bf16.msra.mxu0 %v177
    %401 = vmatmul.bf16.gmra.mxu0 %v392
    %v402 = vpop.f32.mrf.mxu0
    %v403 = vadd.f32 0.0, %v402
    %v404 = vpop.f32.mrf.mxu0
    %405 = vdwg.mxu0
    %406 = vmatpush.bf16.msra.mxu0 %v199
    %407 = vmatpush.bf16.msra.mxu0 %v196
    %408 = vmatpush.bf16.msra.mxu0 %v193
    %409 = vmatpush.bf16.msra.mxu0 %v190
    %410 = vmatpush.bf16.msra.mxu0 %v187
    %411 = vmatpush.bf16.msra.mxu0 %v184
    %412 = vmatpush.bf16.msra.mxu0 %v181
    %413 = vmatpush.bf16.msra.mxu0 %v178
    %414 = vmatmul.bf16.gmra.mxu0 %v392
    %v415 = vpop.f32.mrf.mxu0
    %v416 = vadd.f32 0.0, %v415
    %v417 = vpop.f32.mrf.mxu0
    %418 = vdwg.mxu0
    %419 = vmatpush.bf16.msra.mxu0 %v200
    %420 = vmatpush.bf16.msra.mxu0 %v197
    %421 = vmatpush.bf16.msra.mxu0 %v194
    %422 = vmatpush.bf16.msra.mxu0 %v191
    %423 = vmatpush.bf16.msra.mxu0 %v188
    %424 = vmatpush.bf16.msra.mxu0 %v185
    %425 = vmatpush.bf16.msra.mxu0 %v182
    %426 = vmatpush.bf16.msra.mxu0 %v179
    %427 = vmatmul.bf16.gmra.mxu0 %v392
    %v428 = vpop.f32.mrf.mxu0
    %v429 = vadd.f32 0.0, %v428
    %v430 = vpop.f32.mrf.mxu0
    %431 = vdwg.mxu0
    %v434 = vrot.slane %v416, 7
    %v435 = vsel %vm267, %v403, %v434
    %v437 = vadd.f32 %v391, %v435
    %v438 = vxor.u32 %v437, 2147483648
    %v439 = vmul.f32 %v438, 1.442695
    %v440 = vpow.pop %v439
    %v441 = vadd.f32 %v440, 1.0
    %v442 = vrcp.pop %v441
    %v443 = vmul.f32 %v441, %v442
    %v444 = vsub.f32 1.0, %v443
    %v445 = vmul.f32 %v442, %v444
    %v446 = vadd.f32 %v442, %v445
    %vm447 = vweird.f32 %v441
    %vm448 = vweird.f32 %v442
    %vm449 = vmor %vm447, %vm448
    %v450 = vsel %vm449, %v442, %v446
    %v451 = vand.u32 2147483647, %v441
    %vm452 = vcmp.eq.f32.partialorder %v451, 8.507059e+37
    %v453 = vand.u32 %v441, 2147483648
    %v454 = vor.u32 1.1754944e-38, %v453
    %v455 = vsel %vm452, %v454, %v450
    %v456 = vmul.f32 1.0, %v455
    %v457 = vadd.f32 %v429, %v291
    %v458 = vmul.f32 %v456, %v457
    %v460 = vrot.slane %v391, 2
    %v462 = vadd.f32 %v460, %v458
    %v463 = vtanh.pop %v462
    %v465 = vrot.slane %v456, 1
    %v467 = vsub.f32 1.0, %v465
    %v468 = vmul.f32 %v467, %v463
    %v469 = vmul.f32 %v465, %v388
    %v470 = vadd.f32 %v468, %v469
    %471 = vst [vmem:[#allocation3 + $0x2] sm:$0x1] %v470
    %s472 = scalar_lea.vmem [#allocation2], 3
    %v473 = vld [vmem:[%s472] ss:$8 sm:$0x7]
    %v474 = vpack.c.bf16 %v470, %v470
    %475 = vmatpush.bf16.msra.mxu0 %v198
    %476 = vmatpush.bf16.msra.mxu0 %v195
    %477 = vmatpush.bf16.msra.mxu0 %v192
    %478 = vmatpush.bf16.msra.mxu0 %v189
    %479 = vmatpush.bf16.msra.mxu0 %v186
    %480 = vmatpush.bf16.msra.mxu0 %v183
    %481 = vmatpush.bf16.msra.mxu0 %v180
    %482 = vmatpush.bf16.msra.mxu0 %v177
    %483 = vmatmul.bf16.gmra.mxu0 %v474
    %v484 = vpop.f32.mrf.mxu0
    %v485 = vadd.f32 0.0, %v484
    %v486 = vpop.f32.mrf.mxu0
    %487 = vdwg.mxu0
    %488 = vmatpush.bf16.msra.mxu0 %v199
    %489 = vmatpush.bf16.msra.mxu0 %v196
    %490 = vmatpush.bf16.msra.mxu0 %v193
    %491 = vmatpush.bf16.msra.mxu0 %v190
    %492 = vmatpush.bf16.msra.mxu0 %v187
    %493 = vmatpush.bf16.msra.mxu0 %v184
    %494 = vmatpush.bf16.msra.mxu0 %v181
    %495 = vmatpush.bf16.msra.mxu0 %v178
    %496 = vmatmul.bf16.gmra.mxu0 %v474
    %v497 = vpop.f32.mrf.mxu0
    %v498 = vadd.f32 0.0, %v497
    %v499 = vpop.f32.mrf.mxu0
    %500 = vdwg.mxu0
    %501 = vmatpush.bf16.msra.mxu0 %v200
    %502 = vmatpush.bf16.msra.mxu0 %v197
    %503 = vmatpush.bf16.msra.mxu0 %v194
    %504 = vmatpush.bf16.msra.mxu0 %v191
    %505 = vmatpush.bf16.msra.mxu0 %v188
    %506 = vmatpush.bf16.msra.mxu0 %v185
    %507 = vmatpush.bf16.msra.mxu0 %v182
    %508 = vmatpush.bf16.msra.mxu0 %v179
    %509 = vmatmul.bf16.gmra.mxu0 %v474
    %v510 = vpop.f32.mrf.mxu0
    %v511 = vadd.f32 0.0, %v510
    %v512 = vpop.f32.mrf.mxu0
    %513 = vdwg.mxu0
    %v516 = vrot.slane %v498, 7
    %v517 = vsel %vm267, %v485, %v516
    %v519 = vadd.f32 %v473, %v517
    %v520 = vxor.u32 %v519, 2147483648
    %v521 = vmul.f32 %v520, 1.442695
    %v522 = vpow.pop %v521
    %v523 = vadd.f32 %v522, 1.0
    %v524 = vrcp.pop %v523
    %v525 = vmul.f32 %v523, %v524
    %v526 = vsub.f32 1.0, %v525
    %v527 = vmul.f32 %v524, %v526
    %v528 = vadd.f32 %v524, %v527
    %vm529 = vweird.f32 %v523
    %vm530 = vweird.f32 %v524
    %vm531 = vmor %vm529, %vm530
    %v532 = vsel %vm531, %v524, %v528
    %v533 = vand.u32 2147483647, %v523
    %vm534 = vcmp.eq.f32.partialorder %v533, 8.507059e+37
    %v535 = vand.u32 %v523, 2147483648
    %v536 = vor.u32 1.1754944e-38, %v535
    %v537 = vsel %vm534, %v536, %v532
    %v538 = vmul.f32 1.0, %v537
    %v539 = vadd.f32 %v511, %v291
    %v540 = vmul.f32 %v538, %v539
    %v542 = vrot.slane %v473, 2
    %v544 = vadd.f32 %v542, %v540
    %v545 = vtanh.pop %v544
    %v547 = vrot.slane %v538, 1
    %v549 = vsub.f32 1.0, %v547
    %v550 = vmul.f32 %v549, %v545
    %v551 = vmul.f32 %v547, %v470
    %v552 = vadd.f32 %v550, %v551
    %553 = vst [vmem:[#allocation3 + $0x3] sm:$0x1] %v552
    %s554 = scalar_lea.vmem [#allocation2], 4
    %v555 = vld [vmem:[%s554] ss:$8 sm:$0x7]
    %v556 = vpack.c.bf16 %v552, %v552
    %557 = vmatpush.bf16.msra.mxu0 %v198
    %558 = vmatpush.bf16.msra.mxu0 %v195
    %559 = vmatpush.bf16.msra.mxu0 %v192
    %560 = vmatpush.bf16.msra.mxu0 %v189
    %561 = vmatpush.bf16.msra.mxu0 %v186
    %562 = vmatpush.bf16.msra.mxu0 %v183
    %563 = vmatpush.bf16.msra.mxu0 %v180
    %564 = vmatpush.bf16.msra.mxu0 %v177
    %565 = vmatmul.bf16.gmra.mxu0 %v556
    %v566 = vpop.f32.mrf.mxu0
    %v567 = vadd.f32 0.0, %v566
    %v568 = vpop.f32.mrf.mxu0
    %569 = vdwg.mxu0
    %570 = vmatpush.bf16.msra.mxu0 %v199
    %571 = vmatpush.bf16.msra.mxu0 %v196
    %572 = vmatpush.bf16.msra.mxu0 %v193
    %573 = vmatpush.bf16.msra.mxu0 %v190
    %574 = vmatpush.bf16.msra.mxu0 %v187
    %575 = vmatpush.bf16.msra.mxu0 %v184
    %576 = vmatpush.bf16.msra.mxu0 %v181
    %577 = vmatpush.bf16.msra.mxu0 %v178
    %578 = vmatmul.bf16.gmra.mxu0 %v556
    %v579 = vpop.f32.mrf.mxu0
    %v580 = vadd.f32 0.0, %v579
    %v581 = vpop.f32.mrf.mxu0
    %582 = vdwg.mxu0
    %583 = vmatpush.bf16.msra.mxu0 %v200
    %584 = vmatpush.bf16.msra.mxu0 %v197
    %585 = vmatpush.bf16.msra.mxu0 %v194
    %586 = vmatpush.bf16.msra.mxu0 %v191
    %587 = vmatpush.bf16.msra.mxu0 %v188
    %588 = vmatpush.bf16.msra.mxu0 %v185
    %589 = vmatpush.bf16.msra.mxu0 %v182
    %590 = vmatpush.bf16.msra.mxu0 %v179
    %591 = vmatmul.bf16.gmra.mxu0 %v556
    %v592 = vpop.f32.mrf.mxu0
    %v593 = vadd.f32 0.0, %v592
    %v594 = vpop.f32.mrf.mxu0
    %595 = vdwg.mxu0
    %v598 = vrot.slane %v580, 7
    %v599 = vsel %vm267, %v567, %v598
    %v601 = vadd.f32 %v555, %v599
    %v602 = vxor.u32 %v601, 2147483648
    %v603 = vmul.f32 %v602, 1.442695
    %v604 = vpow.pop %v603
    %v605 = vadd.f32 %v604, 1.0
    %v606 = vrcp.pop %v605
    %v607 = vmul.f32 %v605, %v606
    %v608 = vsub.f32 1.0, %v607
    %v609 = vmul.f32 %v606, %v608
    %v610 = vadd.f32 %v606, %v609
    %vm611 = vweird.f32 %v605
    %vm612 = vweird.f32 %v606
    %vm613 = vmor %vm611, %vm612
    %v614 = vsel %vm613, %v606, %v610
    %v615 = vand.u32 2147483647, %v605
    %vm616 = vcmp.eq.f32.partialorder %v615, 8.507059e+37
    %v617 = vand.u32 %v605, 2147483648
    %v618 = vor.u32 1.1754944e-38, %v617
    %v619 = vsel %vm616, %v618, %v614
    %v620 = vmul.f32 1.0, %v619
    %v621 = vadd.f32 %v593, %v291
    %v622 = vmul.f32 %v620, %v621
    %v624 = vrot.slane %v555, 2
    %v626 = vadd.f32 %v624, %v622
    %v627 = vtanh.pop %v626
    %v629 = vrot.slane %v620, 1
    %v631 = vsub.f32 1.0, %v629
    %v632 = vmul.f32 %v631, %v627
    %v633 = vmul.f32 %v629, %v552
    %v634 = vadd.f32 %v632, %v633
    %635 = vst [vmem:[#allocation3 + $0x4] sm:$0x1] %v634
    %s636 = scalar_lea.vmem [#allocation2], 5
    %v637 = vld [vmem:[%s636] ss:$8 sm:$0x7]
    %v638 = vpack.c.bf16 %v634, %v634
    %639 = vmatpush.bf16.msra.mxu0 %v198
    %640 = vmatpush.bf16.msra.mxu0 %v195
    %641 = vmatpush.bf16.msra.mxu0 %v192
    %642 = vmatpush.bf16.msra.mxu0 %v189
    %643 = vmatpush.bf16.msra.mxu0 %v186
    %644 = vmatpush.bf16.msra.mxu0 %v183
    %645 = vmatpush.bf16.msra.mxu0 %v180
    %646 = vmatpush.bf16.msra.mxu0 %v177
    %647 = vmatmul.bf16.gmra.mxu0 %v638
    %v648 = vpop.f32.mrf.mxu0
    %v649 = vadd.f32 0.0, %v648
    %v650 = vpop.f32.mrf.mxu0
    %651 = vdwg.mxu0
    %652 = vmatpush.bf16.msra.mxu0 %v199
    %653 = vmatpush.bf16.msra.mxu0 %v196
    %654 = vmatpush.bf16.msra.mxu0 %v193
    %655 = vmatpush.bf16.msra.mxu0 %v190
    %656 = vmatpush.bf16.msra.mxu0 %v187
    %657 = vmatpush.bf16.msra.mxu0 %v184
    %658 = vmatpush.bf16.msra.mxu0 %v181
    %659 = vmatpush.bf16.msra.mxu0 %v178
    %660 = vmatmul.bf16.gmra.mxu0 %v638
    %v661 = vpop.f32.mrf.mxu0
    %v662 = vadd.f32 0.0, %v661
    %v663 = vpop.f32.mrf.mxu0
    %664 = vdwg.mxu0
    %665 = vmatpush.bf16.msra.mxu0 %v200
    %666 = vmatpush.bf16.msra.mxu0 %v197
    %667 = vmatpush.bf16.msra.mxu0 %v194
    %668 = vmatpush.bf16.msra.mxu0 %v191
    %669 = vmatpush.bf16.msra.mxu0 %v188
    %670 = vmatpush.bf16.msra.mxu0 %v185
    %671 = vmatpush.bf16.msra.mxu0 %v182
    %672 = vmatpush.bf16.msra.mxu0 %v179
    %673 = vmatmul.bf16.gmra.mxu0 %v638
    %v674 = vpop.f32.mrf.mxu0
    %v675 = vadd.f32 0.0, %v674
    %v676 = vpop.f32.mrf.mxu0
    %677 = vdwg.mxu0
    %v680 = vrot.slane %v662, 7
    %v681 = vsel %vm267, %v649, %v680
    %v683 = vadd.f32 %v637, %v681
    %v684 = vxor.u32 %v683, 2147483648
    %v685 = vmul.f32 %v684, 1.442695
    %v686 = vpow.pop %v685
    %v687 = vadd.f32 %v686, 1.0
    %v688 = vrcp.pop %v687
    %v689 = vmul.f32 %v687, %v688
    %v690 = vsub.f32 1.0, %v689
    %v691 = vmul.f32 %v688, %v690
    %v692 = vadd.f32 %v688, %v691
    %vm693 = vweird.f32 %v687
    %vm694 = vweird.f32 %v688
    %vm695 = vmor %vm693, %vm694
    %v696 = vsel %vm695, %v688, %v692
    %v697 = vand.u32 2147483647, %v687
    %vm698 = vcmp.eq.f32.partialorder %v697, 8.507059e+37
    %v699 = vand.u32 %v687, 2147483648
    %v700 = vor.u32 1.1754944e-38, %v699
    %v701 = vsel %vm698, %v700, %v696
    %v702 = vmul.f32 1.0, %v701
    %v703 = vadd.f32 %v675, %v291
    %v704 = vmul.f32 %v702, %v703
    %v706 = vrot.slane %v637, 2
    %v708 = vadd.f32 %v706, %v704
    %v709 = vtanh.pop %v708
    %v711 = vrot.slane %v702, 1
    %v713 = vsub.f32 1.0, %v711
    %v714 = vmul.f32 %v713, %v709
    %v715 = vmul.f32 %v711, %v634
    %v716 = vadd.f32 %v714, %v715
    %717 = vst [vmem:[#allocation3 + $0x5] sm:$0x1] %v716
    %s718 = scalar_lea.vmem [#allocation2], 6
    %v719 = vld [vmem:[%s718] ss:$8 sm:$0x7]
    %v720 = vpack.c.bf16 %v716, %v716
    %721 = vmatpush.bf16.msra.mxu0 %v198
    %722 = vmatpush.bf16.msra.mxu0 %v195
    %723 = vmatpush.bf16.msra.mxu0 %v192
    %724 = vmatpush.bf16.msra.mxu0 %v189
    %725 = vmatpush.bf16.msra.mxu0 %v186
    %726 = vmatpush.bf16.msra.mxu0 %v183
    %727 = vmatpush.bf16.msra.mxu0 %v180
    %728 = vmatpush.bf16.msra.mxu0 %v177
    %729 = vmatmul.bf16.gmra.mxu0 %v720
    %v730 = vpop.f32.mrf.mxu0
    %v731 = vadd.f32 0.0, %v730
    %v732 = vpop.f32.mrf.mxu0
    %733 = vdwg.mxu0
    %734 = vmatpush.bf16.msra.mxu0 %v199
    %735 = vmatpush.bf16.msra.mxu0 %v196
    %736 = vmatpush.bf16.msra.mxu0 %v193
    %737 = vmatpush.bf16.msra.mxu0 %v190
    %738 = vmatpush.bf16.msra.mxu0 %v187
    %739 = vmatpush.bf16.msra.mxu0 %v184
    %740 = vmatpush.bf16.msra.mxu0 %v181
    %741 = vmatpush.bf16.msra.mxu0 %v178
    %742 = vmatmul.bf16.gmra.mxu0 %v720
    %v743 = vpop.f32.mrf.mxu0
    %v744 = vadd.f32 0.0, %v743
    %v745 = vpop.f32.mrf.mxu0
    %746 = vdwg.mxu0
    %747 = vmatpush.bf16.msra.mxu0 %v200
    %748 = vmatpush.bf16.msra.mxu0 %v197
    %749 = vmatpush.bf16.msra.mxu0 %v194
    %750 = vmatpush.bf16.msra.mxu0 %v191
    %751 = vmatpush.bf16.msra.mxu0 %v188
    %752 = vmatpush.bf16.msra.mxu0 %v185
    %753 = vmatpush.bf16.msra.mxu0 %v182
    %754 = vmatpush.bf16.msra.mxu0 %v179
    %755 = vmatmul.bf16.gmra.mxu0 %v720
    %v756 = vpop.f32.mrf.mxu0
    %v757 = vadd.f32 0.0, %v756
    %v758 = vpop.f32.mrf.mxu0
    %759 = vdwg.mxu0
    %v762 = vrot.slane %v744, 7
    %v763 = vsel %vm267, %v731, %v762
    %v765 = vadd.f32 %v719, %v763
    %v766 = vxor.u32 %v765, 2147483648
    %v767 = vmul.f32 %v766, 1.442695
    %v768 = vpow.pop %v767
    %v769 = vadd.f32 %v768, 1.0
    %v770 = vrcp.pop %v769
    %v771 = vmul.f32 %v769, %v770
    %v772 = vsub.f32 1.0, %v771
    %v773 = vmul.f32 %v770, %v772
    %v774 = vadd.f32 %v770, %v773
    %vm775 = vweird.f32 %v769
    %vm776 = vweird.f32 %v770
    %vm777 = vmor %vm775, %vm776
    %v778 = vsel %vm777, %v770, %v774
    %v779 = vand.u32 2147483647, %v769
    %vm780 = vcmp.eq.f32.partialorder %v779, 8.507059e+37
    %v781 = vand.u32 %v769, 2147483648
    %v782 = vor.u32 1.1754944e-38, %v781
    %v783 = vsel %vm780, %v782, %v778
    %v784 = vmul.f32 1.0, %v783
    %v785 = vadd.f32 %v757, %v291
    %v786 = vmul.f32 %v784, %v785
    %v788 = vrot.slane %v719, 2
    %v790 = vadd.f32 %v788, %v786
    %v791 = vtanh.pop %v790
    %v793 = vrot.slane %v784, 1
    %v795 = vsub.f32 1.0, %v793
    %v796 = vmul.f32 %v795, %v791
    %v797 = vmul.f32 %v793, %v716
    %v798 = vadd.f32 %v796, %v797
    %799 = vst [vmem:[#allocation3 + $0x6] sm:$0x1] %v798
    %s800 = scalar_lea.vmem [#allocation2], 7
    %v801 = vld [vmem:[%s800] ss:$8 sm:$0x7]
    %v802 = vpack.c.bf16 %v798, %v798
    %803 = vmatpush.bf16.msra.mxu0 %v198
    %804 = vmatpush.bf16.msra.mxu0 %v195
    %805 = vmatpush.bf16.msra.mxu0 %v192
    %806 = vmatpush.bf16.msra.mxu0 %v189
    %807 = vmatpush.bf16.msra.mxu0 %v186
    %808 = vmatpush.bf16.msra.mxu0 %v183
    %809 = vmatpush.bf16.msra.mxu0 %v180
    %810 = vmatpush.bf16.msra.mxu0 %v177
    %811 = vmatmul.bf16.gmra.mxu0 %v802
    %v812 = vpop.f32.mrf.mxu0
    %v813 = vadd.f32 0.0, %v812
    %v814 = vpop.f32.mrf.mxu0
    %815 = vdwg.mxu0
    %816 = vmatpush.bf16.msra.mxu0 %v199
    %817 = vmatpush.bf16.msra.mxu0 %v196
    %818 = vmatpush.bf16.msra.mxu0 %v193
    %819 = vmatpush.bf16.msra.mxu0 %v190
    %820 = vmatpush.bf16.msra.mxu0 %v187
    %821 = vmatpush.bf16.msra.mxu0 %v184
    %822 = vmatpush.bf16.msra.mxu0 %v181
    %823 = vmatpush.bf16.msra.mxu0 %v178
    %824 = vmatmul.bf16.gmra.mxu0 %v802
    %v825 = vpop.f32.mrf.mxu0
    %v826 = vadd.f32 0.0, %v825
    %v827 = vpop.f32.mrf.mxu0
    %828 = vdwg.mxu0
    %829 = vmatpush.bf16.msra.mxu0 %v200
    %830 = vmatpush.bf16.msra.mxu0 %v197
    %831 = vmatpush.bf16.msra.mxu0 %v194
    %832 = vmatpush.bf16.msra.mxu0 %v191
    %833 = vmatpush.bf16.msra.mxu0 %v188
    %834 = vmatpush.bf16.msra.mxu0 %v185
    %835 = vmatpush.bf16.msra.mxu0 %v182
    %836 = vmatpush.bf16.msra.mxu0 %v179
    %837 = vmatmul.bf16.gmra.mxu0 %v802
    %v838 = vpop.f32.mrf.mxu0
    %v839 = vadd.f32 0.0, %v838
    %v840 = vpop.f32.mrf.mxu0
    %841 = vdwg.mxu0
    %v844 = vrot.slane %v826, 7
    %v845 = vsel %vm267, %v813, %v844
    %v847 = vadd.f32 %v801, %v845
    %v848 = vxor.u32 %v847, 2147483648
    %v849 = vmul.f32 %v848, 1.442695
    %v850 = vpow.pop %v849
    %v851 = vadd.f32 %v850, 1.0
    %v852 = vrcp.pop %v851
    %v853 = vmul.f32 %v851, %v852
    %v854 = vsub.f32 1.0, %v853
    %v855 = vmul.f32 %v852, %v854
    %v856 = vadd.f32 %v852, %v855
    %vm857 = vweird.f32 %v851
    %vm858 = vweird.f32 %v852
    %vm859 = vmor %vm857, %vm858
    %v860 = vsel %vm859, %v852, %v856
    %v861 = vand.u32 2147483647, %v851
    %vm862 = vcmp.eq.f32.partialorder %v861, 8.507059e+37
    %v863 = vand.u32 %v851, 2147483648
    %v864 = vor.u32 1.1754944e-38, %v863
    %v865 = vsel %vm862, %v864, %v860
    %v866 = vmul.f32 1.0, %v865
    %v867 = vadd.f32 %v839, %v291
    %v868 = vmul.f32 %v866, %v867
    %v870 = vrot.slane %v801, 2
    %v872 = vadd.f32 %v870, %v868
    %v873 = vtanh.pop %v872
    %v875 = vrot.slane %v866, 1
    %v877 = vsub.f32 1.0, %v875
    %v878 = vmul.f32 %v877, %v873
    %v879 = vmul.f32 %v875, %v798
    %v880 = vadd.f32 %v878, %v879
    %881 = vst [vmem:[#allocation3 + $0x7] sm:$0x1] %v880
    %s882 = scalar_lea.vmem %s3, 4
    %v883 = vld [vmem:[%s882] sm:$0xf]
    %v884 = vld [vmem:[#allocation3] sm:$0xff]
    %v885 = vpack.c.bf16 %v884, %v884
    %v886 = vld [vmem:[#allocation4] sm:$0xff]
    %v887 = vld [vmem:[#allocation4 + $0x8] sm:$0xf]
    %v888 = vld [vmem:[#allocation4 + $0xc] sm:$0xff]
    %v889 = vld [vmem:[#allocation4 + $0x14] sm:$0xf]
    %v890 = vld [vmem:[#allocation4 + $0x18] sm:$0xff]
    %v891 = vld [vmem:[#allocation4 + $0x20] sm:$0xf]
    %v892 = vld [vmem:[#allocation4 + $0x24] sm:$0xff]
    %v893 = vld [vmem:[#allocation4 + $0x2c] sm:$0xf]
    %v894 = vld [vmem:[#allocation4 + $0x30] sm:$0xff]
    %v895 = vld [vmem:[#allocation4 + $0x38] sm:$0xf]
    %v896 = vld [vmem:[#allocation4 + $0x3c] sm:$0xff]
    %v897 = vld [vmem:[#allocation4 + $0x44] sm:$0xf]
    %v898 = vld [vmem:[#allocation4 + $0x48] sm:$0xff]
    %v899 = vld [vmem:[#allocation4 + $0x50] sm:$0xf]
    %v900 = vld [vmem:[#allocation4 + $0x54] sm:$0xff]
    %v901 = vld [vmem:[#allocation4 + $0x5c] sm:$0xf]
    %v902 = vld [vmem:[#allocation4 + $0x60] sm:$0xff]
    %v903 = vld [vmem:[#allocation4 + $0x68] sm:$0xf]
    %v904 = vld [vmem:[#allocation4 + $0x6c] sm:$0xff]
    %v905 = vld [vmem:[#allocation4 + $0x74] sm:$0xf]
    %v906 = vld [vmem:[#allocation4 + $0x78] sm:$0xff]
    %v907 = vld [vmem:[#allocation4 + $0x80] sm:$0xf]
    %v908 = vld [vmem:[#allocation4 + $0x84] sm:$0xff]
    %v909 = vld [vmem:[#allocation4 + $0x8c] sm:$0xf]
    %v910 = vld [vmem:[#allocation4 + $0x90] sm:$0xff]
    %v911 = vld [vmem:[#allocation4 + $0x98] sm:$0xf]
    %v912 = vld [vmem:[#allocation4 + $0x9c] sm:$0xff]
    %v913 = vld [vmem:[#allocation4 + $0xa4] sm:$0xf]
    %v914 = vld [vmem:[#allocation4 + $0xa8] sm:$0xff]
    %v915 = vld [vmem:[#allocation4 + $0xb0] sm:$0xf]
    %v916 = vld [vmem:[#allocation4 + $0xb4] sm:$0xff]
    %v917 = vld [vmem:[#allocation4 + $0xbc] sm:$0xf]
    %v919 = vperm.slane %v883, 0
    %v920 = vperm.slane %v883, 1
    %v921 = vperm.slane %v883, 2
    %v957 = vunpack.c.l.b16 %v886
    %v958 = vunpack.c.h.b16 %v886
    %v959 = vunpack.c.l.b16 %v887
    %v960 = vunpack.c.l.b16 %v888
    %v961 = vunpack.c.h.b16 %v888
    %v962 = vunpack.c.l.b16 %v889
    %v963 = vunpack.c.l.b16 %v890
    %v964 = vunpack.c.h.b16 %v890
    %v965 = vunpack.c.l.b16 %v891
    %v966 = vunpack.c.l.b16 %v892
    %v967 = vunpack.c.h.b16 %v892
    %v968 = vunpack.c.l.b16 %v893
    %v969 = vunpack.c.l.b16 %v894
    %v970 = vunpack.c.h.b16 %v894
    %v971 = vunpack.c.l.b16 %v895
    %v972 = vunpack.c.l.b16 %v896
    %v973 = vunpack.c.h.b16 %v896
    %v974 = vunpack.c.l.b16 %v897
    %v975 = vunpack.c.l.b16 %v898
    %v976 = vunpack.c.h.b16 %v898
    %v977 = vunpack.c.l.b16 %v899
    %v978 = vunpack.c.l.b16 %v900
    %v979 = vunpack.c.h.b16 %v900
    %v980 = vunpack.c.l.b16 %v901
    %v981 = vunpack.c.l.b16 %v902
    %v982 = vunpack.c.h.b16 %v902
    %v983 = vunpack.c.l.b16 %v903
    %v984 = vunpack.c.l.b16 %v904
    %v985 = vunpack.c.h.b16 %v904
    %v986 = vunpack.c.l.b16 %v905
    %v987 = vunpack.c.l.b16 %v906
    %v988 = vunpack.c.h.b16 %v906
    %v989 = vunpack.c.l.b16 %v907
    %v990 = vunpack.c.l.b16 %v908
    %v991 = vunpack.c.h.b16 %v908
    %v992 = vunpack.c.l.b16 %v909
    %v993 = vunpack.c.l.b16 %v910
    %v994 = vunpack.c.h.b16 %v910
    %v995 = vunpack.c.l.b16 %v911
    %v996 = vunpack.c.l.b16 %v912
    %v997 = vunpack.c.h.b16 %v912
    %v998 = vunpack.c.l.b16 %v913
    %v999 = vunpack.c.l.b16 %v914
    %v1000 = vunpack.c.h.b16 %v914
    %v1001 = vunpack.c.l.b16 %v915
    %v1002 = vunpack.c.l.b16 %v916
    %v1003 = vunpack.c.h.b16 %v916
    %v1004 = vunpack.c.l.b16 %v917
    %v1005 = vpack.c.b16 %v960, %v957
    %v1006 = vpack.c.b16 %v961, %v958
    %v1007 = vpack.c.b16 %v962, %v959
    %v1008 = vpack.c.b16 %v966, %v963
    %v1009 = vpack.c.b16 %v967, %v964
    %v1010 = vpack.c.b16 %v968, %v965
    %v1011 = vpack.c.b16 %v972, %v969
    %v1012 = vpack.c.b16 %v973, %v970
    %v1013 = vpack.c.b16 %v974, %v971
    %v1014 = vpack.c.b16 %v978, %v975
    %v1015 = vpack.c.b16 %v979, %v976
    %v1016 = vpack.c.b16 %v980, %v977
    %v1017 = vpack.c.b16 %v984, %v981
    %v1018 = vpack.c.b16 %v985, %v982
    %v1019 = vpack.c.b16 %v986, %v983
    %v1020 = vpack.c.b16 %v990, %v987
    %v1021 = vpack.c.b16 %v991, %v988
    %v1022 = vpack.c.b16 %v992, %v989
    %v1023 = vpack.c.b16 %v996, %v993
    %v1024 = vpack.c.b16 %v997, %v994
    %v1025 = vpack.c.b16 %v998, %v995
    %v1026 = vpack.c.b16 %v1002, %v999
    %v1027 = vpack.c.b16 %v1003, %v1000
    %v1028 = vpack.c.b16 %v1004, %v1001
    %1053 = vmatpush.bf16.msra.mxu0 %v1026
    %1054 = vmatpush.bf16.msra.mxu0 %v1023
    %1055 = vmatpush.bf16.msra.mxu0 %v1020
    %1056 = vmatpush.bf16.msra.mxu0 %v1017
    %1057 = vmatpush.bf16.msra.mxu0 %v1014
    %1058 = vmatpush.bf16.msra.mxu0 %v1011
    %1059 = vmatpush.bf16.msra.mxu0 %v1008
    %1060 = vmatpush.bf16.msra.mxu0 %v1005
    %1061 = vmatmul.bf16.gmra.mxu0 %v885
    %v1062 = vpop.f32.mrf.mxu0
    %v1063 = vadd.f32 %v919, %v1062
    %v1064 = vpop.f32.mrf.mxu0
    %1065 = vdwg.mxu0
    %1066 = vmatpush.bf16.msra.mxu0 %v1027
    %1067 = vmatpush.bf16.msra.mxu0 %v1024
    %1068 = vmatpush.bf16.msra.mxu0 %v1021
    %1069 = vmatpush.bf16.msra.mxu0 %v1018
    %1070 = vmatpush.bf16.msra.mxu0 %v1015
    %1071 = vmatpush.bf16.msra.mxu0 %v1012
    %1072 = vmatpush.bf16.msra.mxu0 %v1009
    %1073 = vmatpush.bf16.msra.mxu0 %v1006
    %1074 = vmatmul.bf16.gmra.mxu0 %v885
    %v1075 = vpop.f32.mrf.mxu0
    %v1076 = vadd.f32 %v920, %v1075
    %v1077 = vpop.f32.mrf.mxu0
    %1078 = vdwg.mxu0
    %1079 = vmatpush.bf16.msra.mxu0 %v1028
    %1080 = vmatpush.bf16.msra.mxu0 %v1025
    %1081 = vmatpush.bf16.msra.mxu0 %v1022
    %1082 = vmatpush.bf16.msra.mxu0 %v1019
    %1083 = vmatpush.bf16.msra.mxu0 %v1016
    %1084 = vmatpush.bf16.msra.mxu0 %v1013
    %1085 = vmatpush.bf16.msra.mxu0 %v1010
    %1086 = vmatpush.bf16.msra.mxu0 %v1007
    %1087 = vmatmul.bf16.gmra.mxu0 %v885
    %v1088 = vpop.f32.mrf.mxu0
    %v1089 = vadd.f32 %v921, %v1088
    %v1090 = vpop.f32.mrf.mxu0
    %1091 = vdwg.mxu0
    %s1092 = scalar_lea.vmem [#allocation7], 192
    %v1093 = vld [vmem:[%s1092] sm:$0xff]
    %v1094 = vld [vmem:[%s1092 + $0x8] sm:$0xf]
    %v1095 = vld [vmem:[%s1092 + $0xc] sm:$0xff]
    %v1096 = vld [vmem:[%s1092 + $0x14] sm:$0xf]
    %v1097 = vld [vmem:[%s1092 + $0x18] sm:$0xff]
    %v1098 = vld [vmem:[%s1092 + $0x20] sm:$0xf]
    %v1099 = vld [vmem:[%s1092 + $0x24] sm:$0xff]
    %v1100 = vld [vmem:[%s1092 + $0x2c] sm:$0xf]
    %v1101 = vld [vmem:[%s1092 + $0x30] sm:$0xff]
    %v1102 = vld [vmem:[%s1092 + $0x38] sm:$0xf]
    %v1103 = vld [vmem:[%s1092 + $0x3c] sm:$0xff]
    %v1104 = vld [vmem:[%s1092 + $0x44] sm:$0xf]
    %v1105 = vld [vmem:[%s1092 + $0x48] sm:$0xff]
    %v1106 = vld [vmem:[%s1092 + $0x50] sm:$0xf]
    %v1107 = vld [vmem:[%s1092 + $0x54] sm:$0xff]
    %v1108 = vld [vmem:[%s1092 + $0x5c] sm:$0xf]
    %v1109 = vld [vmem:[%s1092 + $0x60] sm:$0xff]
    %v1110 = vld [vmem:[%s1092 + $0x68] sm:$0xf]
    %v1111 = vld [vmem:[%s1092 + $0x6c] sm:$0xff]
    %v1112 = vld [vmem:[%s1092 + $0x74] sm:$0xf]
    %v1113 = vld [vmem:[%s1092 + $0x78] sm:$0xff]
    %v1114 = vld [vmem:[%s1092 + $0x80] sm:$0xf]
    %v1115 = vld [vmem:[%s1092 + $0x84] sm:$0xff]
    %v1116 = vld [vmem:[%s1092 + $0x8c] sm:$0xf]
    %v1117 = vld [vmem:[%s1092 + $0x90] sm:$0xff]
    %v1118 = vld [vmem:[%s1092 + $0x98] sm:$0xf]
    %v1119 = vld [vmem:[%s1092 + $0x9c] sm:$0xff]
    %v1120 = vld [vmem:[%s1092 + $0xa4] sm:$0xf]
    %v1121 = vld [vmem:[%s1092 + $0xa8] sm:$0xff]
    %v1122 = vld [vmem:[%s1092 + $0xb0] sm:$0xf]
    %v1123 = vld [vmem:[%s1092 + $0xb4] sm:$0xff]
    %v1124 = vld [vmem:[%s1092 + $0xbc] sm:$0xf]
    %1125 = vst [vmem:[#allocation2] sm:$0xff] %v1063
    %1126 = vst [vmem:[#allocation2 + $0x8] sm:$0xff] %v1076
    %1127 = vst [vmem:[#allocation2 + $0x10] sm:$0xff] %v1089
    %v1128 = vld [vmem:[#allocation2] ss:$8 sm:$0x7]
    %v1161 = vunpack.c.l.b16 %v1093
    %v1162 = vunpack.c.h.b16 %v1093
    %v1163 = vunpack.c.l.b16 %v1094
    %v1164 = vunpack.c.l.b16 %v1095
    %v1165 = vunpack.c.h.b16 %v1095
    %v1166 = vunpack.c.l.b16 %v1096
    %v1167 = vunpack.c.l.b16 %v1097
    %v1168 = vunpack.c.h.b16 %v1097
    %v1169 = vunpack.c.l.b16 %v1098
    %v1170 = vunpack.c.l.b16 %v1099
    %v1171 = vunpack.c.h.b16 %v1099
    %v1172 = vunpack.c.l.b16 %v1100
    %v1173 = vunpack.c.l.b16 %v1101
    %v1174 = vunpack.c.h.b16 %v1101
    %v1175 = vunpack.c.l.b16 %v1102
    %v1176 = vunpack.c.l.b16 %v1103
    %v1177 = vunpack.c.h.b16 %v1103
    %v1178 = vunpack.c.l.b16 %v1104
    %v1179 = vunpack.c.l.b16 %v1105
    %v1180 = vunpack.c.h.b16 %v1105
    %v1181 = vunpack.c.l.b16 %v1106
    %v1182 = vunpack.c.l.b16 %v1107
    %v1183 = vunpack.c.h.b16 %v1107
    %v1184 = vunpack.c.l.b16 %v1108
    %v1185 = vunpack.c.l.b16 %v1109
    %v1186 = vunpack.c.h.b16 %v1109
    %v1187 = vunpack.c.l.b16 %v1110
    %v1188 = vunpack.c.l.b16 %v1111
    %v1189 = vunpack.c.h.b16 %v1111
    %v1190 = vunpack.c.l.b16 %v1112
    %v1191 = vunpack.c.l.b16 %v1113
    %v1192 = vunpack.c.h.b16 %v1113
    %v1193 = vunpack.c.l.b16 %v1114
    %v1194 = vunpack.c.l.b16 %v1115
    %v1195 = vunpack.c.h.b16 %v1115
    %v1196 = vunpack.c.l.b16 %v1116
    %v1197 = vunpack.c.l.b16 %v1117
    %v1198 = vunpack.c.h.b16 %v1117
    %v1199 = vunpack.c.l.b16 %v1118
    %v1200 = vunpack.c.l.b16 %v1119
    %v1201 = vunpack.c.h.b16 %v1119
    %v1202 = vunpack.c.l.b16 %v1120
    %v1203 = vunpack.c.l.b16 %v1121
    %v1204 = vunpack.c.h.b16 %v1121
    %v1205 = vunpack.c.l.b16 %v1122
    %v1206 = vunpack.c.l.b16 %v1123
    %v1207 = vunpack.c.h.b16 %v1123
    %v1208 = vunpack.c.l.b16 %v1124
    %v1209 = vpack.c.b16 %v1164, %v1161
    %v1210 = vpack.c.b16 %v1165, %v1162
    %v1211 = vpack.c.b16 %v1166, %v1163
    %v1212 = vpack.c.b16 %v1170, %v1167
    %v1213 = vpack.c.b16 %v1171, %v1168
    %v1214 = vpack.c.b16 %v1172, %v1169
    %v1215 = vpack.c.b16 %v1176, %v1173
    %v1216 = vpack.c.b16 %v1177, %v1174
    %v1217 = vpack.c.b16 %v1178, %v1175
    %v1218 = vpack.c.b16 %v1182, %v1179
    %v1219 = vpack.c.b16 %v1183, %v1180
    %v1220 = vpack.c.b16 %v1184, %v1181
    %v1221 = vpack.c.b16 %v1188, %v1185
    %v1222 = vpack.c.b16 %v1189, %v1186
    %v1223 = vpack.c.b16 %v1190, %v1187
    %v1224 = vpack.c.b16 %v1194, %v1191
    %v1225 = vpack.c.b16 %v1195, %v1192
    %v1226 = vpack.c.b16 %v1196, %v1193
    %v1227 = vpack.c.b16 %v1200, %v1197
    %v1228 = vpack.c.b16 %v1201, %v1198
    %v1229 = vpack.c.b16 %v1202, %v1199
    %v1230 = vpack.c.b16 %v1206, %v1203
    %v1231 = vpack.c.b16 %v1207, %v1204
    %v1232 = vpack.c.b16 %v1208, %v1205
    %1257 = vmatpush.bf16.msra.mxu0 %v1230
    %1258 = vmatpush.bf16.msra.mxu0 %v1227
    %1259 = vmatpush.bf16.msra.mxu0 %v1224
    %1260 = vmatpush.bf16.msra.mxu0 %v1221
    %1261 = vmatpush.bf16.msra.mxu0 %v1218
    %1262 = vmatpush.bf16.msra.mxu0 %v1215
    %1263 = vmatpush.bf16.msra.mxu0 %v1212
    %1264 = vmatpush.bf16.msra.mxu0 %v1209
    %1265 = vmatmul.bf16.gmra.mxu0 0
    %v1266 = vpop.f32.mrf.mxu0
    %v1267 = vadd.f32 0.0, %v1266
    %v1268 = vpop.f32.mrf.mxu0
    %1269 = vdwg.mxu0
    %1270 = vmatpush.bf16.msra.mxu0 %v1231
    %1271 = vmatpush.bf16.msra.mxu0 %v1228
    %1272 = vmatpush.bf16.msra.mxu0 %v1225
    %1273 = vmatpush.bf16.msra.mxu0 %v1222
    %1274 = vmatpush.bf16.msra.mxu0 %v1219
    %1275 = vmatpush.bf16.msra.mxu0 %v1216
    %1276 = vmatpush.bf16.msra.mxu0 %v1213
    %1277 = vmatpush.bf16.msra.mxu0 %v1210
    %1278 = vmatmul.bf16.gmra.mxu0 0
    %v1279 = vpop.f32.mrf.mxu0
    %v1280 = vadd.f32 0.0, %v1279
    %v1281 = vpop.f32.mrf.mxu0
    %1282 = vdwg.mxu0
    %1283 = vmatpush.bf16.msra.mxu0 %v1232
    %1284 = vmatpush.bf16.msra.mxu0 %v1229
    %1285 = vmatpush.bf16.msra.mxu0 %v1226
    %1286 = vmatpush.bf16.msra.mxu0 %v1223
    %1287 = vmatpush.bf16.msra.mxu0 %v1220
    %1288 = vmatpush.bf16.msra.mxu0 %v1217
    %1289 = vmatpush.bf16.msra.mxu0 %v1214
    %1290 = vmatpush.bf16.msra.mxu0 %v1211
    %1291 = vmatmul.bf16.gmra.mxu0 0
    %v1292 = vpop.f32.mrf.mxu0
    %v1293 = vadd.f32 0.0, %v1292
    %v1294 = vpop.f32.mrf.mxu0
    %1295 = vdwg.mxu0
    %v1298 = vrot.slane %v1280, 7
    %v1299 = vsel %vm267, %v1267, %v1298
    %v1301 = vadd.f32 %v1128, %v1299
    %v1302 = vxor.u32 %v1301, 2147483648
    %v1303 = vmul.f32 %v1302, 1.442695
    %v1304 = vpow.pop %v1303
    %v1305 = vadd.f32 %v1304, 1.0
    %v1306 = vrcp.pop %v1305
    %v1307 = vmul.f32 %v1305, %v1306
    %v1308 = vsub.f32 1.0, %v1307
    %v1309 = vmul.f32 %v1306, %v1308
    %v1310 = vadd.f32 %v1306, %v1309
    %vm1311 = vweird.f32 %v1305
    %vm1312 = vweird.f32 %v1306
    %vm1313 = vmor %vm1311, %vm1312
    %v1314 = vsel %vm1313, %v1306, %v1310
    %v1315 = vand.u32 2147483647, %v1305
    %vm1316 = vcmp.eq.f32.partialorder %v1315, 8.507059e+37
    %v1317 = vand.u32 %v1305, 2147483648
    %v1318 = vor.u32 1.1754944e-38, %v1317
    %v1319 = vsel %vm1316, %v1318, %v1314
    %v1320 = vmul.f32 1.0, %v1319
    %v1321 = vperm.slane %v883, 3
    %v1323 = vadd.f32 %v1293, %v1321
    %v1324 = vmul.f32 %v1320, %v1323
    %v1326 = vrot.slane %v1128, 2
    %v1328 = vadd.f32 %v1326, %v1324
    %v1329 = vtanh.pop %v1328
    %v1331 = vrot.slane %v1320, 1
    %v1333 = vsub.f32 1.0, %v1331
    %v1334 = vmul.f32 %v1333, %v1329
    %v1335 = vmul.f32 %v1331, 0.0
    %v1336 = vadd.f32 %v1334, %v1335
    %1337 = vst [vmem:[#allocation3] sm:$0x1] %v1336
    %v1338 = vld [vmem:[%s308] ss:$8 sm:$0x7]
    %v1339 = vpack.c.bf16 %v1336, %v1336
    %1340 = vmatpush.bf16.msra.mxu0 %v1230
    %1341 = vmatpush.bf16.msra.mxu0 %v1227
    %1342 = vmatpush.bf16.msra.mxu0 %v1224
    %1343 = vmatpush.bf16.msra.mxu0 %v1221
    %1344 = vmatpush.bf16.msra.mxu0 %v1218
    %1345 = vmatpush.bf16.msra.mxu0 %v1215
    %1346 = vmatpush.bf16.msra.mxu0 %v1212
    %1347 = vmatpush.bf16.msra.mxu0 %v1209
    %1348 = vmatmul.bf16.gmra.mxu0 %v1339
    %v1349 = vpop.f32.mrf.mxu0
    %v1350 = vadd.f32 0.0, %v1349
    %v1351 = vpop.f32.mrf.mxu0
    %1352 = vdwg.mxu0
    %1353 = vmatpush.bf16.msra.mxu0 %v1231
    %1354 = vmatpush.bf16.msra.mxu0 %v1228
    %1355 = vmatpush.bf16.msra.mxu0 %v1225
    %1356 = vmatpush.bf16.msra.mxu0 %v1222
    %1357 = vmatpush.bf16.msra.mxu0 %v1219
    %1358 = vmatpush.bf16.msra.mxu0 %v1216
    %1359 = vmatpush.bf16.msra.mxu0 %v1213
    %1360 = vmatpush.bf16.msra.mxu0 %v1210
    %1361 = vmatmul.bf16.gmra.mxu0 %v1339
    %v1362 = vpop.f32.mrf.mxu0
    %v1363 = vadd.f32 0.0, %v1362
    %v1364 = vpop.f32.mrf.mxu0
    %1365 = vdwg.mxu0
    %1366 = vmatpush.bf16.msra.mxu0 %v1232
    %1367 = vmatpush.bf16.msra.mxu0 %v1229
    %1368 = vmatpush.bf16.msra.mxu0 %v1226
    %1369 = vmatpush.bf16.msra.mxu0 %v1223
    %1370 = vmatpush.bf16.msra.mxu0 %v1220
    %1371 = vmatpush.bf16.msra.mxu0 %v1217
    %1372 = vmatpush.bf16.msra.mxu0 %v1214
    %1373 = vmatpush.bf16.msra.mxu0 %v1211
    %1374 = vmatmul.bf16.gmra.mxu0 %v1339
    %v1375 = vpop.f32.mrf.mxu0
    %v1376 = vadd.f32 0.0, %v1375
    %v1377 = vpop.f32.mrf.mxu0
    %1378 = vdwg.mxu0
    %v1381 = vrot.slane %v1363, 7
    %v1382 = vsel %vm267, %v1350, %v1381
    %v1384 = vadd.f32 %v1338, %v1382
    %v1385 = vxor.u32 %v1384, 2147483648
    %v1386 = vmul.f32 %v1385, 1.442695
    %v1387 = vpow.pop %v1386
    %v1388 = vadd.f32 %v1387, 1.0
    %v1389 = vrcp.pop %v1388
    %v1390 = vmul.f32 %v1388, %v1389
    %v1391 = vsub.f32 1.0, %v1390
    %v1392 = vmul.f32 %v1389, %v1391
    %v1393 = vadd.f32 %v1389, %v1392
    %vm1394 = vweird.f32 %v1388
    %vm1395 = vweird.f32 %v1389
    %vm1396 = vmor %vm1394, %vm1395
    %v1397 = vsel %vm1396, %v1389, %v1393
    %v1398 = vand.u32 2147483647, %v1388
    %vm1399 = vcmp.eq.f32.partialorder %v1398, 8.507059e+37
    %v1400 = vand.u32 %v1388, 2147483648
    %v1401 = vor.u32 1.1754944e-38, %v1400
    %v1402 = vsel %vm1399, %v1401, %v1397
    %v1403 = vmul.f32 1.0, %v1402
    %v1404 = vadd.f32 %v1376, %v1321
    %v1405 = vmul.f32 %v1403, %v1404
    %v1407 = vrot.slane %v1338, 2
    %v1409 = vadd.f32 %v1407, %v1405
    %v1410 = vtanh.pop %v1409
    %v1412 = vrot.slane %v1403, 1
    %v1414 = vsub.f32 1.0, %v1412
    %v1415 = vmul.f32 %v1414, %v1410
    %v1416 = vmul.f32 %v1412, %v1336
    %v1417 = vadd.f32 %v1415, %v1416
    %1418 = vst [vmem:[#allocation3 + $0x1] sm:$0x1] %v1417
    %v1419 = vld [vmem:[%s390] ss:$8 sm:$0x7]
    %v1420 = vpack.c.bf16 %v1417, %v1417
    %1421 = vmatpush.bf16.msra.mxu0 %v1230
    %1422 = vmatpush.bf16.msra.mxu0 %v1227
    %1423 = vmatpush.bf16.msra.mxu0 %v1224
    %1424 = vmatpush.bf16.msra.mxu0 %v1221
    %1425 = vmatpush.bf16.msra.mxu0 %v1218
    %1426 = vmatpush.bf16.msra.mxu0 %v1215
    %1427 = vmatpush.bf16.msra.mxu0 %v1212
    %1428 = vmatpush.bf16.msra.mxu0 %v1209
    %1429 = vmatmul.bf16.gmra.mxu0 %v1420
    %v1430 = vpop.f32.mrf.mxu0
    %v1431 = vadd.f32 0.0, %v1430
    %v1432 = vpop.f32.mrf.mxu0
    %1433 = vdwg.mxu0
    %1434 = vmatpush.bf16.msra.mxu0 %v1231
    %1435 = vmatpush.bf16.msra.mxu0 %v1228
    %1436 = vmatpush.bf16.msra.mxu0 %v1225
    %1437 = vmatpush.bf16.msra.mxu0 %v1222
    %1438 = vmatpush.bf16.msra.mxu0 %v1219
    %1439 = vmatpush.bf16.msra.mxu0 %v1216
    %1440 = vmatpush.bf16.msra.mxu0 %v1213
    %1441 = vmatpush.bf16.msra.mxu0 %v1210
    %1442 = vmatmul.bf16.gmra.mxu0 %v1420
    %v1443 = vpop.f32.mrf.mxu0
    %v1444 = vadd.f32 0.0, %v1443
    %v1445 = vpop.f32.mrf.mxu0
    %1446 = vdwg.mxu0
    %1447 = vmatpush.bf16.msra.mxu0 %v1232
    %1448 = vmatpush.bf16.msra.mxu0 %v1229
    %1449 = vmatpush.bf16.msra.mxu0 %v1226
    %1450 = vmatpush.bf16.msra.mxu0 %v1223
    %1451 = vmatpush.bf16.msra.mxu0 %v1220
    %1452 = vmatpush.bf16.msra.mxu0 %v1217
    %1453 = vmatpush.bf16.msra.mxu0 %v1214
    %1454 = vmatpush.bf16.msra.mxu0 %v1211
    %1455 = vmatmul.bf16.gmra.mxu0 %v1420
    %v1456 = vpop.f32.mrf.mxu0
    %v1457 = vadd.f32 0.0, %v1456
    %v1458 = vpop.f32.mrf.mxu0
    %1459 = vdwg.mxu0
    %v1462 = vrot.slane %v1444, 7
    %v1463 = vsel %vm267, %v1431, %v1462
    %v1465 = vadd.f32 %v1419, %v1463
    %v1466 = vxor.u32 %v1465, 2147483648
    %v1467 = vmul.f32 %v1466, 1.442695
    %v1468 = vpow.pop %v1467
    %v1469 = vadd.f32 %v1468, 1.0
    %v1470 = vrcp.pop %v1469
    %v1471 = vmul.f32 %v1469, %v1470
    %v1472 = vsub.f32 1.0, %v1471
    %v1473 = vmul.f32 %v1470, %v1472
    %v1474 = vadd.f32 %v1470, %v1473
    %vm1475 = vweird.f32 %v1469
    %vm1476 = vweird.f32 %v1470
    %vm1477 = vmor %vm1475, %vm1476
    %v1478 = vsel %vm1477, %v1470, %v1474
    %v1479 = vand.u32 2147483647, %v1469
    %vm1480 = vcmp.eq.f32.partialorder %v1479, 8.507059e+37
    %v1481 = vand.u32 %v1469, 2147483648
    %v1482 = vor.u32 1.1754944e-38, %v1481
    %v1483 = vsel %vm1480, %v1482, %v1478
    %v1484 = vmul.f32 1.0, %v1483
    %v1485 = vadd.f32 %v1457, %v1321
    %v1486 = vmul.f32 %v1484, %v1485
    %v1488 = vrot.slane %v1419, 2
    %v1490 = vadd.f32 %v1488, %v1486
    %v1491 = vtanh.pop %v1490
    %v1493 = vrot.slane %v1484, 1
    %v1495 = vsub.f32 1.0, %v1493
    %v1496 = vmul.f32 %v1495, %v1491
    %v1497 = vmul.f32 %v1493, %v1417
    %v1498 = vadd.f32 %v1496, %v1497
    %1499 = vst [vmem:[#allocation3 + $0x2] sm:$0x1] %v1498
    %v1500 = vld [vmem:[%s472] ss:$8 sm:$0x7]
    %v1501 = vpack.c.bf16 %v1498, %v1498
    %1502 = vmatpush.bf16.msra.mxu0 %v1230
    %1503 = vmatpush.bf16.msra.mxu0 %v1227
    %1504 = vmatpush.bf16.msra.mxu0 %v1224
    %1505 = vmatpush.bf16.msra.mxu0 %v1221
    %1506 = vmatpush.bf16.msra.mxu0 %v1218
    %1507 = vmatpush.bf16.msra.mxu0 %v1215
    %1508 = vmatpush.bf16.msra.mxu0 %v1212
    %1509 = vmatpush.bf16.msra.mxu0 %v1209
    %1510 = vmatmul.bf16.gmra.mxu0 %v1501
    %v1511 = vpop.f32.mrf.mxu0
    %v1512 = vadd.f32 0.0, %v1511
    %v1513 = vpop.f32.mrf.mxu0
    %1514 = vdwg.mxu0
    %1515 = vmatpush.bf16.msra.mxu0 %v1231
    %1516 = vmatpush.bf16.msra.mxu0 %v1228
    %1517 = vmatpush.bf16.msra.mxu0 %v1225
    %1518 = vmatpush.bf16.msra.mxu0 %v1222
    %1519 = vmatpush.bf16.msra.mxu0 %v1219
    %1520 = vmatpush.bf16.msra.mxu0 %v1216
    %1521 = vmatpush.bf16.msra.mxu0 %v1213
    %1522 = vmatpush.bf16.msra.mxu0 %v1210
    %1523 = vmatmul.bf16.gmra.mxu0 %v1501
    %v1524 = vpop.f32.mrf.mxu0
    %v1525 = vadd.f32 0.0, %v1524
    %v1526 = vpop.f32.mrf.mxu0
    %1527 = vdwg.mxu0
    %1528 = vmatpush.bf16.msra.mxu0 %v1232
    %1529 = vmatpush.bf16.msra.mxu0 %v1229
    %1530 = vmatpush.bf16.msra.mxu0 %v1226
    %1531 = vmatpush.bf16.msra.mxu0 %v1223
    %1532 = vmatpush.bf16.msra.mxu0 %v1220
    %1533 = vmatpush.bf16.msra.mxu0 %v1217
    %1534 = vmatpush.bf16.msra.mxu0 %v1214
    %1535 = vmatpush.bf16.msra.mxu0 %v1211
    %1536 = vmatmul.bf16.gmra.mxu0 %v1501
    %v1537 = vpop.f32.mrf.mxu0
    %v1538 = vadd.f32 0.0, %v1537
    %v1539 = vpop.f32.mrf.mxu0
    %1540 = vdwg.mxu0
    %v1543 = vrot.slane %v1525, 7
    %v1544 = vsel %vm267, %v1512, %v1543
    %v1546 = vadd.f32 %v1500, %v1544
    %v1547 = vxor.u32 %v1546, 2147483648
    %v1548 = vmul.f32 %v1547, 1.442695
    %v1549 = vpow.pop %v1548
    %v1550 = vadd.f32 %v1549, 1.0
    %v1551 = vrcp.pop %v1550
    %v1552 = vmul.f32 %v1550, %v1551
    %v1553 = vsub.f32 1.0, %v1552
    %v1554 = vmul.f32 %v1551, %v1553
    %v1555 = vadd.f32 %v1551, %v1554
    %vm1556 = vweird.f32 %v1550
    %vm1557 = vweird.f32 %v1551
    %vm1558 = vmor %vm1556, %vm1557
    %v1559 = vsel %vm1558, %v1551, %v1555
    %v1560 = vand.u32 2147483647, %v1550
    %vm1561 = vcmp.eq.f32.partialorder %v1560, 8.507059e+37
    %v1562 = vand.u32 %v1550, 2147483648
    %v1563 = vor.u32 1.1754944e-38, %v1562
    %v1564 = vsel %vm1561, %v1563, %v1559
    %v1565 = vmul.f32 1.0, %v1564
    %v1566 = vadd.f32 %v1538, %v1321
    %v1567 = vmul.f32 %v1565, %v1566
    %v1569 = vrot.slane %v1500, 2
    %v1571 = vadd.f32 %v1569, %v1567
    %v1572 = vtanh.pop %v1571
    %v1574 = vrot.slane %v1565, 1
    %v1576 = vsub.f32 1.0, %v1574
    %v1577 = vmul.f32 %v1576, %v1572
    %v1578 = vmul.f32 %v1574, %v1498
    %v1579 = vadd.f32 %v1577, %v1578
    %1580 = vst [vmem:[#allocation3 + $0x3] sm:$0x1] %v1579
    %v1581 = vld [vmem:[%s554] ss:$8 sm:$0x7]
    %v1582 = vpack.c.bf16 %v1579, %v1579
    %1583 = vmatpush.bf16.msra.mxu0 %v1230
    %1584 = vmatpush.bf16.msra.mxu0 %v1227
    %1585 = vmatpush.bf16.msra.mxu0 %v1224
    %1586 = vmatpush.bf16.msra.mxu0 %v1221
    %1587 = vmatpush.bf16.msra.mxu0 %v1218
    %1588 = vmatpush.bf16.msra.mxu0 %v1215
    %1589 = vmatpush.bf16.msra.mxu0 %v1212
    %1590 = vmatpush.bf16.msra.mxu0 %v1209
    %1591 = vmatmul.bf16.gmra.mxu0 %v1582
    %v1592 = vpop.f32.mrf.mxu0
    %v1593 = vadd.f32 0.0, %v1592
    %v1594 = vpop.f32.mrf.mxu0
    %1595 = vdwg.mxu0
    %1596 = vmatpush.bf16.msra.mxu0 %v1231
    %1597 = vmatpush.bf16.msra.mxu0 %v1228
    %1598 = vmatpush.bf16.msra.mxu0 %v1225
    %1599 = vmatpush.bf16.msra.mxu0 %v1222
    %1600 = vmatpush.bf16.msra.mxu0 %v1219
    %1601 = vmatpush.bf16.msra.mxu0 %v1216
    %1602 = vmatpush.bf16.msra.mxu0 %v1213
    %1603 = vmatpush.bf16.msra.mxu0 %v1210
    %1604 = vmatmul.bf16.gmra.mxu0 %v1582
    %v1605 = vpop.f32.mrf.mxu0
    %v1606 = vadd.f32 0.0, %v1605
    %v1607 = vpop.f32.mrf.mxu0
    %1608 = vdwg.mxu0
    %1609 = vmatpush.bf16.msra.mxu0 %v1232
    %1610 = vmatpush.bf16.msra.mxu0 %v1229
    %1611 = vmatpush.bf16.msra.mxu0 %v1226
    %1612 = vmatpush.bf16.msra.mxu0 %v1223
    %1613 = vmatpush.bf16.msra.mxu0 %v1220
    %1614 = vmatpush.bf16.msra.mxu0 %v1217
    %1615 = vmatpush.bf16.msra.mxu0 %v1214
    %1616 = vmatpush.bf16.msra.mxu0 %v1211
    %1617 = vmatmul.bf16.gmra.mxu0 %v1582
    %v1618 = vpop.f32.mrf.mxu0
    %v1619 = vadd.f32 0.0, %v1618
    %v1620 = vpop.f32.mrf.mxu0
    %1621 = vdwg.mxu0
    %v1624 = vrot.slane %v1606, 7
    %v1625 = vsel %vm267, %v1593, %v1624
    %v1627 = vadd.f32 %v1581, %v1625
    %v1628 = vxor.u32 %v1627, 2147483648
    %v1629 = vmul.f32 %v1628, 1.442695
    %v1630 = vpow.pop %v1629
    %v1631 = vadd.f32 %v1630, 1.0
    %v1632 = vrcp.pop %v1631
    %v1633 = vmul.f32 %v1631, %v1632
    %v1634 = vsub.f32 1.0, %v1633
    %v1635 = vmul.f32 %v1632, %v1634
    %v1636 = vadd.f32 %v1632, %v1635
    %vm1637 = vweird.f32 %v1631
    %vm1638 = vweird.f32 %v1632
    %vm1639 = vmor %vm1637, %vm1638
    %v1640 = vsel %vm1639, %v1632, %v1636
    %v1641 = vand.u32 2147483647, %v1631
    %vm1642 = vcmp.eq.f32.partialorder %v1641, 8.507059e+37
    %v1643 = vand.u32 %v1631, 2147483648
    %v1644 = vor.u32 1.1754944e-38, %v1643
    %v1645 = vsel %vm1642, %v1644, %v1640
    %v1646 = vmul.f32 1.0, %v1645
    %v1647 = vadd.f32 %v1619, %v1321
    %v1648 = vmul.f32 %v1646, %v1647
    %v1650 = vrot.slane %v1581, 2
    %v1652 = vadd.f32 %v1650, %v1648
    %v1653 = vtanh.pop %v1652
    %v1655 = vrot.slane %v1646, 1
    %v1657 = vsub.f32 1.0, %v1655
    %v1658 = vmul.f32 %v1657, %v1653
    %v1659 = vmul.f32 %v1655, %v1579
    %v1660 = vadd.f32 %v1658, %v1659
    %1661 = vst [vmem:[#allocation3 + $0x4] sm:$0x1] %v1660
    %v1662 = vld [vmem:[%s636] ss:$8 sm:$0x7]
    %v1663 = vpack.c.bf16 %v1660, %v1660
    %1664 = vmatpush.bf16.msra.mxu0 %v1230
    %1665 = vmatpush.bf16.msra.mxu0 %v1227
    %1666 = vmatpush.bf16.msra.mxu0 %v1224
    %1667 = vmatpush.bf16.msra.mxu0 %v1221
    %1668 = vmatpush.bf16.msra.mxu0 %v1218
    %1669 = vmatpush.bf16.msra.mxu0 %v1215
    %1670 = vmatpush.bf16.msra.mxu0 %v1212
    %1671 = vmatpush.bf16.msra.mxu0 %v1209
    %1672 = vmatmul.bf16.gmra.mxu0 %v1663
    %v1673 = vpop.f32.mrf.mxu0
    %v1674 = vadd.f32 0.0, %v1673
    %v1675 = vpop.f32.mrf.mxu0
    %1676 = vdwg.mxu0
    %1677 = vmatpush.bf16.msra.mxu0 %v1231
    %1678 = vmatpush.bf16.msra.mxu0 %v1228
    %1679 = vmatpush.bf16.msra.mxu0 %v1225
    %1680 = vmatpush.bf16.msra.mxu0 %v1222
    %1681 = vmatpush.bf16.msra.mxu0 %v1219
    %1682 = vmatpush.bf16.msra.mxu0 %v1216
    %1683 = vmatpush.bf16.msra.mxu0 %v1213
    %1684 = vmatpush.bf16.msra.mxu0 %v1210
    %1685 = vmatmul.bf16.gmra.mxu0 %v1663
    %v1686 = vpop.f32.mrf.mxu0
    %v1687 = vadd.f32 0.0, %v1686
    %v1688 = vpop.f32.mrf.mxu0
    %1689 = vdwg.mxu0
    %1690 = vmatpush.bf16.msra.mxu0 %v1232
    %1691 = vmatpush.bf16.msra.mxu0 %v1229
    %1692 = vmatpush.bf16.msra.mxu0 %v1226
    %1693 = vmatpush.bf16.msra.mxu0 %v1223
    %1694 = vmatpush.bf16.msra.mxu0 %v1220
    %1695 = vmatpush.bf16.msra.mxu0 %v1217
    %1696 = vmatpush.bf16.msra.mxu0 %v1214
    %1697 = vmatpush.bf16.msra.mxu0 %v1211
    %1698 = vmatmul.bf16.gmra.mxu0 %v1663
    %v1699 = vpop.f32.mrf.mxu0
    %v1700 = vadd.f32 0.0, %v1699
    %v1701 = vpop.f32.mrf.mxu0
    %1702 = vdwg.mxu0
    %v1705 = vrot.slane %v1687, 7
    %v1706 = vsel %vm267, %v1674, %v1705
    %v1708 = vadd.f32 %v1662, %v1706
    %v1709 = vxor.u32 %v1708, 2147483648
    %v1710 = vmul.f32 %v1709, 1.442695
    %v1711 = vpow.pop %v1710
    %v1712 = vadd.f32 %v1711, 1.0
    %v1713 = vrcp.pop %v1712
    %v1714 = vmul.f32 %v1712, %v1713
    %v1715 = vsub.f32 1.0, %v1714
    %v1716 = vmul.f32 %v1713, %v1715
    %v1717 = vadd.f32 %v1713, %v1716
    %vm1718 = vweird.f32 %v1712
    %vm1719 = vweird.f32 %v1713
    %vm1720 = vmor %vm1718, %vm1719
    %v1721 = vsel %vm1720, %v1713, %v1717
    %v1722 = vand.u32 2147483647, %v1712
    %vm1723 = vcmp.eq.f32.partialorder %v1722, 8.507059e+37
    %v1724 = vand.u32 %v1712, 2147483648
    %v1725 = vor.u32 1.1754944e-38, %v1724
    %v1726 = vsel %vm1723, %v1725, %v1721
    %v1727 = vmul.f32 1.0, %v1726
    %v1728 = vadd.f32 %v1700, %v1321
    %v1729 = vmul.f32 %v1727, %v1728
    %v1731 = vrot.slane %v1662, 2
    %v1733 = vadd.f32 %v1731, %v1729
    %v1734 = vtanh.pop %v1733
    %v1736 = vrot.slane %v1727, 1
    %v1738 = vsub.f32 1.0, %v1736
    %v1739 = vmul.f32 %v1738, %v1734
    %v1740 = vmul.f32 %v1736, %v1660
    %v1741 = vadd.f32 %v1739, %v1740
    %1742 = vst [vmem:[#allocation3 + $0x5] sm:$0x1] %v1741
    %v1743 = vld [vmem:[%s718] ss:$8 sm:$0x7]
    %v1744 = vpack.c.bf16 %v1741, %v1741
    %1745 = vmatpush.bf16.msra.mxu0 %v1230
    %1746 = vmatpush.bf16.msra.mxu0 %v1227
    %1747 = vmatpush.bf16.msra.mxu0 %v1224
    %1748 = vmatpush.bf16.msra.mxu0 %v1221
    %1749 = vmatpush.bf16.msra.mxu0 %v1218
    %1750 = vmatpush.bf16.msra.mxu0 %v1215
    %1751 = vmatpush.bf16.msra.mxu0 %v1212
    %1752 = vmatpush.bf16.msra.mxu0 %v1209
    %1753 = vmatmul.bf16.gmra.mxu0 %v1744
    %v1754 = vpop.f32.mrf.mxu0
    %v1755 = vadd.f32 0.0, %v1754
    %v1756 = vpop.f32.mrf.mxu0
    %1757 = vdwg.mxu0
    %1758 = vmatpush.bf16.msra.mxu0 %v1231
    %1759 = vmatpush.bf16.msra.mxu0 %v1228
    %1760 = vmatpush.bf16.msra.mxu0 %v1225
    %1761 = vmatpush.bf16.msra.mxu0 %v1222
    %1762 = vmatpush.bf16.msra.mxu0 %v1219
    %1763 = vmatpush.bf16.msra.mxu0 %v1216
    %1764 = vmatpush.bf16.msra.mxu0 %v1213
    %1765 = vmatpush.bf16.msra.mxu0 %v1210
    %1766 = vmatmul.bf16.gmra.mxu0 %v1744
    %v1767 = vpop.f32.mrf.mxu0
    %v1768 = vadd.f32 0.0, %v1767
    %v1769 = vpop.f32.mrf.mxu0
    %1770 = vdwg.mxu0
    %1771 = vmatpush.bf16.msra.mxu0 %v1232
    %1772 = vmatpush.bf16.msra.mxu0 %v1229
    %1773 = vmatpush.bf16.msra.mxu0 %v1226
    %1774 = vmatpush.bf16.msra.mxu0 %v1223
    %1775 = vmatpush.bf16.msra.mxu0 %v1220
    %1776 = vmatpush.bf16.msra.mxu0 %v1217
    %1777 = vmatpush.bf16.msra.mxu0 %v1214
    %1778 = vmatpush.bf16.msra.mxu0 %v1211
    %1779 = vmatmul.bf16.gmra.mxu0 %v1744
    %v1780 = vpop.f32.mrf.mxu0
    %v1781 = vadd.f32 0.0, %v1780
    %v1782 = vpop.f32.mrf.mxu0
    %1783 = vdwg.mxu0
    %v1786 = vrot.slane %v1768, 7
    %v1787 = vsel %vm267, %v1755, %v1786
    %v1789 = vadd.f32 %v1743, %v1787
    %v1790 = vxor.u32 %v1789, 2147483648
    %v1791 = vmul.f32 %v1790, 1.442695
    %v1792 = vpow.pop %v1791
    %v1793 = vadd.f32 %v1792, 1.0
    %v1794 = vrcp.pop %v1793
    %v1795 = vmul.f32 %v1793, %v1794
    %v1796 = vsub.f32 1.0, %v1795
    %v1797 = vmul.f32 %v1794, %v1796
    %v1798 = vadd.f32 %v1794, %v1797
    %vm1799 = vweird.f32 %v1793
    %vm1800 = vweird.f32 %v1794
    %vm1801 = vmor %vm1799, %vm1800
    %v1802 = vsel %vm1801, %v1794, %v1798
    %v1803 = vand.u32 2147483647, %v1793
    %vm1804 = vcmp.eq.f32.partialorder %v1803, 8.507059e+37
    %v1805 = vand.u32 %v1793, 2147483648
    %v1806 = vor.u32 1.1754944e-38, %v1805
    %v1807 = vsel %vm1804, %v1806, %v1802
    %v1808 = vmul.f32 1.0, %v1807
    %v1809 = vadd.f32 %v1781, %v1321
    %v1810 = vmul.f32 %v1808, %v1809
    %v1812 = vrot.slane %v1743, 2
    %v1814 = vadd.f32 %v1812, %v1810
    %v1815 = vtanh.pop %v1814
    %v1817 = vrot.slane %v1808, 1
    %v1819 = vsub.f32 1.0, %v1817
    %v1820 = vmul.f32 %v1819, %v1815
    %v1821 = vmul.f32 %v1817, %v1741
    %v1822 = vadd.f32 %v1820, %v1821
    %1823 = vst [vmem:[#allocation3 + $0x6] sm:$0x1] %v1822
    %v1824 = vld [vmem:[%s800] ss:$8 sm:$0x7]
    %v1825 = vpack.c.bf16 %v1822, %v1822
    %1826 = vmatpush.bf16.msra.mxu0 %v1230
    %1827 = vmatpush.bf16.msra.mxu0 %v1227
    %1828 = vmatpush.bf16.msra.mxu0 %v1224
    %1829 = vmatpush.bf16.msra.mxu0 %v1221
    %1830 = vmatpush.bf16.msra.mxu0 %v1218
    %1831 = vmatpush.bf16.msra.mxu0 %v1215
    %1832 = vmatpush.bf16.msra.mxu0 %v1212
    %1833 = vmatpush.bf16.msra.mxu0 %v1209
    %1834 = vmatmul.bf16.gmra.mxu0 %v1825
    %v1835 = vpop.f32.mrf.mxu0
    %v1836 = vadd.f32 0.0, %v1835
    %v1837 = vpop.f32.mrf.mxu0
    %1838 = vdwg.mxu0
    %1839 = vmatpush.bf16.msra.mxu0 %v1231
    %1840 = vmatpush.bf16.msra.mxu0 %v1228
    %1841 = vmatpush.bf16.msra.mxu0 %v1225
    %1842 = vmatpush.bf16.msra.mxu0 %v1222
    %1843 = vmatpush.bf16.msra.mxu0 %v1219
    %1844 = vmatpush.bf16.msra.mxu0 %v1216
    %1845 = vmatpush.bf16.msra.mxu0 %v1213
    %1846 = vmatpush.bf16.msra.mxu0 %v1210
    %1847 = vmatmul.bf16.gmra.mxu0 %v1825
    %v1848 = vpop.f32.mrf.mxu0
    %v1849 = vadd.f32 0.0, %v1848
    %v1850 = vpop.f32.mrf.mxu0
    %1851 = vdwg.mxu0
    %1852 = vmatpush.bf16.msra.mxu0 %v1232
    %1853 = vmatpush.bf16.msra.mxu0 %v1229
    %1854 = vmatpush.bf16.msra.mxu0 %v1226
    %1855 = vmatpush.bf16.msra.mxu0 %v1223
    %1856 = vmatpush.bf16.msra.mxu0 %v1220
    %1857 = vmatpush.bf16.msra.mxu0 %v1217
    %1858 = vmatpush.bf16.msra.mxu0 %v1214
    %1859 = vmatpush.bf16.msra.mxu0 %v1211
    %1860 = vmatmul.bf16.gmra.mxu0 %v1825
    %v1861 = vpop.f32.mrf.mxu0
    %v1862 = vadd.f32 0.0, %v1861
    %v1863 = vpop.f32.mrf.mxu0
    %1864 = vdwg.mxu0
    %v1867 = vrot.slane %v1849, 7
    %v1868 = vsel %vm267, %v1836, %v1867
    %v1870 = vadd.f32 %v1824, %v1868
    %v1871 = vxor.u32 %v1870, 2147483648
    %v1872 = vmul.f32 %v1871, 1.442695
    %v1873 = vpow.pop %v1872
    %v1874 = vadd.f32 %v1873, 1.0
    %v1875 = vrcp.pop %v1874
    %v1876 = vmul.f32 %v1874, %v1875
    %v1877 = vsub.f32 1.0, %v1876
    %v1878 = vmul.f32 %v1875, %v1877
    %v1879 = vadd.f32 %v1875, %v1878
    %vm1880 = vweird.f32 %v1874
    %vm1881 = vweird.f32 %v1875
    %vm1882 = vmor %vm1880, %vm1881
    %v1883 = vsel %vm1882, %v1875, %v1879
    %v1884 = vand.u32 2147483647, %v1874
    %vm1885 = vcmp.eq.f32.partialorder %v1884, 8.507059e+37
    %v1886 = vand.u32 %v1874, 2147483648
    %v1887 = vor.u32 1.1754944e-38, %v1886
    %v1888 = vsel %vm1885, %v1887, %v1883
    %v1889 = vmul.f32 1.0, %v1888
    %v1890 = vadd.f32 %v1862, %v1321
    %v1891 = vmul.f32 %v1889, %v1890
    %v1893 = vrot.slane %v1824, 2
    %v1895 = vadd.f32 %v1893, %v1891
    %v1896 = vtanh.pop %v1895
    %v1898 = vrot.slane %v1889, 1
    %v1900 = vsub.f32 1.0, %v1898
    %v1901 = vmul.f32 %v1900, %v1896
    %v1902 = vmul.f32 %v1898, %v1822
    %v1903 = vadd.f32 %v1901, %v1902
    %1904 = vst [vmem:[#allocation3 + $0x7] sm:$0x1] %v1903
    %s1905 = scalar_lea.vmem %s3, 8
    %v1906 = vld [vmem:[%s1905] sm:$0xf]
    %v1907 = vld [vmem:[#allocation3] sm:$0xff]
    %v1908 = vpack.c.bf16 %v1907, %v1907
    %s1909 = scalar_lea.vmem [#allocation4], 192
    %v1910 = vld [vmem:[%s1909] sm:$0xff]
    %v1911 = vld [vmem:[%s1909 + $0x8] sm:$0xf]
    %v1912 = vld [vmem:[%s1909 + $0xc] sm:$0xff]
    %v1913 = vld [vmem:[%s1909 + $0x14] sm:$0xf]
    %v1914 = vld [vmem:[%s1909 + $0x18] sm:$0xff]
    %v1915 = vld [vmem:[%s1909 + $0x20] sm:$0xf]
    %v1916 = vld [vmem:[%s1909 + $0x24] sm:$0xff]
    %v1917 = vld [vmem:[%s1909 + $0x2c] sm:$0xf]
    %v1918 = vld [vmem:[%s1909 + $0x30] sm:$0xff]
    %v1919 = vld [vmem:[%s1909 + $0x38] sm:$0xf]
    %v1920 = vld [vmem:[%s1909 + $0x3c] sm:$0xff]
    %v1921 = vld [vmem:[%s1909 + $0x44] sm:$0xf]
    %v1922 = vld [vmem:[%s1909 + $0x48] sm:$0xff]
    %v1923 = vld [vmem:[%s1909 + $0x50] sm:$0xf]
    %v1924 = vld [vmem:[%s1909 + $0x54] sm:$0xff]
    %v1925 = vld [vmem:[%s1909 + $0x5c] sm:$0xf]
    %v1926 = vld [vmem:[%s1909 + $0x60] sm:$0xff]
    %v1927 = vld [vmem:[%s1909 + $0x68] sm:$0xf]
    %v1928 = vld [vmem:[%s1909 + $0x6c] sm:$0xff]
    %v1929 = vld [vmem:[%s1909 + $0x74] sm:$0xf]
    %v1930 = vld [vmem:[%s1909 + $0x78] sm:$0xff]
    %v1931 = vld [vmem:[%s1909 + $0x80] sm:$0xf]
    %v1932 = vld [vmem:[%s1909 + $0x84] sm:$0xff]
    %v1933 = vld [vmem:[%s1909 + $0x8c] sm:$0xf]
    %v1934 = vld [vmem:[%s1909 + $0x90] sm:$0xff]
    %v1935 = vld [vmem:[%s1909 + $0x98] sm:$0xf]
    %v1936 = vld [vmem:[%s1909 + $0x9c] sm:$0xff]
    %v1937 = vld [vmem:[%s1909 + $0xa4] sm:$0xf]
    %v1938 = vld [vmem:[%s1909 + $0xa8] sm:$0xff]
    %v1939 = vld [vmem:[%s1909 + $0xb0] sm:$0xf]
    %v1940 = vld [vmem:[%s1909 + $0xb4] sm:$0xff]
    %v1941 = vld [vmem:[%s1909 + $0xbc] sm:$0xf]
    %v1943 = vperm.slane %v1906, 0
    %v1944 = vperm.slane %v1906, 1
    %v1945 = vperm.slane %v1906, 2
    %v1981 = vunpack.c.l.b16 %v1910
    %v1982 = vunpack.c.h.b16 %v1910
    %v1983 = vunpack.c.l.b16 %v1911
    %v1984 = vunpack.c.l.b16 %v1912
    %v1985 = vunpack.c.h.b16 %v1912
    %v1986 = vunpack.c.l.b16 %v1913
    %v1987 = vunpack.c.l.b16 %v1914
    %v1988 = vunpack.c.h.b16 %v1914
    %v1989 = vunpack.c.l.b16 %v1915
    %v1990 = vunpack.c.l.b16 %v1916
    %v1991 = vunpack.c.h.b16 %v1916
    %v1992 = vunpack.c.l.b16 %v1917
    %v1993 = vunpack.c.l.b16 %v1918
    %v1994 = vunpack.c.h.b16 %v1918
    %v1995 = vunpack.c.l.b16 %v1919
    %v1996 = vunpack.c.l.b16 %v1920
    %v1997 = vunpack.c.h.b16 %v1920
    %v1998 = vunpack.c.l.b16 %v1921
    %v1999 = vunpack.c.l.b16 %v1922
    %v2000 = vunpack.c.h.b16 %v1922
    %v2001 = vunpack.c.l.b16 %v1923
    %v2002 = vunpack.c.l.b16 %v1924
    %v2003 = vunpack.c.h.b16 %v1924
    %v2004 = vunpack.c.l.b16 %v1925
    %v2005 = vunpack.c.l.b16 %v1926
    %v2006 = vunpack.c.h.b16 %v1926
    %v2007 = vunpack.c.l.b16 %v1927
    %v2008 = vunpack.c.l.b16 %v1928
    %v2009 = vunpack.c.h.b16 %v1928
    %v2010 = vunpack.c.l.b16 %v1929
    %v2011 = vunpack.c.l.b16 %v1930
    %v2012 = vunpack.c.h.b16 %v1930
    %v2013 = vunpack.c.l.b16 %v1931
    %v2014 = vunpack.c.l.b16 %v1932
    %v2015 = vunpack.c.h.b16 %v1932
    %v2016 = vunpack.c.l.b16 %v1933
    %v2017 = vunpack.c.l.b16 %v1934
    %v2018 = vunpack.c.h.b16 %v1934
    %v2019 = vunpack.c.l.b16 %v1935
    %v2020 = vunpack.c.l.b16 %v1936
    %v2021 = vunpack.c.h.b16 %v1936
    %v2022 = vunpack.c.l.b16 %v1937
    %v2023 = vunpack.c.l.b16 %v1938
    %v2024 = vunpack.c.h.b16 %v1938
    %v2025 = vunpack.c.l.b16 %v1939
    %v2026 = vunpack.c.l.b16 %v1940
    %v2027 = vunpack.c.h.b16 %v1940
    %v2028 = vunpack.c.l.b16 %v1941
    %v2029 = vpack.c.b16 %v1984, %v1981
    %v2030 = vpack.c.b16 %v1985, %v1982
    %v2031 = vpack.c.b16 %v1986, %v1983
    %v2032 = vpack.c.b16 %v1990, %v1987
    %v2033 = vpack.c.b16 %v1991, %v1988
    %v2034 = vpack.c.b16 %v1992, %v1989
    %v2035 = vpack.c.b16 %v1996, %v1993
    %v2036 = vpack.c.b16 %v1997, %v1994
    %v2037 = vpack.c.b16 %v1998, %v1995
    %v2038 = vpack.c.b16 %v2002, %v1999
    %v2039 = vpack.c.b16 %v2003, %v2000
    %v2040 = vpack.c.b16 %v2004, %v2001
    %v2041 = vpack.c.b16 %v2008, %v2005
    %v2042 = vpack.c.b16 %v2009, %v2006
    %v2043 = vpack.c.b16 %v2010, %v2007
    %v2044 = vpack.c.b16 %v2014, %v2011
    %v2045 = vpack.c.b16 %v2015, %v2012
    %v2046 = vpack.c.b16 %v2016, %v2013
    %v2047 = vpack.c.b16 %v2020, %v2017
    %v2048 = vpack.c.b16 %v2021, %v2018
    %v2049 = vpack.c.b16 %v2022, %v2019
    %v2050 = vpack.c.b16 %v2026, %v2023
    %v2051 = vpack.c.b16 %v2027, %v2024
    %v2052 = vpack.c.b16 %v2028, %v2025
    %2077 = vmatpush.bf16.msra.mxu0 %v2050
    %2078 = vmatpush.bf16.msra.mxu0 %v2047
    %2079 = vmatpush.bf16.msra.mxu0 %v2044
    %2080 = vmatpush.bf16.msra.mxu0 %v2041
    %2081 = vmatpush.bf16.msra.mxu0 %v2038
    %2082 = vmatpush.bf16.msra.mxu0 %v2035
    %2083 = vmatpush.bf16.msra.mxu0 %v2032
    %2084 = vmatpush.bf16.msra.mxu0 %v2029
    %2085 = vmatmul.bf16.gmra.mxu0 %v1908
    %v2086 = vpop.f32.mrf.mxu0
    %v2087 = vadd.f32 %v1943, %v2086
    %v2088 = vpop.f32.mrf.mxu0
    %2089 = vdwg.mxu0
    %2090 = vmatpush.bf16.msra.mxu0 %v2051
    %2091 = vmatpush.bf16.msra.mxu0 %v2048
    %2092 = vmatpush.bf16.msra.mxu0 %v2045
    %2093 = vmatpush.bf16.msra.mxu0 %v2042
    %2094 = vmatpush.bf16.msra.mxu0 %v2039
    %2095 = vmatpush.bf16.msra.mxu0 %v2036
    %2096 = vmatpush.bf16.msra.mxu0 %v2033
    %2097 = vmatpush.bf16.msra.mxu0 %v2030
    %2098 = vmatmul.bf16.gmra.mxu0 %v1908
    %v2099 = vpop.f32.mrf.mxu0
    %v2100 = vadd.f32 %v1944, %v2099
    %v2101 = vpop.f32.mrf.mxu0
    %2102 = vdwg.mxu0
    %2103 = vmatpush.bf16.msra.mxu0 %v2052
    %2104 = vmatpush.bf16.msra.mxu0 %v2049
    %2105 = vmatpush.bf16.msra.mxu0 %v2046
    %2106 = vmatpush.bf16.msra.mxu0 %v2043
    %2107 = vmatpush.bf16.msra.mxu0 %v2040
    %2108 = vmatpush.bf16.msra.mxu0 %v2037
    %2109 = vmatpush.bf16.msra.mxu0 %v2034
    %2110 = vmatpush.bf16.msra.mxu0 %v2031
    %2111 = vmatmul.bf16.gmra.mxu0 %v1908
    %v2112 = vpop.f32.mrf.mxu0
    %v2113 = vadd.f32 %v1945, %v2112
    %v2114 = vpop.f32.mrf.mxu0
    %2115 = vdwg.mxu0
    %s2116 = scalar_lea.vmem [#allocation7], 384
    %v2117 = vld [vmem:[%s2116] sm:$0xff]
    %v2118 = vld [vmem:[%s2116 + $0x8] sm:$0xf]
    %v2119 = vld [vmem:[%s2116 + $0xc] sm:$0xff]
    %v2120 = vld [vmem:[%s2116 + $0x14] sm:$0xf]
    %v2121 = vld [vmem:[%s2116 + $0x18] sm:$0xff]
    %v2122 = vld [vmem:[%s2116 + $0x20] sm:$0xf]
    %v2123 = vld [vmem:[%s2116 + $0x24] sm:$0xff]
    %v2124 = vld [vmem:[%s2116 + $0x2c] sm:$0xf]
    %v2125 = vld [vmem:[%s2116 + $0x30] sm:$0xff]
    %v2126 = vld [vmem:[%s2116 + $0x38] sm:$0xf]
    %v2127 = vld [vmem:[%s2116 + $0x3c] sm:$0xff]
    %v2128 = vld [vmem:[%s2116 + $0x44] sm:$0xf]
    %v2129 = vld [vmem:[%s2116 + $0x48] sm:$0xff]
    %v2130 = vld [vmem:[%s2116 + $0x50] sm:$0xf]
    %v2131 = vld [vmem:[%s2116 + $0x54] sm:$0xff]
    %v2132 = vld [vmem:[%s2116 + $0x5c] sm:$0xf]
    %v2133 = vld [vmem:[%s2116 + $0x60] sm:$0xff]
    %v2134 = vld [vmem:[%s2116 + $0x68] sm:$0xf]
    %v2135 = vld [vmem:[%s2116 + $0x6c] sm:$0xff]
    %v2136 = vld [vmem:[%s2116 + $0x74] sm:$0xf]
    %v2137 = vld [vmem:[%s2116 + $0x78] sm:$0xff]
    %v2138 = vld [vmem:[%s2116 + $0x80] sm:$0xf]
    %v2139 = vld [vmem:[%s2116 + $0x84] sm:$0xff]
    %v2140 = vld [vmem:[%s2116 + $0x8c] sm:$0xf]
    %v2141 = vld [vmem:[%s2116 + $0x90] sm:$0xff]
    %v2142 = vld [vmem:[%s2116 + $0x98] sm:$0xf]
    %v2143 = vld [vmem:[%s2116 + $0x9c] sm:$0xff]
    %v2144 = vld [vmem:[%s2116 + $0xa4] sm:$0xf]
    %v2145 = vld [vmem:[%s2116 + $0xa8] sm:$0xff]
    %v2146 = vld [vmem:[%s2116 + $0xb0] sm:$0xf]
    %v2147 = vld [vmem:[%s2116 + $0xb4] sm:$0xff]
    %v2148 = vld [vmem:[%s2116 + $0xbc] sm:$0xf]
    %2149 = vst [vmem:[#allocation2] sm:$0xff] %v2087
    %2150 = vst [vmem:[#allocation2 + $0x8] sm:$0xff] %v2100
    %2151 = vst [vmem:[#allocation2 + $0x10] sm:$0xff] %v2113
    %v2152 = vld [vmem:[#allocation2] ss:$8 sm:$0x7]
    %v2185 = vunpack.c.l.b16 %v2117
    %v2186 = vunpack.c.h.b16 %v2117
    %v2187 = vunpack.c.l.b16 %v2118
    %v2188 = vunpack.c.l.b16 %v2119
    %v2189 = vunpack.c.h.b16 %v2119
    %v2190 = vunpack.c.l.b16 %v2120
    %v2191 = vunpack.c.l.b16 %v2121
    %v2192 = vunpack.c.h.b16 %v2121
    %v2193 = vunpack.c.l.b16 %v2122
    %v2194 = vunpack.c.l.b16 %v2123
    %v2195 = vunpack.c.h.b16 %v2123
    %v2196 = vunpack.c.l.b16 %v2124
    %v2197 = vunpack.c.l.b16 %v2125
    %v2198 = vunpack.c.h.b16 %v2125
    %v2199 = vunpack.c.l.b16 %v2126
    %v2200 = vunpack.c.l.b16 %v2127
    %v2201 = vunpack.c.h.b16 %v2127
    %v2202 = vunpack.c.l.b16 %v2128
    %v2203 = vunpack.c.l.b16 %v2129
    %v2204 = vunpack.c.h.b16 %v2129
    %v2205 = vunpack.c.l.b16 %v2130
    %v2206 = vunpack.c.l.b16 %v2131
    %v2207 = vunpack.c.h.b16 %v2131
    %v2208 = vunpack.c.l.b16 %v2132
    %v2209 = vunpack.c.l.b16 %v2133
    %v2210 = vunpack.c.h.b16 %v2133
    %v2211 = vunpack.c.l.b16 %v2134
    %v2212 = vunpack.c.l.b16 %v2135
    %v2213 = vunpack.c.h.b16 %v2135
    %v2214 = vunpack.c.l.b16 %v2136
    %v2215 = vunpack.c.l.b16 %v2137
    %v2216 = vunpack.c.h.b16 %v2137
    %v2217 = vunpack.c.l.b16 %v2138
    %v2218 = vunpack.c.l.b16 %v2139
    %v2219 = vunpack.c.h.b16 %v2139
    %v2220 = vunpack.c.l.b16 %v2140
    %v2221 = vunpack.c.l.b16 %v2141
    %v2222 = vunpack.c.h.b16 %v2141
    %v2223 = vunpack.c.l.b16 %v2142
    %v2224 = vunpack.c.l.b16 %v2143
    %v2225 = vunpack.c.h.b16 %v2143
    %v2226 = vunpack.c.l.b16 %v2144
    %v2227 = vunpack.c.l.b16 %v2145
    %v2228 = vunpack.c.h.b16 %v2145
    %v2229 = vunpack.c.l.b16 %v2146
    %v2230 = vunpack.c.l.b16 %v2147
    %v2231 = vunpack.c.h.b16 %v2147
    %v2232 = vunpack.c.l.b16 %v2148
    %v2233 = vpack.c.b16 %v2188, %v2185
    %v2234 = vpack.c.b16 %v2189, %v2186
    %v2235 = vpack.c.b16 %v2190, %v2187
    %v2236 = vpack.c.b16 %v2194, %v2191
    %v2237 = vpack.c.b16 %v2195, %v2192
    %v2238 = vpack.c.b16 %v2196, %v2193
    %v2239 = vpack.c.b16 %v2200, %v2197
    %v2240 = vpack.c.b16 %v2201, %v2198
    %v2241 = vpack.c.b16 %v2202, %v2199
    %v2242 = vpack.c.b16 %v2206, %v2203
    %v2243 = vpack.c.b16 %v2207, %v2204
    %v2244 = vpack.c.b16 %v2208, %v2205
    %v2245 = vpack.c.b16 %v2212, %v2209
    %v2246 = vpack.c.b16 %v2213, %v2210
    %v2247 = vpack.c.b16 %v2214, %v2211
    %v2248 = vpack.c.b16 %v2218, %v2215
    %v2249 = vpack.c.b16 %v2219, %v2216
    %v2250 = vpack.c.b16 %v2220, %v2217
    %v2251 = vpack.c.b16 %v2224, %v2221
    %v2252 = vpack.c.b16 %v2225, %v2222
    %v2253 = vpack.c.b16 %v2226, %v2223
    %v2254 = vpack.c.b16 %v2230, %v2227
    %v2255 = vpack.c.b16 %v2231, %v2228
    %v2256 = vpack.c.b16 %v2232, %v2229
    %2281 = vmatpush.bf16.msra.mxu0 %v2254
    %2282 = vmatpush.bf16.msra.mxu0 %v2251
    %2283 = vmatpush.bf16.msra.mxu0 %v2248
    %2284 = vmatpush.bf16.msra.mxu0 %v2245
    %2285 = vmatpush.bf16.msra.mxu0 %v2242
    %2286 = vmatpush.bf16.msra.mxu0 %v2239
    %2287 = vmatpush.bf16.msra.mxu0 %v2236
    %2288 = vmatpush.bf16.msra.mxu0 %v2233
    %2289 = vmatmul.bf16.gmra.mxu0 0
    %v2290 = vpop.f32.mrf.mxu0
    %v2291 = vadd.f32 0.0, %v2290
    %v2292 = vpop.f32.mrf.mxu0
    %2293 = vdwg.mxu0
    %2294 = vmatpush.bf16.msra.mxu0 %v2255
    %2295 = vmatpush.bf16.msra.mxu0 %v2252
    %2296 = vmatpush.bf16.msra.mxu0 %v2249
    %2297 = vmatpush.bf16.msra.mxu0 %v2246
    %2298 = vmatpush.bf16.msra.mxu0 %v2243
    %2299 = vmatpush.bf16.msra.mxu0 %v2240
    %2300 = vmatpush.bf16.msra.mxu0 %v2237
    %2301 = vmatpush.bf16.msra.mxu0 %v2234
    %2302 = vmatmul.bf16.gmra.mxu0 0
    %v2303 = vpop.f32.mrf.mxu0
    %v2304 = vadd.f32 0.0, %v2303
    %v2305 = vpop.f32.mrf.mxu0
    %2306 = vdwg.mxu0
    %2307 = vmatpush.bf16.msra.mxu0 %v2256
    %2308 = vmatpush.bf16.msra.mxu0 %v2253
    %2309 = vmatpush.bf16.msra.mxu0 %v2250
    %2310 = vmatpush.bf16.msra.mxu0 %v2247
    %2311 = vmatpush.bf16.msra.mxu0 %v2244
    %2312 = vmatpush.bf16.msra.mxu0 %v2241
    %2313 = vmatpush.bf16.msra.mxu0 %v2238
    %2314 = vmatpush.bf16.msra.mxu0 %v2235
    %2315 = vmatmul.bf16.gmra.mxu0 0
    %v2316 = vpop.f32.mrf.mxu0
    %v2317 = vadd.f32 0.0, %v2316
    %v2318 = vpop.f32.mrf.mxu0
    %2319 = vdwg.mxu0
    %v2322 = vrot.slane %v2304, 7
    %v2323 = vsel %vm267, %v2291, %v2322
    %v2325 = vadd.f32 %v2152, %v2323
    %v2326 = vxor.u32 %v2325, 2147483648
    %v2327 = vmul.f32 %v2326, 1.442695
    %v2328 = vpow.pop %v2327
    %v2329 = vadd.f32 %v2328, 1.0
    %v2330 = vrcp.pop %v2329
    %v2331 = vmul.f32 %v2329, %v2330
    %v2332 = vsub.f32 1.0, %v2331
    %v2333 = vmul.f32 %v2330, %v2332
    %v2334 = vadd.f32 %v2330, %v2333
    %vm2335 = vweird.f32 %v2329
    %vm2336 = vweird.f32 %v2330
    %vm2337 = vmor %vm2335, %vm2336
    %v2338 = vsel %vm2337, %v2330, %v2334
    %v2339 = vand.u32 2147483647, %v2329
    %vm2340 = vcmp.eq.f32.partialorder %v2339, 8.507059e+37
    %v2341 = vand.u32 %v2329, 2147483648
    %v2342 = vor.u32 1.1754944e-38, %v2341
    %v2343 = vsel %vm2340, %v2342, %v2338
    %v2344 = vmul.f32 1.0, %v2343
    %v2345 = vperm.slane %v1906, 3
    %v2347 = vadd.f32 %v2317, %v2345
    %v2348 = vmul.f32 %v2344, %v2347
    %v2350 = vrot.slane %v2152, 2
    %v2352 = vadd.f32 %v2350, %v2348
    %v2353 = vtanh.pop %v2352
    %v2355 = vrot.slane %v2344, 1
    %v2357 = vsub.f32 1.0, %v2355
    %v2358 = vmul.f32 %v2357, %v2353
    %v2359 = vmul.f32 %v2355, 0.0
    %v2360 = vadd.f32 %v2358, %v2359
    %2361 = vst [vmem:[#allocation3] sm:$0x1] %v2360
    %v2362 = vld [vmem:[%s308] ss:$8 sm:$0x7]
    %v2363 = vpack.c.bf16 %v2360, %v2360
    %2364 = vmatpush.bf16.msra.mxu0 %v2254
    %2365 = vmatpush.bf16.msra.mxu0 %v2251
    %2366 = vmatpush.bf16.msra.mxu0 %v2248
    %2367 = vmatpush.bf16.msra.mxu0 %v2245
    %2368 = vmatpush.bf16.msra.mxu0 %v2242
    %2369 = vmatpush.bf16.msra.mxu0 %v2239
    %2370 = vmatpush.bf16.msra.mxu0 %v2236
    %2371 = vmatpush.bf16.msra.mxu0 %v2233
    %2372 = vmatmul.bf16.gmra.mxu0 %v2363
    %v2373 = vpop.f32.mrf.mxu0
    %v2374 = vadd.f32 0.0, %v2373
    %v2375 = vpop.f32.mrf.mxu0
    %2376 = vdwg.mxu0
    %2377 = vmatpush.bf16.msra.mxu0 %v2255
    %2378 = vmatpush.bf16.msra.mxu0 %v2252
    %2379 = vmatpush.bf16.msra.mxu0 %v2249
    %2380 = vmatpush.bf16.msra.mxu0 %v2246
    %2381 = vmatpush.bf16.msra.mxu0 %v2243
    %2382 = vmatpush.bf16.msra.mxu0 %v2240
    %2383 = vmatpush.bf16.msra.mxu0 %v2237
    %2384 = vmatpush.bf16.msra.mxu0 %v2234
    %2385 = vmatmul.bf16.gmra.mxu0 %v2363
    %v2386 = vpop.f32.mrf.mxu0
    %v2387 = vadd.f32 0.0, %v2386
    %v2388 = vpop.f32.mrf.mxu0
    %2389 = vdwg.mxu0
    %2390 = vmatpush.bf16.msra.mxu0 %v2256
    %2391 = vmatpush.bf16.msra.mxu0 %v2253
    %2392 = vmatpush.bf16.msra.mxu0 %v2250
    %2393 = vmatpush.bf16.msra.mxu0 %v2247
    %2394 = vmatpush.bf16.msra.mxu0 %v2244
    %2395 = vmatpush.bf16.msra.mxu0 %v2241
    %2396 = vmatpush.bf16.msra.mxu0 %v2238
    %2397 = vmatpush.bf16.msra.mxu0 %v2235
    %2398 = vmatmul.bf16.gmra.mxu0 %v2363
    %v2399 = vpop.f32.mrf.mxu0
    %v2400 = vadd.f32 0.0, %v2399
    %v2401 = vpop.f32.mrf.mxu0
    %2402 = vdwg.mxu0
    %v2405 = vrot.slane %v2387, 7
    %v2406 = vsel %vm267, %v2374, %v2405
    %v2408 = vadd.f32 %v2362, %v2406
    %v2409 = vxor.u32 %v2408, 2147483648
    %v2410 = vmul.f32 %v2409, 1.442695
    %v2411 = vpow.pop %v2410
    %v2412 = vadd.f32 %v2411, 1.0
    %v2413 = vrcp.pop %v2412
    %v2414 = vmul.f32 %v2412, %v2413
    %v2415 = vsub.f32 1.0, %v2414
    %v2416 = vmul.f32 %v2413, %v2415
    %v2417 = vadd.f32 %v2413, %v2416
    %vm2418 = vweird.f32 %v2412
    %vm2419 = vweird.f32 %v2413
    %vm2420 = vmor %vm2418, %vm2419
    %v2421 = vsel %vm2420, %v2413, %v2417
    %v2422 = vand.u32 2147483647, %v2412
    %vm2423 = vcmp.eq.f32.partialorder %v2422, 8.507059e+37
    %v2424 = vand.u32 %v2412, 2147483648
    %v2425 = vor.u32 1.1754944e-38, %v2424
    %v2426 = vsel %vm2423, %v2425, %v2421
    %v2427 = vmul.f32 1.0, %v2426
    %v2428 = vadd.f32 %v2400, %v2345
    %v2429 = vmul.f32 %v2427, %v2428
    %v2431 = vrot.slane %v2362, 2
    %v2433 = vadd.f32 %v2431, %v2429
    %v2434 = vtanh.pop %v2433
    %v2436 = vrot.slane %v2427, 1
    %v2438 = vsub.f32 1.0, %v2436
    %v2439 = vmul.f32 %v2438, %v2434
    %v2440 = vmul.f32 %v2436, %v2360
    %v2441 = vadd.f32 %v2439, %v2440
    %2442 = vst [vmem:[#allocation3 + $0x1] sm:$0x1] %v2441
    %v2443 = vld [vmem:[%s390] ss:$8 sm:$0x7]
    %v2444 = vpack.c.bf16 %v2441, %v2441
    %2445 = vmatpush.bf16.msra.mxu0 %v2254
    %2446 = vmatpush.bf16.msra.mxu0 %v2251
    %2447 = vmatpush.bf16.msra.mxu0 %v2248
    %2448 = vmatpush.bf16.msra.mxu0 %v2245
    %2449 = vmatpush.bf16.msra.mxu0 %v2242
    %2450 = vmatpush.bf16.msra.mxu0 %v2239
    %2451 = vmatpush.bf16.msra.mxu0 %v2236
    %2452 = vmatpush.bf16.msra.mxu0 %v2233
    %2453 = vmatmul.bf16.gmra.mxu0 %v2444
    %v2454 = vpop.f32.mrf.mxu0
    %v2455 = vadd.f32 0.0, %v2454
    %v2456 = vpop.f32.mrf.mxu0
    %2457 = vdwg.mxu0
    %2458 = vmatpush.bf16.msra.mxu0 %v2255
    %2459 = vmatpush.bf16.msra.mxu0 %v2252
    %2460 = vmatpush.bf16.msra.mxu0 %v2249
    %2461 = vmatpush.bf16.msra.mxu0 %v2246
    %2462 = vmatpush.bf16.msra.mxu0 %v2243
    %2463 = vmatpush.bf16.msra.mxu0 %v2240
    %2464 = vmatpush.bf16.msra.mxu0 %v2237
    %2465 = vmatpush.bf16.msra.mxu0 %v2234
    %2466 = vmatmul.bf16.gmra.mxu0 %v2444
    %v2467 = vpop.f32.mrf.mxu0
    %v2468 = vadd.f32 0.0, %v2467
    %v2469 = vpop.f32.mrf.mxu0
    %2470 = vdwg.mxu0
    %2471 = vmatpush.bf16.msra.mxu0 %v2256
    %2472 = vmatpush.bf16.msra.mxu0 %v2253
    %2473 = vmatpush.bf16.msra.mxu0 %v2250
    %2474 = vmatpush.bf16.msra.mxu0 %v2247
    %2475 = vmatpush.bf16.msra.mxu0 %v2244
    %2476 = vmatpush.bf16.msra.mxu0 %v2241
    %2477 = vmatpush.bf16.msra.mxu0 %v2238
    %2478 = vmatpush.bf16.msra.mxu0 %v2235
    %2479 = vmatmul.bf16.gmra.mxu0 %v2444
    %v2480 = vpop.f32.mrf.mxu0
    %v2481 = vadd.f32 0.0, %v2480
    %v2482 = vpop.f32.mrf.mxu0
    %2483 = vdwg.mxu0
    %v2486 = vrot.slane %v2468, 7
    %v2487 = vsel %vm267, %v2455, %v2486
    %v2489 = vadd.f32 %v2443, %v2487
    %v2490 = vxor.u32 %v2489, 2147483648
    %v2491 = vmul.f32 %v2490, 1.442695
    %v2492 = vpow.pop %v2491
    %v2493 = vadd.f32 %v2492, 1.0
    %v2494 = vrcp.pop %v2493
    %v2495 = vmul.f32 %v2493, %v2494
    %v2496 = vsub.f32 1.0, %v2495
    %v2497 = vmul.f32 %v2494, %v2496
    %v2498 = vadd.f32 %v2494, %v2497
    %vm2499 = vweird.f32 %v2493
    %vm2500 = vweird.f32 %v2494
    %vm2501 = vmor %vm2499, %vm2500
    %v2502 = vsel %vm2501, %v2494, %v2498
    %v2503 = vand.u32 2147483647, %v2493
    %vm2504 = vcmp.eq.f32.partialorder %v2503, 8.507059e+37
    %v2505 = vand.u32 %v2493, 2147483648
    %v2506 = vor.u32 1.1754944e-38, %v2505
    %v2507 = vsel %vm2504, %v2506, %v2502
    %v2508 = vmul.f32 1.0, %v2507
    %v2509 = vadd.f32 %v2481, %v2345
    %v2510 = vmul.f32 %v2508, %v2509
    %v2512 = vrot.slane %v2443, 2
    %v2514 = vadd.f32 %v2512, %v2510
    %v2515 = vtanh.pop %v2514
    %v2517 = vrot.slane %v2508, 1
    %v2519 = vsub.f32 1.0, %v2517
    %v2520 = vmul.f32 %v2519, %v2515
    %v2521 = vmul.f32 %v2517, %v2441
    %v2522 = vadd.f32 %v2520, %v2521
    %2523 = vst [vmem:[#allocation3 + $0x2] sm:$0x1] %v2522
    %v2524 = vld [vmem:[%s472] ss:$8 sm:$0x7]
    %v2525 = vpack.c.bf16 %v2522, %v2522
    %2526 = vmatpush.bf16.msra.mxu0 %v2254
    %2527 = vmatpush.bf16.msra.mxu0 %v2251
    %2528 = vmatpush.bf16.msra.mxu0 %v2248
    %2529 = vmatpush.bf16.msra.mxu0 %v2245
    %2530 = vmatpush.bf16.msra.mxu0 %v2242
    %2531 = vmatpush.bf16.msra.mxu0 %v2239
    %2532 = vmatpush.bf16.msra.mxu0 %v2236
    %2533 = vmatpush.bf16.msra.mxu0 %v2233
    %2534 = vmatmul.bf16.gmra.mxu0 %v2525
    %v2535 = vpop.f32.mrf.mxu0
    %v2536 = vadd.f32 0.0, %v2535
    %v2537 = vpop.f32.mrf.mxu0
    %2538 = vdwg.mxu0
    %2539 = vmatpush.bf16.msra.mxu0 %v2255
    %2540 = vmatpush.bf16.msra.mxu0 %v2252
    %2541 = vmatpush.bf16.msra.mxu0 %v2249
    %2542 = vmatpush.bf16.msra.mxu0 %v2246
    %2543 = vmatpush.bf16.msra.mxu0 %v2243
    %2544 = vmatpush.bf16.msra.mxu0 %v2240
    %2545 = vmatpush.bf16.msra.mxu0 %v2237
    %2546 = vmatpush.bf16.msra.mxu0 %v2234
    %2547 = vmatmul.bf16.gmra.mxu0 %v2525
    %v2548 = vpop.f32.mrf.mxu0
    %v2549 = vadd.f32 0.0, %v2548
    %v2550 = vpop.f32.mrf.mxu0
    %2551 = vdwg.mxu0
    %2552 = vmatpush.bf16.msra.mxu0 %v2256
    %2553 = vmatpush.bf16.msra.mxu0 %v2253
    %2554 = vmatpush.bf16.msra.mxu0 %v2250
    %2555 = vmatpush.bf16.msra.mxu0 %v2247
    %2556 = vmatpush.bf16.msra.mxu0 %v2244
    %2557 = vmatpush.bf16.msra.mxu0 %v2241
    %2558 = vmatpush.bf16.msra.mxu0 %v2238
    %2559 = vmatpush.bf16.msra.mxu0 %v2235
    %2560 = vmatmul.bf16.gmra.mxu0 %v2525
    %v2561 = vpop.f32.mrf.mxu0
    %v2562 = vadd.f32 0.0, %v2561
    %v2563 = vpop.f32.mrf.mxu0
    %2564 = vdwg.mxu0
    %v2567 = vrot.slane %v2549, 7
    %v2568 = vsel %vm267, %v2536, %v2567
    %v2570 = vadd.f32 %v2524, %v2568
    %v2571 = vxor.u32 %v2570, 2147483648
    %v2572 = vmul.f32 %v2571, 1.442695
    %v2573 = vpow.pop %v2572
    %v2574 = vadd.f32 %v2573, 1.0
    %v2575 = vrcp.pop %v2574
    %v2576 = vmul.f32 %v2574, %v2575
    %v2577 = vsub.f32 1.0, %v2576
    %v2578 = vmul.f32 %v2575, %v2577
    %v2579 = vadd.f32 %v2575, %v2578
    %vm2580 = vweird.f32 %v2574
    %vm2581 = vweird.f32 %v2575
    %vm2582 = vmor %vm2580, %vm2581
    %v2583 = vsel %vm2582, %v2575, %v2579
    %v2584 = vand.u32 2147483647, %v2574
    %vm2585 = vcmp.eq.f32.partialorder %v2584, 8.507059e+37
    %v2586 = vand.u32 %v2574, 2147483648
    %v2587 = vor.u32 1.1754944e-38, %v2586
    %v2588 = vsel %vm2585, %v2587, %v2583
    %v2589 = vmul.f32 1.0, %v2588
    %v2590 = vadd.f32 %v2562, %v2345
    %v2591 = vmul.f32 %v2589, %v2590
    %v2593 = vrot.slane %v2524, 2
    %v2595 = vadd.f32 %v2593, %v2591
    %v2596 = vtanh.pop %v2595
    %v2598 = vrot.slane %v2589, 1
    %v2600 = vsub.f32 1.0, %v2598
    %v2601 = vmul.f32 %v2600, %v2596
    %v2602 = vmul.f32 %v2598, %v2522
    %v2603 = vadd.f32 %v2601, %v2602
    %2604 = vst [vmem:[#allocation3 + $0x3] sm:$0x1] %v2603
    %v2605 = vld [vmem:[%s554] ss:$8 sm:$0x7]
    %v2606 = vpack.c.bf16 %v2603, %v2603
    %2607 = vmatpush.bf16.msra.mxu0 %v2254
    %2608 = vmatpush.bf16.msra.mxu0 %v2251
    %2609 = vmatpush.bf16.msra.mxu0 %v2248
    %2610 = vmatpush.bf16.msra.mxu0 %v2245
    %2611 = vmatpush.bf16.msra.mxu0 %v2242
    %2612 = vmatpush.bf16.msra.mxu0 %v2239
    %2613 = vmatpush.bf16.msra.mxu0 %v2236
    %2614 = vmatpush.bf16.msra.mxu0 %v2233
    %2615 = vmatmul.bf16.gmra.mxu0 %v2606
    %v2616 = vpop.f32.mrf.mxu0
    %v2617 = vadd.f32 0.0, %v2616
    %v2618 = vpop.f32.mrf.mxu0
    %2619 = vdwg.mxu0
    %2620 = vmatpush.bf16.msra.mxu0 %v2255
    %2621 = vmatpush.bf16.msra.mxu0 %v2252
    %2622 = vmatpush.bf16.msra.mxu0 %v2249
    %2623 = vmatpush.bf16.msra.mxu0 %v2246
    %2624 = vmatpush.bf16.msra.mxu0 %v2243
    %2625 = vmatpush.bf16.msra.mxu0 %v2240
    %2626 = vmatpush.bf16.msra.mxu0 %v2237
    %2627 = vmatpush.bf16.msra.mxu0 %v2234
    %2628 = vmatmul.bf16.gmra.mxu0 %v2606
    %v2629 = vpop.f32.mrf.mxu0
    %v2630 = vadd.f32 0.0, %v2629
    %v2631 = vpop.f32.mrf.mxu0
    %2632 = vdwg.mxu0
    %2633 = vmatpush.bf16.msra.mxu0 %v2256
    %2634 = vmatpush.bf16.msra.mxu0 %v2253
    %2635 = vmatpush.bf16.msra.mxu0 %v2250
    %2636 = vmatpush.bf16.msra.mxu0 %v2247
    %2637 = vmatpush.bf16.msra.mxu0 %v2244
    %2638 = vmatpush.bf16.msra.mxu0 %v2241
    %2639 = vmatpush.bf16.msra.mxu0 %v2238
    %2640 = vmatpush.bf16.msra.mxu0 %v2235
    %2641 = vmatmul.bf16.gmra.mxu0 %v2606
    %v2642 = vpop.f32.mrf.mxu0
    %v2643 = vadd.f32 0.0, %v2642
    %v2644 = vpop.f32.mrf.mxu0
    %2645 = vdwg.mxu0
    %v2648 = vrot.slane %v2630, 7
    %v2649 = vsel %vm267, %v2617, %v2648
    %v2651 = vadd.f32 %v2605, %v2649
    %v2652 = vxor.u32 %v2651, 2147483648
    %v2653 = vmul.f32 %v2652, 1.442695
    %v2654 = vpow.pop %v2653
    %v2655 = vadd.f32 %v2654, 1.0
    %v2656 = vrcp.pop %v2655
    %v2657 = vmul.f32 %v2655, %v2656
    %v2658 = vsub.f32 1.0, %v2657
    %v2659 = vmul.f32 %v2656, %v2658
    %v2660 = vadd.f32 %v2656, %v2659
    %vm2661 = vweird.f32 %v2655
    %vm2662 = vweird.f32 %v2656
    %vm2663 = vmor %vm2661, %vm2662
    %v2664 = vsel %vm2663, %v2656, %v2660
    %v2665 = vand.u32 2147483647, %v2655
    %vm2666 = vcmp.eq.f32.partialorder %v2665, 8.507059e+37
    %v2667 = vand.u32 %v2655, 2147483648
    %v2668 = vor.u32 1.1754944e-38, %v2667
    %v2669 = vsel %vm2666, %v2668, %v2664
    %v2670 = vmul.f32 1.0, %v2669
    %v2671 = vadd.f32 %v2643, %v2345
    %v2672 = vmul.f32 %v2670, %v2671
    %v2674 = vrot.slane %v2605, 2
    %v2676 = vadd.f32 %v2674, %v2672
    %v2677 = vtanh.pop %v2676
    %v2679 = vrot.slane %v2670, 1
    %v2681 = vsub.f32 1.0, %v2679
    %v2682 = vmul.f32 %v2681, %v2677
    %v2683 = vmul.f32 %v2679, %v2603
    %v2684 = vadd.f32 %v2682, %v2683
    %2685 = vst [vmem:[#allocation3 + $0x4] sm:$0x1] %v2684
    %v2686 = vld [vmem:[%s636] ss:$8 sm:$0x7]
    %v2687 = vpack.c.bf16 %v2684, %v2684
    %2688 = vmatpush.bf16.msra.mxu0 %v2254
    %2689 = vmatpush.bf16.msra.mxu0 %v2251
    %2690 = vmatpush.bf16.msra.mxu0 %v2248
    %2691 = vmatpush.bf16.msra.mxu0 %v2245
    %2692 = vmatpush.bf16.msra.mxu0 %v2242
    %2693 = vmatpush.bf16.msra.mxu0 %v2239
    %2694 = vmatpush.bf16.msra.mxu0 %v2236
    %2695 = vmatpush.bf16.msra.mxu0 %v2233
    %2696 = vmatmul.bf16.gmra.mxu0 %v2687
    %v2697 = vpop.f32.mrf.mxu0
    %v2698 = vadd.f32 0.0, %v2697
    %v2699 = vpop.f32.mrf.mxu0
    %2700 = vdwg.mxu0
    %2701 = vmatpush.bf16.msra.mxu0 %v2255
    %2702 = vmatpush.bf16.msra.mxu0 %v2252
    %2703 = vmatpush.bf16.msra.mxu0 %v2249
    %2704 = vmatpush.bf16.msra.mxu0 %v2246
    %2705 = vmatpush.bf16.msra.mxu0 %v2243
    %2706 = vmatpush.bf16.msra.mxu0 %v2240
    %2707 = vmatpush.bf16.msra.mxu0 %v2237
    %2708 = vmatpush.bf16.msra.mxu0 %v2234
    %2709 = vmatmul.bf16.gmra.mxu0 %v2687
    %v2710 = vpop.f32.mrf.mxu0
    %v2711 = vadd.f32 0.0, %v2710
    %v2712 = vpop.f32.mrf.mxu0
    %2713 = vdwg.mxu0
    %2714 = vmatpush.bf16.msra.mxu0 %v2256
    %2715 = vmatpush.bf16.msra.mxu0 %v2253
    %2716 = vmatpush.bf16.msra.mxu0 %v2250
    %2717 = vmatpush.bf16.msra.mxu0 %v2247
    %2718 = vmatpush.bf16.msra.mxu0 %v2244
    %2719 = vmatpush.bf16.msra.mxu0 %v2241
    %2720 = vmatpush.bf16.msra.mxu0 %v2238
    %2721 = vmatpush.bf16.msra.mxu0 %v2235
    %2722 = vmatmul.bf16.gmra.mxu0 %v2687
    %v2723 = vpop.f32.mrf.mxu0
    %v2724 = vadd.f32 0.0, %v2723
    %v2725 = vpop.f32.mrf.mxu0
    %2726 = vdwg.mxu0
    %v2729 = vrot.slane %v2711, 7
    %v2730 = vsel %vm267, %v2698, %v2729
    %v2732 = vadd.f32 %v2686, %v2730
    %v2733 = vxor.u32 %v2732, 2147483648
    %v2734 = vmul.f32 %v2733, 1.442695
    %v2735 = vpow.pop %v2734
    %v2736 = vadd.f32 %v2735, 1.0
    %v2737 = vrcp.pop %v2736
    %v2738 = vmul.f32 %v2736, %v2737
    %v2739 = vsub.f32 1.0, %v2738
    %v2740 = vmul.f32 %v2737, %v2739
    %v2741 = vadd.f32 %v2737, %v2740
    %vm2742 = vweird.f32 %v2736
    %vm2743 = vweird.f32 %v2737
    %vm2744 = vmor %vm2742, %vm2743
    %v2745 = vsel %vm2744, %v2737, %v2741
    %v2746 = vand.u32 2147483647, %v2736
    %vm2747 = vcmp.eq.f32.partialorder %v2746, 8.507059e+37
    %v2748 = vand.u32 %v2736, 2147483648
    %v2749 = vor.u32 1.1754944e-38, %v2748
    %v2750 = vsel %vm2747, %v2749, %v2745
    %v2751 = vmul.f32 1.0, %v2750
    %v2752 = vadd.f32 %v2724, %v2345
    %v2753 = vmul.f32 %v2751, %v2752
    %v2755 = vrot.slane %v2686, 2
    %v2757 = vadd.f32 %v2755, %v2753
    %v2758 = vtanh.pop %v2757
    %v2760 = vrot.slane %v2751, 1
    %v2762 = vsub.f32 1.0, %v2760
    %v2763 = vmul.f32 %v2762, %v2758
    %v2764 = vmul.f32 %v2760, %v2684
    %v2765 = vadd.f32 %v2763, %v2764
    %2766 = vst [vmem:[#allocation3 + $0x5] sm:$0x1] %v2765
    %v2767 = vld [vmem:[%s718] ss:$8 sm:$0x7]
    %v2768 = vpack.c.bf16 %v2765, %v2765
    %2769 = vmatpush.bf16.msra.mxu0 %v2254
    %2770 = vmatpush.bf16.msra.mxu0 %v2251
    %2771 = vmatpush.bf16.msra.mxu0 %v2248
    %2772 = vmatpush.bf16.msra.mxu0 %v2245
    %2773 = vmatpush.bf16.msra.mxu0 %v2242
    %2774 = vmatpush.bf16.msra.mxu0 %v2239
    %2775 = vmatpush.bf16.msra.mxu0 %v2236
    %2776 = vmatpush.bf16.msra.mxu0 %v2233
    %2777 = vmatmul.bf16.gmra.mxu0 %v2768
    %v2778 = vpop.f32.mrf.mxu0
    %v2779 = vadd.f32 0.0, %v2778
    %v2780 = vpop.f32.mrf.mxu0
    %2781 = vdwg.mxu0
    %2782 = vmatpush.bf16.msra.mxu0 %v2255
    %2783 = vmatpush.bf16.msra.mxu0 %v2252
    %2784 = vmatpush.bf16.msra.mxu0 %v2249
    %2785 = vmatpush.bf16.msra.mxu0 %v2246
    %2786 = vmatpush.bf16.msra.mxu0 %v2243
    %2787 = vmatpush.bf16.msra.mxu0 %v2240
    %2788 = vmatpush.bf16.msra.mxu0 %v2237
    %2789 = vmatpush.bf16.msra.mxu0 %v2234
    %2790 = vmatmul.bf16.gmra.mxu0 %v2768
    %v2791 = vpop.f32.mrf.mxu0
    %v2792 = vadd.f32 0.0, %v2791
    %v2793 = vpop.f32.mrf.mxu0
    %2794 = vdwg.mxu0
    %2795 = vmatpush.bf16.msra.mxu0 %v2256
    %2796 = vmatpush.bf16.msra.mxu0 %v2253
    %2797 = vmatpush.bf16.msra.mxu0 %v2250
    %2798 = vmatpush.bf16.msra.mxu0 %v2247
    %2799 = vmatpush.bf16.msra.mxu0 %v2244
    %2800 = vmatpush.bf16.msra.mxu0 %v2241
    %2801 = vmatpush.bf16.msra.mxu0 %v2238
    %2802 = vmatpush.bf16.msra.mxu0 %v2235
    %2803 = vmatmul.bf16.gmra.mxu0 %v2768
    %v2804 = vpop.f32.mrf.mxu0
    %v2805 = vadd.f32 0.0, %v2804
    %v2806 = vpop.f32.mrf.mxu0
    %2807 = vdwg.mxu0
    %v2810 = vrot.slane %v2792, 7
    %v2811 = vsel %vm267, %v2779, %v2810
    %v2813 = vadd.f32 %v2767, %v2811
    %v2814 = vxor.u32 %v2813, 2147483648
    %v2815 = vmul.f32 %v2814, 1.442695
    %v2816 = vpow.pop %v2815
    %v2817 = vadd.f32 %v2816, 1.0
    %v2818 = vrcp.pop %v2817
    %v2819 = vmul.f32 %v2817, %v2818
    %v2820 = vsub.f32 1.0, %v2819
    %v2821 = vmul.f32 %v2818, %v2820
    %v2822 = vadd.f32 %v2818, %v2821
    %vm2823 = vweird.f32 %v2817
    %vm2824 = vweird.f32 %v2818
    %vm2825 = vmor %vm2823, %vm2824
    %v2826 = vsel %vm2825, %v2818, %v2822
    %v2827 = vand.u32 2147483647, %v2817
    %vm2828 = vcmp.eq.f32.partialorder %v2827, 8.507059e+37
    %v2829 = vand.u32 %v2817, 2147483648
    %v2830 = vor.u32 1.1754944e-38, %v2829
    %v2831 = vsel %vm2828, %v2830, %v2826
    %v2832 = vmul.f32 1.0, %v2831
    %v2833 = vadd.f32 %v2805, %v2345
    %v2834 = vmul.f32 %v2832, %v2833
    %v2836 = vrot.slane %v2767, 2
    %v2838 = vadd.f32 %v2836, %v2834
    %v2839 = vtanh.pop %v2838
    %v2841 = vrot.slane %v2832, 1
    %v2843 = vsub.f32 1.0, %v2841
    %v2844 = vmul.f32 %v2843, %v2839
    %v2845 = vmul.f32 %v2841, %v2765
    %v2846 = vadd.f32 %v2844, %v2845
    %2847 = vst [vmem:[#allocation3 + $0x6] sm:$0x1] %v2846
    %v2848 = vld [vmem:[%s800] ss:$8 sm:$0x7]
    %v2849 = vpack.c.bf16 %v2846, %v2846
    %2850 = vmatpush.bf16.msra.mxu0 %v2254
    %2851 = vmatpush.bf16.msra.mxu0 %v2251
    %2852 = vmatpush.bf16.msra.mxu0 %v2248
    %2853 = vmatpush.bf16.msra.mxu0 %v2245
    %2854 = vmatpush.bf16.msra.mxu0 %v2242
    %2855 = vmatpush.bf16.msra.mxu0 %v2239
    %2856 = vmatpush.bf16.msra.mxu0 %v2236
    %2857 = vmatpush.bf16.msra.mxu0 %v2233
    %2858 = vmatmul.bf16.gmra.mxu0 %v2849
    %v2859 = vpop.f32.mrf.mxu0
    %v2860 = vadd.f32 0.0, %v2859
    %v2861 = vpop.f32.mrf.mxu0
    %2862 = vdwg.mxu0
    %2863 = vmatpush.bf16.msra.mxu0 %v2255
    %2864 = vmatpush.bf16.msra.mxu0 %v2252
    %2865 = vmatpush.bf16.msra.mxu0 %v2249
    %2866 = vmatpush.bf16.msra.mxu0 %v2246
    %2867 = vmatpush.bf16.msra.mxu0 %v2243
    %2868 = vmatpush.bf16.msra.mxu0 %v2240
    %2869 = vmatpush.bf16.msra.mxu0 %v2237
    %2870 = vmatpush.bf16.msra.mxu0 %v2234
    %2871 = vmatmul.bf16.gmra.mxu0 %v2849
    %v2872 = vpop.f32.mrf.mxu0
    %v2873 = vadd.f32 0.0, %v2872
    %v2874 = vpop.f32.mrf.mxu0
    %2875 = vdwg.mxu0
    %2876 = vmatpush.bf16.msra.mxu0 %v2256
    %2877 = vmatpush.bf16.msra.mxu0 %v2253
    %2878 = vmatpush.bf16.msra.mxu0 %v2250
    %2879 = vmatpush.bf16.msra.mxu0 %v2247
    %2880 = vmatpush.bf16.msra.mxu0 %v2244
    %2881 = vmatpush.bf16.msra.mxu0 %v2241
    %2882 = vmatpush.bf16.msra.mxu0 %v2238
    %2883 = vmatpush.bf16.msra.mxu0 %v2235
    %2884 = vmatmul.bf16.gmra.mxu0 %v2849
    %v2885 = vpop.f32.mrf.mxu0
    %v2886 = vadd.f32 0.0, %v2885
    %v2887 = vpop.f32.mrf.mxu0
    %2888 = vdwg.mxu0
    %v2891 = vrot.slane %v2873, 7
    %v2892 = vsel %vm267, %v2860, %v2891
    %v2894 = vadd.f32 %v2848, %v2892
    %v2895 = vxor.u32 %v2894, 2147483648
    %v2896 = vmul.f32 %v2895, 1.442695
    %v2897 = vpow.pop %v2896
    %v2898 = vadd.f32 %v2897, 1.0
    %v2899 = vrcp.pop %v2898
    %v2900 = vmul.f32 %v2898, %v2899
    %v2901 = vsub.f32 1.0, %v2900
    %v2902 = vmul.f32 %v2899, %v2901
    %v2903 = vadd.f32 %v2899, %v2902
    %vm2904 = vweird.f32 %v2898
    %vm2905 = vweird.f32 %v2899
    %vm2906 = vmor %vm2904, %vm2905
    %v2907 = vsel %vm2906, %v2899, %v2903
    %v2908 = vand.u32 2147483647, %v2898
    %vm2909 = vcmp.eq.f32.partialorder %v2908, 8.507059e+37
    %v2910 = vand.u32 %v2898, 2147483648
    %v2911 = vor.u32 1.1754944e-38, %v2910
    %v2912 = vsel %vm2909, %v2911, %v2907
    %v2913 = vmul.f32 1.0, %v2912
    %v2914 = vadd.f32 %v2886, %v2345
    %v2915 = vmul.f32 %v2913, %v2914
    %v2917 = vrot.slane %v2848, 2
    %v2919 = vadd.f32 %v2917, %v2915
    %v2920 = vtanh.pop %v2919
    %v2922 = vrot.slane %v2913, 1
    %v2924 = vsub.f32 1.0, %v2922
    %v2925 = vmul.f32 %v2924, %v2920
    %v2926 = vmul.f32 %v2922, %v2846
    %v2927 = vadd.f32 %v2925, %v2926
    %2928 = vst [vmem:[#allocation3 + $0x7] sm:$0x1] %v2927
    %s2929 = scalar_lea.vmem %s3, 12
    %v2930 = vld [vmem:[%s2929] sm:$0xf]
    %v2931 = vld [vmem:[#allocation3] sm:$0xff]
    %v2932 = vpack.c.bf16 %v2931, %v2931
    %s2933 = scalar_lea.vmem [#allocation4], 384
    %v2934 = vld [vmem:[%s2933] sm:$0xff]
    %v2935 = vld [vmem:[%s2933 + $0x8] sm:$0xf]
    %v2936 = vld [vmem:[%s2933 + $0xc] sm:$0xff]
    %v2937 = vld [vmem:[%s2933 + $0x14] sm:$0xf]
    %v2938 = vld [vmem:[%s2933 + $0x18] sm:$0xff]
    %v2939 = vld [vmem:[%s2933 + $0x20] sm:$0xf]
    %v2940 = vld [vmem:[%s2933 + $0x24] sm:$0xff]
    %v2941 = vld [vmem:[%s2933 + $0x2c] sm:$0xf]
    %v2942 = vld [vmem:[%s2933 + $0x30] sm:$0xff]
    %v2943 = vld [vmem:[%s2933 + $0x38] sm:$0xf]
    %v2944 = vld [vmem:[%s2933 + $0x3c] sm:$0xff]
    %v2945 = vld [vmem:[%s2933 + $0x44] sm:$0xf]
    %v2946 = vld [vmem:[%s2933 + $0x48] sm:$0xff]
    %v2947 = vld [vmem:[%s2933 + $0x50] sm:$0xf]
    %v2948 = vld [vmem:[%s2933 + $0x54] sm:$0xff]
    %v2949 = vld [vmem:[%s2933 + $0x5c] sm:$0xf]
    %v2950 = vld [vmem:[%s2933 + $0x60] sm:$0xff]
    %v2951 = vld [vmem:[%s2933 + $0x68] sm:$0xf]
    %v2952 = vld [vmem:[%s2933 + $0x6c] sm:$0xff]
    %v2953 = vld [vmem:[%s2933 + $0x74] sm:$0xf]
    %v2954 = vld [vmem:[%s2933 + $0x78] sm:$0xff]
    %v2955 = vld [vmem:[%s2933 + $0x80] sm:$0xf]
    %v2956 = vld [vmem:[%s2933 + $0x84] sm:$0xff]
    %v2957 = vld [vmem:[%s2933 + $0x8c] sm:$0xf]
    %v2958 = vld [vmem:[%s2933 + $0x90] sm:$0xff]
    %v2959 = vld [vmem:[%s2933 + $0x98] sm:$0xf]
    %v2960 = vld [vmem:[%s2933 + $0x9c] sm:$0xff]
    %v2961 = vld [vmem:[%s2933 + $0xa4] sm:$0xf]
    %v2962 = vld [vmem:[%s2933 + $0xa8] sm:$0xff]
    %v2963 = vld [vmem:[%s2933 + $0xb0] sm:$0xf]
    %v2964 = vld [vmem:[%s2933 + $0xb4] sm:$0xff]
    %v2965 = vld [vmem:[%s2933 + $0xbc] sm:$0xf]
    %v2967 = vperm.slane %v2930, 0
    %v2968 = vperm.slane %v2930, 1
    %v2969 = vperm.slane %v2930, 2
    %v3005 = vunpack.c.l.b16 %v2934
    %v3006 = vunpack.c.h.b16 %v2934
    %v3007 = vunpack.c.l.b16 %v2935
    %v3008 = vunpack.c.l.b16 %v2936
    %v3009 = vunpack.c.h.b16 %v2936
    %v3010 = vunpack.c.l.b16 %v2937
    %v3011 = vunpack.c.l.b16 %v2938
    %v3012 = vunpack.c.h.b16 %v2938
    %v3013 = vunpack.c.l.b16 %v2939
    %v3014 = vunpack.c.l.b16 %v2940
    %v3015 = vunpack.c.h.b16 %v2940
    %v3016 = vunpack.c.l.b16 %v2941
    %v3017 = vunpack.c.l.b16 %v2942
    %v3018 = vunpack.c.h.b16 %v2942
    %v3019 = vunpack.c.l.b16 %v2943
    %v3020 = vunpack.c.l.b16 %v2944
    %v3021 = vunpack.c.h.b16 %v2944
    %v3022 = vunpack.c.l.b16 %v2945
    %v3023 = vunpack.c.l.b16 %v2946
    %v3024 = vunpack.c.h.b16 %v2946
    %v3025 = vunpack.c.l.b16 %v2947
    %v3026 = vunpack.c.l.b16 %v2948
    %v3027 = vunpack.c.h.b16 %v2948
    %v3028 = vunpack.c.l.b16 %v2949
    %v3029 = vunpack.c.l.b16 %v2950
    %v3030 = vunpack.c.h.b16 %v2950
    %v3031 = vunpack.c.l.b16 %v2951
    %v3032 = vunpack.c.l.b16 %v2952
    %v3033 = vunpack.c.h.b16 %v2952
    %v3034 = vunpack.c.l.b16 %v2953
    %v3035 = vunpack.c.l.b16 %v2954
    %v3036 = vunpack.c.h.b16 %v2954
    %v3037 = vunpack.c.l.b16 %v2955
    %v3038 = vunpack.c.l.b16 %v2956
    %v3039 = vunpack.c.h.b16 %v2956
    %v3040 = vunpack.c.l.b16 %v2957
    %v3041 = vunpack.c.l.b16 %v2958
    %v3042 = vunpack.c.h.b16 %v2958
    %v3043 = vunpack.c.l.b16 %v2959
    %v3044 = vunpack.c.l.b16 %v2960
    %v3045 = vunpack.c.h.b16 %v2960
    %v3046 = vunpack.c.l.b16 %v2961
    %v3047 = vunpack.c.l.b16 %v2962
    %v3048 = vunpack.c.h.b16 %v2962
    %v3049 = vunpack.c.l.b16 %v2963
    %v3050 = vunpack.c.l.b16 %v2964
    %v3051 = vunpack.c.h.b16 %v2964
    %v3052 = vunpack.c.l.b16 %v2965
    %v3053 = vpack.c.b16 %v3008, %v3005
    %v3054 = vpack.c.b16 %v3009, %v3006
    %v3055 = vpack.c.b16 %v3010, %v3007
    %v3056 = vpack.c.b16 %v3014, %v3011
    %v3057 = vpack.c.b16 %v3015, %v3012
    %v3058 = vpack.c.b16 %v3016, %v3013
    %v3059 = vpack.c.b16 %v3020, %v3017
    %v3060 = vpack.c.b16 %v3021, %v3018
    %v3061 = vpack.c.b16 %v3022, %v3019
    %v3062 = vpack.c.b16 %v3026, %v3023
    %v3063 = vpack.c.b16 %v3027, %v3024
    %v3064 = vpack.c.b16 %v3028, %v3025
    %v3065 = vpack.c.b16 %v3032, %v3029
    %v3066 = vpack.c.b16 %v3033, %v3030
    %v3067 = vpack.c.b16 %v3034, %v3031
    %v3068 = vpack.c.b16 %v3038, %v3035
    %v3069 = vpack.c.b16 %v3039, %v3036
    %v3070 = vpack.c.b16 %v3040, %v3037
    %v3071 = vpack.c.b16 %v3044, %v3041
    %v3072 = vpack.c.b16 %v3045, %v3042
    %v3073 = vpack.c.b16 %v3046, %v3043
    %v3074 = vpack.c.b16 %v3050, %v3047
    %v3075 = vpack.c.b16 %v3051, %v3048
    %v3076 = vpack.c.b16 %v3052, %v3049
    %3101 = vmatpush.bf16.msra.mxu0 %v3074
    %3102 = vmatpush.bf16.msra.mxu0 %v3071
    %3103 = vmatpush.bf16.msra.mxu0 %v3068
    %3104 = vmatpush.bf16.msra.mxu0 %v3065
    %3105 = vmatpush.bf16.msra.mxu0 %v3062
    %3106 = vmatpush.bf16.msra.mxu0 %v3059
    %3107 = vmatpush.bf16.msra.mxu0 %v3056
    %3108 = vmatpush.bf16.msra.mxu0 %v3053
    %3109 = vmatmul.bf16.gmra.mxu0 %v2932
    %v3110 = vpop.f32.mrf.mxu0
    %v3111 = vadd.f32 %v2967, %v3110
    %v3112 = vpop.f32.mrf.mxu0
    %3113 = vdwg.mxu0
    %3114 = vmatpush.bf16.msra.mxu0 %v3075
    %3115 = vmatpush.bf16.msra.mxu0 %v3072
    %3116 = vmatpush.bf16.msra.mxu0 %v3069
    %3117 = vmatpush.bf16.msra.mxu0 %v3066
    %3118 = vmatpush.bf16.msra.mxu0 %v3063
    %3119 = vmatpush.bf16.msra.mxu0 %v3060
    %3120 = vmatpush.bf16.msra.mxu0 %v3057
    %3121 = vmatpush.bf16.msra.mxu0 %v3054
    %3122 = vmatmul.bf16.gmra.mxu0 %v2932
    %v3123 = vpop.f32.mrf.mxu0
    %v3124 = vadd.f32 %v2968, %v3123
    %v3125 = vpop.f32.mrf.mxu0
    %3126 = vdwg.mxu0
    %3127 = vmatpush.bf16.msra.mxu0 %v3076
    %3128 = vmatpush.bf16.msra.mxu0 %v3073
    %3129 = vmatpush.bf16.msra.mxu0 %v3070
    %3130 = vmatpush.bf16.msra.mxu0 %v3067
    %3131 = vmatpush.bf16.msra.mxu0 %v3064
    %3132 = vmatpush.bf16.msra.mxu0 %v3061
    %3133 = vmatpush.bf16.msra.mxu0 %v3058
    %3134 = vmatpush.bf16.msra.mxu0 %v3055
    %3135 = vmatmul.bf16.gmra.mxu0 %v2932
    %v3136 = vpop.f32.mrf.mxu0
    %v3137 = vadd.f32 %v2969, %v3136
    %v3138 = vpop.f32.mrf.mxu0
    %3139 = vdwg.mxu0
    %s3140 = scalar_lea.vmem [#allocation7], 576
    %v3141 = vld [vmem:[%s3140] sm:$0xff]
    %v3142 = vld [vmem:[%s3140 + $0x8] sm:$0xf]
    %v3143 = vld [vmem:[%s3140 + $0xc] sm:$0xff]
    %v3144 = vld [vmem:[%s3140 + $0x14] sm:$0xf]
    %v3145 = vld [vmem:[%s3140 + $0x18] sm:$0xff]
    %v3146 = vld [vmem:[%s3140 + $0x20] sm:$0xf]
    %v3147 = vld [vmem:[%s3140 + $0x24] sm:$0xff]
    %v3148 = vld [vmem:[%s3140 + $0x2c] sm:$0xf]
    %v3149 = vld [vmem:[%s3140 + $0x30] sm:$0xff]
    %v3150 = vld [vmem:[%s3140 + $0x38] sm:$0xf]
    %v3151 = vld [vmem:[%s3140 + $0x3c] sm:$0xff]
    %v3152 = vld [vmem:[%s3140 + $0x44] sm:$0xf]
    %v3153 = vld [vmem:[%s3140 + $0x48] sm:$0xff]
    %v3154 = vld [vmem:[%s3140 + $0x50] sm:$0xf]
    %v3155 = vld [vmem:[%s3140 + $0x54] sm:$0xff]
    %v3156 = vld [vmem:[%s3140 + $0x5c] sm:$0xf]
    %v3157 = vld [vmem:[%s3140 + $0x60] sm:$0xff]
    %v3158 = vld [vmem:[%s3140 + $0x68] sm:$0xf]
    %v3159 = vld [vmem:[%s3140 + $0x6c] sm:$0xff]
    %v3160 = vld [vmem:[%s3140 + $0x74] sm:$0xf]
    %v3161 = vld [vmem:[%s3140 + $0x78] sm:$0xff]
    %v3162 = vld [vmem:[%s3140 + $0x80] sm:$0xf]
    %v3163 = vld [vmem:[%s3140 + $0x84] sm:$0xff]
    %v3164 = vld [vmem:[%s3140 + $0x8c] sm:$0xf]
    %v3165 = vld [vmem:[%s3140 + $0x90] sm:$0xff]
    %v3166 = vld [vmem:[%s3140 + $0x98] sm:$0xf]
    %v3167 = vld [vmem:[%s3140 + $0x9c] sm:$0xff]
    %v3168 = vld [vmem:[%s3140 + $0xa4] sm:$0xf]
    %v3169 = vld [vmem:[%s3140 + $0xa8] sm:$0xff]
    %v3170 = vld [vmem:[%s3140 + $0xb0] sm:$0xf]
    %v3171 = vld [vmem:[%s3140 + $0xb4] sm:$0xff]
    %v3172 = vld [vmem:[%s3140 + $0xbc] sm:$0xf]
    %3173 = vst [vmem:[#allocation2] sm:$0xff] %v3111
    %3174 = vst [vmem:[#allocation2 + $0x8] sm:$0xff] %v3124
    %3175 = vst [vmem:[#allocation2 + $0x10] sm:$0xff] %v3137
    %v3176 = vld [vmem:[#allocation2] ss:$8 sm:$0x7]
    %v3209 = vunpack.c.l.b16 %v3141
    %v3210 = vunpack.c.h.b16 %v3141
    %v3211 = vunpack.c.l.b16 %v3142
    %v3212 = vunpack.c.l.b16 %v3143
    %v3213 = vunpack.c.h.b16 %v3143
    %v3214 = vunpack.c.l.b16 %v3144
    %v3215 = vunpack.c.l.b16 %v3145
    %v3216 = vunpack.c.h.b16 %v3145
    %v3217 = vunpack.c.l.b16 %v3146
    %v3218 = vunpack.c.l.b16 %v3147
    %v3219 = vunpack.c.h.b16 %v3147
    %v3220 = vunpack.c.l.b16 %v3148
    %v3221 = vunpack.c.l.b16 %v3149
    %v3222 = vunpack.c.h.b16 %v3149
    %v3223 = vunpack.c.l.b16 %v3150
    %v3224 = vunpack.c.l.b16 %v3151
    %v3225 = vunpack.c.h.b16 %v3151
    %v3226 = vunpack.c.l.b16 %v3152
    %v3227 = vunpack.c.l.b16 %v3153
    %v3228 = vunpack.c.h.b16 %v3153
    %v3229 = vunpack.c.l.b16 %v3154
    %v3230 = vunpack.c.l.b16 %v3155
    %v3231 = vunpack.c.h.b16 %v3155
    %v3232 = vunpack.c.l.b16 %v3156
    %v3233 = vunpack.c.l.b16 %v3157
    %v3234 = vunpack.c.h.b16 %v3157
    %v3235 = vunpack.c.l.b16 %v3158
    %v3236 = vunpack.c.l.b16 %v3159
    %v3237 = vunpack.c.h.b16 %v3159
    %v3238 = vunpack.c.l.b16 %v3160
    %v3239 = vunpack.c.l.b16 %v3161
    %v3240 = vunpack.c.h.b16 %v3161
    %v3241 = vunpack.c.l.b16 %v3162
    %v3242 = vunpack.c.l.b16 %v3163
    %v3243 = vunpack.c.h.b16 %v3163
    %v3244 = vunpack.c.l.b16 %v3164
    %v3245 = vunpack.c.l.b16 %v3165
    %v3246 = vunpack.c.h.b16 %v3165
    %v3247 = vunpack.c.l.b16 %v3166
    %v3248 = vunpack.c.l.b16 %v3167
    %v3249 = vunpack.c.h.b16 %v3167
    %v3250 = vunpack.c.l.b16 %v3168
    %v3251 = vunpack.c.l.b16 %v3169
    %v3252 = vunpack.c.h.b16 %v3169
    %v3253 = vunpack.c.l.b16 %v3170
    %v3254 = vunpack.c.l.b16 %v3171
    %v3255 = vunpack.c.h.b16 %v3171
    %v3256 = vunpack.c.l.b16 %v3172
    %v3257 = vpack.c.b16 %v3212, %v3209
    %v3258 = vpack.c.b16 %v3213, %v3210
    %v3259 = vpack.c.b16 %v3214, %v3211
    %v3260 = vpack.c.b16 %v3218, %v3215
    %v3261 = vpack.c.b16 %v3219, %v3216
    %v3262 = vpack.c.b16 %v3220, %v3217
    %v3263 = vpack.c.b16 %v3224, %v3221
    %v3264 = vpack.c.b16 %v3225, %v3222
    %v3265 = vpack.c.b16 %v3226, %v3223
    %v3266 = vpack.c.b16 %v3230, %v3227
    %v3267 = vpack.c.b16 %v3231, %v3228
    %v3268 = vpack.c.b16 %v3232, %v3229
    %v3269 = vpack.c.b16 %v3236, %v3233
    %v3270 = vpack.c.b16 %v3237, %v3234
    %v3271 = vpack.c.b16 %v3238, %v3235
    %v3272 = vpack.c.b16 %v3242, %v3239
    %v3273 = vpack.c.b16 %v3243, %v3240
    %v3274 = vpack.c.b16 %v3244, %v3241
    %v3275 = vpack.c.b16 %v3248, %v3245
    %v3276 = vpack.c.b16 %v3249, %v3246
    %v3277 = vpack.c.b16 %v3250, %v3247
    %v3278 = vpack.c.b16 %v3254, %v3251
    %v3279 = vpack.c.b16 %v3255, %v3252
    %v3280 = vpack.c.b16 %v3256, %v3253
    %3305 = vmatpush.bf16.msra.mxu0 %v3278
    %3306 = vmatpush.bf16.msra.mxu0 %v3275
    %3307 = vmatpush.bf16.msra.mxu0 %v3272
    %3308 = vmatpush.bf16.msra.mxu0 %v3269
    %3309 = vmatpush.bf16.msra.mxu0 %v3266
    %3310 = vmatpush.bf16.msra.mxu0 %v3263
    %3311 = vmatpush.bf16.msra.mxu0 %v3260
    %3312 = vmatpush.bf16.msra.mxu0 %v3257
    %3313 = vmatmul.bf16.gmra.mxu0 0
    %v3314 = vpop.f32.mrf.mxu0
    %v3315 = vadd.f32 0.0, %v3314
    %v3316 = vpop.f32.mrf.mxu0
    %3317 = vdwg.mxu0
    %3318 = vmatpush.bf16.msra.mxu0 %v3279
    %3319 = vmatpush.bf16.msra.mxu0 %v3276
    %3320 = vmatpush.bf16.msra.mxu0 %v3273
    %3321 = vmatpush.bf16.msra.mxu0 %v3270
    %3322 = vmatpush.bf16.msra.mxu0 %v3267
    %3323 = vmatpush.bf16.msra.mxu0 %v3264
    %3324 = vmatpush.bf16.msra.mxu0 %v3261
    %3325 = vmatpush.bf16.msra.mxu0 %v3258
    %3326 = vmatmul.bf16.gmra.mxu0 0
    %v3327 = vpop.f32.mrf.mxu0
    %v3328 = vadd.f32 0.0, %v3327
    %v3329 = vpop.f32.mrf.mxu0
    %3330 = vdwg.mxu0
    %3331 = vmatpush.bf16.msra.mxu0 %v3280
    %3332 = vmatpush.bf16.msra.mxu0 %v3277
    %3333 = vmatpush.bf16.msra.mxu0 %v3274
    %3334 = vmatpush.bf16.msra.mxu0 %v3271
    %3335 = vmatpush.bf16.msra.mxu0 %v3268
    %3336 = vmatpush.bf16.msra.mxu0 %v3265
    %3337 = vmatpush.bf16.msra.mxu0 %v3262
    %3338 = vmatpush.bf16.msra.mxu0 %v3259
    %3339 = vmatmul.bf16.gmra.mxu0 0
    %v3340 = vpop.f32.mrf.mxu0
    %v3341 = vadd.f32 0.0, %v3340
    %v3342 = vpop.f32.mrf.mxu0
    %3343 = vdwg.mxu0
    %v3346 = vrot.slane %v3328, 7
    %v3347 = vsel %vm267, %v3315, %v3346
    %v3349 = vadd.f32 %v3176, %v3347
    %v3350 = vxor.u32 %v3349, 2147483648
    %v3351 = vmul.f32 %v3350, 1.442695
    %v3352 = vpow.pop %v3351
    %v3353 = vadd.f32 %v3352, 1.0
    %v3354 = vrcp.pop %v3353
    %v3355 = vmul.f32 %v3353, %v3354
    %v3356 = vsub.f32 1.0, %v3355
    %v3357 = vmul.f32 %v3354, %v3356
    %v3358 = vadd.f32 %v3354, %v3357
    %vm3359 = vweird.f32 %v3353
    %vm3360 = vweird.f32 %v3354
    %vm3361 = vmor %vm3359, %vm3360
    %v3362 = vsel %vm3361, %v3354, %v3358
    %v3363 = vand.u32 2147483647, %v3353
    %vm3364 = vcmp.eq.f32.partialorder %v3363, 8.507059e+37
    %v3365 = vand.u32 %v3353, 2147483648
    %v3366 = vor.u32 1.1754944e-38, %v3365
    %v3367 = vsel %vm3364, %v3366, %v3362
    %v3368 = vmul.f32 1.0, %v3367
    %v3369 = vperm.slane %v2930, 3
    %v3371 = vadd.f32 %v3341, %v3369
    %v3372 = vmul.f32 %v3368, %v3371
    %v3374 = vrot.slane %v3176, 2
    %v3376 = vadd.f32 %v3374, %v3372
    %v3377 = vtanh.pop %v3376
    %v3379 = vrot.slane %v3368, 1
    %v3381 = vsub.f32 1.0, %v3379
    %v3382 = vmul.f32 %v3381, %v3377
    %v3383 = vmul.f32 %v3379, 0.0
    %v3384 = vadd.f32 %v3382, %v3383
    %3385 = vst [vmem:[#allocation3] sm:$0x1] %v3384
    %v3386 = vld [vmem:[%s308] ss:$8 sm:$0x7]
    %v3387 = vpack.c.bf16 %v3384, %v3384
    %3388 = vmatpush.bf16.msra.mxu0 %v3278
    %3389 = vmatpush.bf16.msra.mxu0 %v3275
    %3390 = vmatpush.bf16.msra.mxu0 %v3272
    %3391 = vmatpush.bf16.msra.mxu0 %v3269
    %3392 = vmatpush.bf16.msra.mxu0 %v3266
    %3393 = vmatpush.bf16.msra.mxu0 %v3263
    %3394 = vmatpush.bf16.msra.mxu0 %v3260
    %3395 = vmatpush.bf16.msra.mxu0 %v3257
    %3396 = vmatmul.bf16.gmra.mxu0 %v3387
    %v3397 = vpop.f32.mrf.mxu0
    %v3398 = vadd.f32 0.0, %v3397
    %v3399 = vpop.f32.mrf.mxu0
    %3400 = vdwg.mxu0
    %3401 = vmatpush.bf16.msra.mxu0 %v3279
    %3402 = vmatpush.bf16.msra.mxu0 %v3276
    %3403 = vmatpush.bf16.msra.mxu0 %v3273
    %3404 = vmatpush.bf16.msra.mxu0 %v3270
    %3405 = vmatpush.bf16.msra.mxu0 %v3267
    %3406 = vmatpush.bf16.msra.mxu0 %v3264
    %3407 = vmatpush.bf16.msra.mxu0 %v3261
    %3408 = vmatpush.bf16.msra.mxu0 %v3258
    %3409 = vmatmul.bf16.gmra.mxu0 %v3387
    %v3410 = vpop.f32.mrf.mxu0
    %v3411 = vadd.f32 0.0, %v3410
    %v3412 = vpop.f32.mrf.mxu0
    %3413 = vdwg.mxu0
    %3414 = vmatpush.bf16.msra.mxu0 %v3280
    %3415 = vmatpush.bf16.msra.mxu0 %v3277
    %3416 = vmatpush.bf16.msra.mxu0 %v3274
    %3417 = vmatpush.bf16.msra.mxu0 %v3271
    %3418 = vmatpush.bf16.msra.mxu0 %v3268
    %3419 = vmatpush.bf16.msra.mxu0 %v3265
    %3420 = vmatpush.bf16.msra.mxu0 %v3262
    %3421 = vmatpush.bf16.msra.mxu0 %v3259
    %3422 = vmatmul.bf16.gmra.mxu0 %v3387
    %v3423 = vpop.f32.mrf.mxu0
    %v3424 = vadd.f32 0.0, %v3423
    %v3425 = vpop.f32.mrf.mxu0
    %3426 = vdwg.mxu0
    %v3429 = vrot.slane %v3411, 7
    %v3430 = vsel %vm267, %v3398, %v3429
    %v3432 = vadd.f32 %v3386, %v3430
    %v3433 = vxor.u32 %v3432, 2147483648
    %v3434 = vmul.f32 %v3433, 1.442695
    %v3435 = vpow.pop %v3434
    %v3436 = vadd.f32 %v3435, 1.0
    %v3437 = vrcp.pop %v3436
    %v3438 = vmul.f32 %v3436, %v3437
    %v3439 = vsub.f32 1.0, %v3438
    %v3440 = vmul.f32 %v3437, %v3439
    %v3441 = vadd.f32 %v3437, %v3440
    %vm3442 = vweird.f32 %v3436
    %vm3443 = vweird.f32 %v3437
    %vm3444 = vmor %vm3442, %vm3443
    %v3445 = vsel %vm3444, %v3437, %v3441
    %v3446 = vand.u32 2147483647, %v3436
    %vm3447 = vcmp.eq.f32.partialorder %v3446, 8.507059e+37
    %v3448 = vand.u32 %v3436, 2147483648
    %v3449 = vor.u32 1.1754944e-38, %v3448
    %v3450 = vsel %vm3447, %v3449, %v3445
    %v3451 = vmul.f32 1.0, %v3450
    %v3452 = vadd.f32 %v3424, %v3369
    %v3453 = vmul.f32 %v3451, %v3452
    %v3455 = vrot.slane %v3386, 2
    %v3457 = vadd.f32 %v3455, %v3453
    %v3458 = vtanh.pop %v3457
    %v3460 = vrot.slane %v3451, 1
    %v3462 = vsub.f32 1.0, %v3460
    %v3463 = vmul.f32 %v3462, %v3458
    %v3464 = vmul.f32 %v3460, %v3384
    %v3465 = vadd.f32 %v3463, %v3464
    %3466 = vst [vmem:[#allocation3 + $0x1] sm:$0x1] %v3465
    %v3467 = vld [vmem:[%s390] ss:$8 sm:$0x7]
    %v3468 = vpack.c.bf16 %v3465, %v3465
    %3469 = vmatpush.bf16.msra.mxu0 %v3278
    %3470 = vmatpush.bf16.msra.mxu0 %v3275
    %3471 = vmatpush.bf16.msra.mxu0 %v3272
    %3472 = vmatpush.bf16.msra.mxu0 %v3269
    %3473 = vmatpush.bf16.msra.mxu0 %v3266
    %3474 = vmatpush.bf16.msra.mxu0 %v3263
    %3475 = vmatpush.bf16.msra.mxu0 %v3260
    %3476 = vmatpush.bf16.msra.mxu0 %v3257
    %3477 = vmatmul.bf16.gmra.mxu0 %v3468
    %v3478 = vpop.f32.mrf.mxu0
    %v3479 = vadd.f32 0.0, %v3478
    %v3480 = vpop.f32.mrf.mxu0
    %3481 = vdwg.mxu0
    %3482 = vmatpush.bf16.msra.mxu0 %v3279
    %3483 = vmatpush.bf16.msra.mxu0 %v3276
    %3484 = vmatpush.bf16.msra.mxu0 %v3273
    %3485 = vmatpush.bf16.msra.mxu0 %v3270
    %3486 = vmatpush.bf16.msra.mxu0 %v3267
    %3487 = vmatpush.bf16.msra.mxu0 %v3264
    %3488 = vmatpush.bf16.msra.mxu0 %v3261
    %3489 = vmatpush.bf16.msra.mxu0 %v3258
    %3490 = vmatmul.bf16.gmra.mxu0 %v3468
    %v3491 = vpop.f32.mrf.mxu0
    %v3492 = vadd.f32 0.0, %v3491
    %v3493 = vpop.f32.mrf.mxu0
    %3494 = vdwg.mxu0
    %3495 = vmatpush.bf16.msra.mxu0 %v3280
    %3496 = vmatpush.bf16.msra.mxu0 %v3277
    %3497 = vmatpush.bf16.msra.mxu0 %v3274
    %3498 = vmatpush.bf16.msra.mxu0 %v3271
    %3499 = vmatpush.bf16.msra.mxu0 %v3268
    %3500 = vmatpush.bf16.msra.mxu0 %v3265
    %3501 = vmatpush.bf16.msra.mxu0 %v3262
    %3502 = vmatpush.bf16.msra.mxu0 %v3259
    %3503 = vmatmul.bf16.gmra.mxu0 %v3468
    %v3504 = vpop.f32.mrf.mxu0
    %v3505 = vadd.f32 0.0, %v3504
    %v3506 = vpop.f32.mrf.mxu0
    %3507 = vdwg.mxu0
    %v3510 = vrot.slane %v3492, 7
    %v3511 = vsel %vm267, %v3479, %v3510
    %v3513 = vadd.f32 %v3467, %v3511
    %v3514 = vxor.u32 %v3513, 2147483648
    %v3515 = vmul.f32 %v3514, 1.442695
    %v3516 = vpow.pop %v3515
    %v3517 = vadd.f32 %v3516, 1.0
    %v3518 = vrcp.pop %v3517
    %v3519 = vmul.f32 %v3517, %v3518
    %v3520 = vsub.f32 1.0, %v3519
    %v3521 = vmul.f32 %v3518, %v3520
    %v3522 = vadd.f32 %v3518, %v3521
    %vm3523 = vweird.f32 %v3517
    %vm3524 = vweird.f32 %v3518
    %vm3525 = vmor %vm3523, %vm3524
    %v3526 = vsel %vm3525, %v3518, %v3522
    %v3527 = vand.u32 2147483647, %v3517
    %vm3528 = vcmp.eq.f32.partialorder %v3527, 8.507059e+37
    %v3529 = vand.u32 %v3517, 2147483648
    %v3530 = vor.u32 1.1754944e-38, %v3529
    %v3531 = vsel %vm3528, %v3530, %v3526
    %v3532 = vmul.f32 1.0, %v3531
    %v3533 = vadd.f32 %v3505, %v3369
    %v3534 = vmul.f32 %v3532, %v3533
    %v3536 = vrot.slane %v3467, 2
    %v3538 = vadd.f32 %v3536, %v3534
    %v3539 = vtanh.pop %v3538
    %v3541 = vrot.slane %v3532, 1
    %v3543 = vsub.f32 1.0, %v3541
    %v3544 = vmul.f32 %v3543, %v3539
    %v3545 = vmul.f32 %v3541, %v3465
    %v3546 = vadd.f32 %v3544, %v3545
    %3547 = vst [vmem:[#allocation3 + $0x2] sm:$0x1] %v3546
    %v3548 = vld [vmem:[%s472] ss:$8 sm:$0x7]
    %v3549 = vpack.c.bf16 %v3546, %v3546
    %3550 = vmatpush.bf16.msra.mxu0 %v3278
    %3551 = vmatpush.bf16.msra.mxu0 %v3275
    %3552 = vmatpush.bf16.msra.mxu0 %v3272
    %3553 = vmatpush.bf16.msra.mxu0 %v3269
    %3554 = vmatpush.bf16.msra.mxu0 %v3266
    %3555 = vmatpush.bf16.msra.mxu0 %v3263
    %3556 = vmatpush.bf16.msra.mxu0 %v3260
    %3557 = vmatpush.bf16.msra.mxu0 %v3257
    %3558 = vmatmul.bf16.gmra.mxu0 %v3549
    %v3559 = vpop.f32.mrf.mxu0
    %v3560 = vadd.f32 0.0, %v3559
    %v3561 = vpop.f32.mrf.mxu0
    %3562 = vdwg.mxu0
    %3563 = vmatpush.bf16.msra.mxu0 %v3279
    %3564 = vmatpush.bf16.msra.mxu0 %v3276
    %3565 = vmatpush.bf16.msra.mxu0 %v3273
    %3566 = vmatpush.bf16.msra.mxu0 %v3270
    %3567 = vmatpush.bf16.msra.mxu0 %v3267
    %3568 = vmatpush.bf16.msra.mxu0 %v3264
    %3569 = vmatpush.bf16.msra.mxu0 %v3261
    %3570 = vmatpush.bf16.msra.mxu0 %v3258
    %3571 = vmatmul.bf16.gmra.mxu0 %v3549
    %v3572 = vpop.f32.mrf.mxu0
    %v3573 = vadd.f32 0.0, %v3572
    %v3574 = vpop.f32.mrf.mxu0
    %3575 = vdwg.mxu0
    %3576 = vmatpush.bf16.msra.mxu0 %v3280
    %3577 = vmatpush.bf16.msra.mxu0 %v3277
    %3578 = vmatpush.bf16.msra.mxu0 %v3274
    %3579 = vmatpush.bf16.msra.mxu0 %v3271
    %3580 = vmatpush.bf16.msra.mxu0 %v3268
    %3581 = vmatpush.bf16.msra.mxu0 %v3265
    %3582 = vmatpush.bf16.msra.mxu0 %v3262
    %3583 = vmatpush.bf16.msra.mxu0 %v3259
    %3584 = vmatmul.bf16.gmra.mxu0 %v3549
    %v3585 = vpop.f32.mrf.mxu0
    %v3586 = vadd.f32 0.0, %v3585
    %v3587 = vpop.f32.mrf.mxu0
    %3588 = vdwg.mxu0
    %v3591 = vrot.slane %v3573, 7
    %v3592 = vsel %vm267, %v3560, %v3591
    %v3594 = vadd.f32 %v3548, %v3592
    %v3595 = vxor.u32 %v3594, 2147483648
    %v3596 = vmul.f32 %v3595, 1.442695
    %v3597 = vpow.pop %v3596
    %v3598 = vadd.f32 %v3597, 1.0
    %v3599 = vrcp.pop %v3598
    %v3600 = vmul.f32 %v3598, %v3599
    %v3601 = vsub.f32 1.0, %v3600
    %v3602 = vmul.f32 %v3599, %v3601
    %v3603 = vadd.f32 %v3599, %v3602
    %vm3604 = vweird.f32 %v3598
    %vm3605 = vweird.f32 %v3599
    %vm3606 = vmor %vm3604, %vm3605
    %v3607 = vsel %vm3606, %v3599, %v3603
    %v3608 = vand.u32 2147483647, %v3598
    %vm3609 = vcmp.eq.f32.partialorder %v3608, 8.507059e+37
    %v3610 = vand.u32 %v3598, 2147483648
    %v3611 = vor.u32 1.1754944e-38, %v3610
    %v3612 = vsel %vm3609, %v3611, %v3607
    %v3613 = vmul.f32 1.0, %v3612
    %v3614 = vadd.f32 %v3586, %v3369
    %v3615 = vmul.f32 %v3613, %v3614
    %v3617 = vrot.slane %v3548, 2
    %v3619 = vadd.f32 %v3617, %v3615
    %v3620 = vtanh.pop %v3619
    %v3622 = vrot.slane %v3613, 1
    %v3624 = vsub.f32 1.0, %v3622
    %v3625 = vmul.f32 %v3624, %v3620
    %v3626 = vmul.f32 %v3622, %v3546
    %v3627 = vadd.f32 %v3625, %v3626
    %3628 = vst [vmem:[#allocation3 + $0x3] sm:$0x1] %v3627
    %v3629 = vld [vmem:[%s554] ss:$8 sm:$0x7]
    %v3630 = vpack.c.bf16 %v3627, %v3627
    %3631 = vmatpush.bf16.msra.mxu0 %v3278
    %3632 = vmatpush.bf16.msra.mxu0 %v3275
    %3633 = vmatpush.bf16.msra.mxu0 %v3272
    %3634 = vmatpush.bf16.msra.mxu0 %v3269
    %3635 = vmatpush.bf16.msra.mxu0 %v3266
    %3636 = vmatpush.bf16.msra.mxu0 %v3263
    %3637 = vmatpush.bf16.msra.mxu0 %v3260
    %3638 = vmatpush.bf16.msra.mxu0 %v3257
    %3639 = vmatmul.bf16.gmra.mxu0 %v3630
    %v3640 = vpop.f32.mrf.mxu0
    %v3641 = vadd.f32 0.0, %v3640
    %v3642 = vpop.f32.mrf.mxu0
    %3643 = vdwg.mxu0
    %3644 = vmatpush.bf16.msra.mxu0 %v3279
    %3645 = vmatpush.bf16.msra.mxu0 %v3276
    %3646 = vmatpush.bf16.msra.mxu0 %v3273
    %3647 = vmatpush.bf16.msra.mxu0 %v3270
    %3648 = vmatpush.bf16.msra.mxu0 %v3267
    %3649 = vmatpush.bf16.msra.mxu0 %v3264
    %3650 = vmatpush.bf16.msra.mxu0 %v3261
    %3651 = vmatpush.bf16.msra.mxu0 %v3258
    %3652 = vmatmul.bf16.gmra.mxu0 %v3630
    %v3653 = vpop.f32.mrf.mxu0
    %v3654 = vadd.f32 0.0, %v3653
    %v3655 = vpop.f32.mrf.mxu0
    %3656 = vdwg.mxu0
    %3657 = vmatpush.bf16.msra.mxu0 %v3280
    %3658 = vmatpush.bf16.msra.mxu0 %v3277
    %3659 = vmatpush.bf16.msra.mxu0 %v3274
    %3660 = vmatpush.bf16.msra.mxu0 %v3271
    %3661 = vmatpush.bf16.msra.mxu0 %v3268
    %3662 = vmatpush.bf16.msra.mxu0 %v3265
    %3663 = vmatpush.bf16.msra.mxu0 %v3262
    %3664 = vmatpush.bf16.msra.mxu0 %v3259
    %3665 = vmatmul.bf16.gmra.mxu0 %v3630
    %v3666 = vpop.f32.mrf.mxu0
    %v3667 = vadd.f32 0.0, %v3666
    %v3668 = vpop.f32.mrf.mxu0
    %3669 = vdwg.mxu0
    %v3672 = vrot.slane %v3654, 7
    %v3673 = vsel %vm267, %v3641, %v3672
    %v3675 = vadd.f32 %v3629, %v3673
    %v3676 = vxor.u32 %v3675, 2147483648
    %v3677 = vmul.f32 %v3676, 1.442695
    %v3678 = vpow.pop %v3677
    %v3679 = vadd.f32 %v3678, 1.0
    %v3680 = vrcp.pop %v3679
    %v3681 = vmul.f32 %v3679, %v3680
    %v3682 = vsub.f32 1.0, %v3681
    %v3683 = vmul.f32 %v3680, %v3682
    %v3684 = vadd.f32 %v3680, %v3683
    %vm3685 = vweird.f32 %v3679
    %vm3686 = vweird.f32 %v3680
    %vm3687 = vmor %vm3685, %vm3686
    %v3688 = vsel %vm3687, %v3680, %v3684
    %v3689 = vand.u32 2147483647, %v3679
    %vm3690 = vcmp.eq.f32.partialorder %v3689, 8.507059e+37
    %v3691 = vand.u32 %v3679, 2147483648
    %v3692 = vor.u32 1.1754944e-38, %v3691
    %v3693 = vsel %vm3690, %v3692, %v3688
    %v3694 = vmul.f32 1.0, %v3693
    %v3695 = vadd.f32 %v3667, %v3369
    %v3696 = vmul.f32 %v3694, %v3695
    %v3698 = vrot.slane %v3629, 2
    %v3700 = vadd.f32 %v3698, %v3696
    %v3701 = vtanh.pop %v3700
    %v3703 = vrot.slane %v3694, 1
    %v3705 = vsub.f32 1.0, %v3703
    %v3706 = vmul.f32 %v3705, %v3701
    %v3707 = vmul.f32 %v3703, %v3627
    %v3708 = vadd.f32 %v3706, %v3707
    %3709 = vst [vmem:[#allocation3 + $0x4] sm:$0x1] %v3708
    %v3710 = vld [vmem:[%s636] ss:$8 sm:$0x7]
    %v3711 = vpack.c.bf16 %v3708, %v3708
    %3712 = vmatpush.bf16.msra.mxu0 %v3278
    %3713 = vmatpush.bf16.msra.mxu0 %v3275
    %3714 = vmatpush.bf16.msra.mxu0 %v3272
    %3715 = vmatpush.bf16.msra.mxu0 %v3269
    %3716 = vmatpush.bf16.msra.mxu0 %v3266
    %3717 = vmatpush.bf16.msra.mxu0 %v3263
    %3718 = vmatpush.bf16.msra.mxu0 %v3260
    %3719 = vmatpush.bf16.msra.mxu0 %v3257
    %3720 = vmatmul.bf16.gmra.mxu0 %v3711
    %v3721 = vpop.f32.mrf.mxu0
    %v3722 = vadd.f32 0.0, %v3721
    %v3723 = vpop.f32.mrf.mxu0
    %3724 = vdwg.mxu0
    %3725 = vmatpush.bf16.msra.mxu0 %v3279
    %3726 = vmatpush.bf16.msra.mxu0 %v3276
    %3727 = vmatpush.bf16.msra.mxu0 %v3273
    %3728 = vmatpush.bf16.msra.mxu0 %v3270
    %3729 = vmatpush.bf16.msra.mxu0 %v3267
    %3730 = vmatpush.bf16.msra.mxu0 %v3264
    %3731 = vmatpush.bf16.msra.mxu0 %v3261
    %3732 = vmatpush.bf16.msra.mxu0 %v3258
    %3733 = vmatmul.bf16.gmra.mxu0 %v3711
    %v3734 = vpop.f32.mrf.mxu0
    %v3735 = vadd.f32 0.0, %v3734
    %v3736 = vpop.f32.mrf.mxu0
    %3737 = vdwg.mxu0
    %3738 = vmatpush.bf16.msra.mxu0 %v3280
    %3739 = vmatpush.bf16.msra.mxu0 %v3277
    %3740 = vmatpush.bf16.msra.mxu0 %v3274
    %3741 = vmatpush.bf16.msra.mxu0 %v3271
    %3742 = vmatpush.bf16.msra.mxu0 %v3268
    %3743 = vmatpush.bf16.msra.mxu0 %v3265
    %3744 = vmatpush.bf16.msra.mxu0 %v3262
    %3745 = vmatpush.bf16.msra.mxu0 %v3259
    %3746 = vmatmul.bf16.gmra.mxu0 %v3711
    %v3747 = vpop.f32.mrf.mxu0
    %v3748 = vadd.f32 0.0, %v3747
    %v3749 = vpop.f32.mrf.mxu0
    %3750 = vdwg.mxu0
    %v3753 = vrot.slane %v3735, 7
    %v3754 = vsel %vm267, %v3722, %v3753
    %v3756 = vadd.f32 %v3710, %v3754
    %v3757 = vxor.u32 %v3756, 2147483648
    %v3758 = vmul.f32 %v3757, 1.442695
    %v3759 = vpow.pop %v3758
    %v3760 = vadd.f32 %v3759, 1.0
    %v3761 = vrcp.pop %v3760
    %v3762 = vmul.f32 %v3760, %v3761
    %v3763 = vsub.f32 1.0, %v3762
    %v3764 = vmul.f32 %v3761, %v3763
    %v3765 = vadd.f32 %v3761, %v3764
    %vm3766 = vweird.f32 %v3760
    %vm3767 = vweird.f32 %v3761
    %vm3768 = vmor %vm3766, %vm3767
    %v3769 = vsel %vm3768, %v3761, %v3765
    %v3770 = vand.u32 2147483647, %v3760
    %vm3771 = vcmp.eq.f32.partialorder %v3770, 8.507059e+37
    %v3772 = vand.u32 %v3760, 2147483648
    %v3773 = vor.u32 1.1754944e-38, %v3772
    %v3774 = vsel %vm3771, %v3773, %v3769
    %v3775 = vmul.f32 1.0, %v3774
    %v3776 = vadd.f32 %v3748, %v3369
    %v3777 = vmul.f32 %v3775, %v3776
    %v3779 = vrot.slane %v3710, 2
    %v3781 = vadd.f32 %v3779, %v3777
    %v3782 = vtanh.pop %v3781
    %v3784 = vrot.slane %v3775, 1
    %v3786 = vsub.f32 1.0, %v3784
    %v3787 = vmul.f32 %v3786, %v3782
    %v3788 = vmul.f32 %v3784, %v3708
    %v3789 = vadd.f32 %v3787, %v3788
    %3790 = vst [vmem:[#allocation3 + $0x5] sm:$0x1] %v3789
    %v3791 = vld [vmem:[%s718] ss:$8 sm:$0x7]
    %v3792 = vpack.c.bf16 %v3789, %v3789
    %3793 = vmatpush.bf16.msra.mxu0 %v3278
    %3794 = vmatpush.bf16.msra.mxu0 %v3275
    %3795 = vmatpush.bf16.msra.mxu0 %v3272
    %3796 = vmatpush.bf16.msra.mxu0 %v3269
    %3797 = vmatpush.bf16.msra.mxu0 %v3266
    %3798 = vmatpush.bf16.msra.mxu0 %v3263
    %3799 = vmatpush.bf16.msra.mxu0 %v3260
    %3800 = vmatpush.bf16.msra.mxu0 %v3257
    %3801 = vmatmul.bf16.gmra.mxu0 %v3792
    %v3802 = vpop.f32.mrf.mxu0
    %v3803 = vadd.f32 0.0, %v3802
    %v3804 = vpop.f32.mrf.mxu0
    %3805 = vdwg.mxu0
    %3806 = vmatpush.bf16.msra.mxu0 %v3279
    %3807 = vmatpush.bf16.msra.mxu0 %v3276
    %3808 = vmatpush.bf16.msra.mxu0 %v3273
    %3809 = vmatpush.bf16.msra.mxu0 %v3270
    %3810 = vmatpush.bf16.msra.mxu0 %v3267
    %3811 = vmatpush.bf16.msra.mxu0 %v3264
    %3812 = vmatpush.bf16.msra.mxu0 %v3261
    %3813 = vmatpush.bf16.msra.mxu0 %v3258
    %3814 = vmatmul.bf16.gmra.mxu0 %v3792
    %v3815 = vpop.f32.mrf.mxu0
    %v3816 = vadd.f32 0.0, %v3815
    %v3817 = vpop.f32.mrf.mxu0
    %3818 = vdwg.mxu0
    %3819 = vmatpush.bf16.msra.mxu0 %v3280
    %3820 = vmatpush.bf16.msra.mxu0 %v3277
    %3821 = vmatpush.bf16.msra.mxu0 %v3274
    %3822 = vmatpush.bf16.msra.mxu0 %v3271
    %3823 = vmatpush.bf16.msra.mxu0 %v3268
    %3824 = vmatpush.bf16.msra.mxu0 %v3265
    %3825 = vmatpush.bf16.msra.mxu0 %v3262
    %3826 = vmatpush.bf16.msra.mxu0 %v3259
    %3827 = vmatmul.bf16.gmra.mxu0 %v3792
    %v3828 = vpop.f32.mrf.mxu0
    %v3829 = vadd.f32 0.0, %v3828
    %v3830 = vpop.f32.mrf.mxu0
    %3831 = vdwg.mxu0
    %v3834 = vrot.slane %v3816, 7
    %v3835 = vsel %vm267, %v3803, %v3834
    %v3837 = vadd.f32 %v3791, %v3835
    %v3838 = vxor.u32 %v3837, 2147483648
    %v3839 = vmul.f32 %v3838, 1.442695
    %v3840 = vpow.pop %v3839
    %v3841 = vadd.f32 %v3840, 1.0
    %v3842 = vrcp.pop %v3841
    %v3843 = vmul.f32 %v3841, %v3842
    %v3844 = vsub.f32 1.0, %v3843
    %v3845 = vmul.f32 %v3842, %v3844
    %v3846 = vadd.f32 %v3842, %v3845
    %vm3847 = vweird.f32 %v3841
    %vm3848 = vweird.f32 %v3842
    %vm3849 = vmor %vm3847, %vm3848
    %v3850 = vsel %vm3849, %v3842, %v3846
    %v3851 = vand.u32 2147483647, %v3841
    %vm3852 = vcmp.eq.f32.partialorder %v3851, 8.507059e+37
    %v3853 = vand.u32 %v3841, 2147483648
    %v3854 = vor.u32 1.1754944e-38, %v3853
    %v3855 = vsel %vm3852, %v3854, %v3850
    %v3856 = vmul.f32 1.0, %v3855
    %v3857 = vadd.f32 %v3829, %v3369
    %v3858 = vmul.f32 %v3856, %v3857
    %v3860 = vrot.slane %v3791, 2
    %v3862 = vadd.f32 %v3860, %v3858
    %v3863 = vtanh.pop %v3862
    %v3865 = vrot.slane %v3856, 1
    %v3867 = vsub.f32 1.0, %v3865
    %v3868 = vmul.f32 %v3867, %v3863
    %v3869 = vmul.f32 %v3865, %v3789
    %v3870 = vadd.f32 %v3868, %v3869
    %3871 = vst [vmem:[#allocation3 + $0x6] sm:$0x1] %v3870
    %v3872 = vld [vmem:[%s800] ss:$8 sm:$0x7]
    %v3873 = vpack.c.bf16 %v3870, %v3870
    %3874 = vmatpush.bf16.msra.mxu0 %v3278
    %3875 = vmatpush.bf16.msra.mxu0 %v3275
    %3876 = vmatpush.bf16.msra.mxu0 %v3272
    %3877 = vmatpush.bf16.msra.mxu0 %v3269
    %3878 = vmatpush.bf16.msra.mxu0 %v3266
    %3879 = vmatpush.bf16.msra.mxu0 %v3263
    %3880 = vmatpush.bf16.msra.mxu0 %v3260
    %3881 = vmatpush.bf16.msra.mxu0 %v3257
    %3882 = vmatmul.bf16.gmra.mxu0 %v3873
    %v3883 = vpop.f32.mrf.mxu0
    %v3884 = vadd.f32 0.0, %v3883
    %v3885 = vpop.f32.mrf.mxu0
    %3886 = vdwg.mxu0
    %3887 = vmatpush.bf16.msra.mxu0 %v3279
    %3888 = vmatpush.bf16.msra.mxu0 %v3276
    %3889 = vmatpush.bf16.msra.mxu0 %v3273
    %3890 = vmatpush.bf16.msra.mxu0 %v3270
    %3891 = vmatpush.bf16.msra.mxu0 %v3267
    %3892 = vmatpush.bf16.msra.mxu0 %v3264
    %3893 = vmatpush.bf16.msra.mxu0 %v3261
    %3894 = vmatpush.bf16.msra.mxu0 %v3258
    %3895 = vmatmul.bf16.gmra.mxu0 %v3873
    %v3896 = vpop.f32.mrf.mxu0
    %v3897 = vadd.f32 0.0, %v3896
    %v3898 = vpop.f32.mrf.mxu0
    %3899 = vdwg.mxu0
    %3900 = vmatpush.bf16.msra.mxu0 %v3280
    %3901 = vmatpush.bf16.msra.mxu0 %v3277
    %3902 = vmatpush.bf16.msra.mxu0 %v3274
    %3903 = vmatpush.bf16.msra.mxu0 %v3271
    %3904 = vmatpush.bf16.msra.mxu0 %v3268
    %3905 = vmatpush.bf16.msra.mxu0 %v3265
    %3906 = vmatpush.bf16.msra.mxu0 %v3262
    %3907 = vmatpush.bf16.msra.mxu0 %v3259
    %3908 = vmatmul.bf16.gmra.mxu0 %v3873
    %v3909 = vpop.f32.mrf.mxu0
    %v3910 = vadd.f32 0.0, %v3909
    %v3911 = vpop.f32.mrf.mxu0
    %3912 = vdwg.mxu0
    %v3915 = vrot.slane %v3897, 7
    %v3916 = vsel %vm267, %v3884, %v3915
    %v3918 = vadd.f32 %v3872, %v3916
    %v3919 = vxor.u32 %v3918, 2147483648
    %v3920 = vmul.f32 %v3919, 1.442695
    %v3921 = vpow.pop %v3920
    %v3922 = vadd.f32 %v3921, 1.0
    %v3923 = vrcp.pop %v3922
    %v3924 = vmul.f32 %v3922, %v3923
    %v3925 = vsub.f32 1.0, %v3924
    %v3926 = vmul.f32 %v3923, %v3925
    %v3927 = vadd.f32 %v3923, %v3926
    %vm3928 = vweird.f32 %v3922
    %vm3929 = vweird.f32 %v3923
    %vm3930 = vmor %vm3928, %vm3929
    %v3931 = vsel %vm3930, %v3923, %v3927
    %v3932 = vand.u32 2147483647, %v3922
    %vm3933 = vcmp.eq.f32.partialorder %v3932, 8.507059e+37
    %v3934 = vand.u32 %v3922, 2147483648
    %v3935 = vor.u32 1.1754944e-38, %v3934
    %v3936 = vsel %vm3933, %v3935, %v3931
    %v3937 = vmul.f32 1.0, %v3936
    %v3938 = vadd.f32 %v3910, %v3369
    %v3939 = vmul.f32 %v3937, %v3938
    %v3941 = vrot.slane %v3872, 2
    %v3943 = vadd.f32 %v3941, %v3939
    %v3944 = vtanh.pop %v3943
    %v3946 = vrot.slane %v3937, 1
    %v3948 = vsub.f32 1.0, %v3946
    %v3949 = vmul.f32 %v3948, %v3944
    %v3950 = vmul.f32 %v3946, %v3870
    %v3951 = vadd.f32 %v3949, %v3950
    %3952 = vst [vmem:[#allocation3 + $0x7] sm:$0x1] %v3951
    %v3953 = vld [vmem:[%s4] sm:$0xff]
    %v3954 = vld [vmem:[%s4 + $0x8] sm:$0xff]
    %v3955 = vld [vmem:[%s4 + $0x10] sm:$0xff]
    %v3956 = vld [vmem:[%s4 + $0x18] sm:$0xff]
    %v3957 = vld [vmem:[%s4 + $0x20] sm:$0xff]
    %v3958 = vld [vmem:[%s4 + $0x28] sm:$0xff]
    %v3959 = vld [vmem:[%s4 + $0x30] sm:$0xff]
    %v3960 = vld [vmem:[%s4 + $0x38] sm:$0xff]
    %v3961 = vld [vmem:[%s4 + $0x40] sm:$0xff]
    %v3962 = vld [vmem:[%s4 + $0x48] sm:$0xff]
    %v3963 = vld [vmem:[%s4 + $0x50] sm:$0xff]
    %v3964 = vld [vmem:[%s4 + $0x58] sm:$0xff]
    %v3965 = vld [vmem:[%s4 + $0x60] sm:$0xff]
    %v3966 = vld [vmem:[%s4 + $0x68] sm:$0xff]
    %v3967 = vld [vmem:[%s4 + $0x70] sm:$0xff]
    %v3968 = vld [vmem:[%s4 + $0x78] sm:$0xff]
    %v3969 = vld [vmem:[%s5] sm:$0x1]
    %3970 = vmatpush.msra.mxu0 %v3968
    %3971 = vmatpush.msra.mxu0 %v3967
    %3972 = vmatpush.msra.mxu0 %v3966
    %3973 = vmatpush.msra.mxu0 %v3965
    %3974 = vmatpush.msra.mxu0 %v3964
    %3975 = vmatpush.msra.mxu0 %v3963
    %3976 = vmatpush.msra.mxu0 %v3962
    %3977 = vmatpush.msra.mxu0 %v3961
    %3978 = vmatpush.msra.mxu0 %v3960
    %3979 = vmatpush.msra.mxu0 %v3959
    %3980 = vmatpush.msra.mxu0 %v3958
    %3981 = vmatpush.msra.mxu0 %v3957
    %3982 = vmatpush.msra.mxu0 %v3956
    %3983 = vmatpush.msra.mxu0 %v3955
    %3984 = vmatpush.msra.mxu0 %v3954
    %3985 = vmatpush.msra.mxu0 %v3953
    %3986 = vmatmul.f32.gmra.mxu0 %v3951
    %v3987 = vpop.f32.mrf.mxu0
    %v3988 = vadd.f32 %v3969, %v3987
    %3989 = vdwg.mxu0
    %vm3990 = vcmask 8192
    %3991 = vst.msk [vmem:[#allocation9] sm:$0x1] %vm3990, %v3988
    // Predicated region
    $region34: #{default_gru_forward.1} parent=1 // pred_check
      _
    $region35: #{default_gru_forward.1} parent=1 // pred_check_branch
      %3993 = sbr.rel (0) target = $region37
    $region36: #{default_gru_forward.1} parent=1 // pred_region
      %3995 = vsyncadd [#allocation6], 0
      %s3997 = sshll.u32 [#allocation9], 4
      %s3998 = int_to_ptr.vmem [resolvable:$true] %s3997
      %s3999 = sshll.u32 %s6, 4
      %s4000 = int_to_ptr.hbm [resolvable:$true] %s3999
      %4002 = dma.vmem_to_hbm [thread:$0]  %s3998, 16, %s4000, [#allocation6]
    $region37: #{default_gru_forward.1} parent=1 // pred_fallthru
      _
    // Predicated region
    $region38: #{default_gru_forward.1} parent=1 // pred_check
      _
    $region39: #{default_gru_forward.1} parent=1 // pred_check_branch
      %4004 = sbr.rel (0) target = $region41
    $region40: #{default_gru_forward.1} parent=1 // pred_region
      %4006 = dma.done [#allocation6], 16
    $region41: #{default_gru_forward.1} parent=1 // pred_fallthru
      _
    %4007 = vsyncpa [#allocation5], 1
    %4008 = vsyncpa [#allocation8], 1
    %4009 = vsyncpa [#allocation6], 1

</llo_original>
